<compile_context>
chip_gen: v7x
topology: tpu7x:2x2x1
jax: 0.10.0
libtpu: 0.0.40
codegen_flags: <defaults>
</compile_context>

<pallas_src>
import jax
import jax.numpy as jnp
from jax import lax
from jax.experimental import pallas as pl
from jax.experimental.pallas import tpu as pltpu


def make_prenorm_attn_kernel(block_b, n_tok, dim, heads, dim_head, eps):
    inner = heads * dim_head
    rows_total = block_b * n_tok
    compute_dtype = jnp.bfloat16

    def kernel(x_ref, g_ref, beta_ref, wqkv_ref, wout_ref, bout_ref, o_ref,
               hv_buf):
        # x_ref:    (block_b, N, dim) f32
        # g_ref:    (1, dim) f32      LayerNorm gamma
        # beta_ref: (1, dim) f32      LayerNorm beta
        # wqkv_ref: (dim, 3*inner) bf16   (Q columns pre-scaled by dim_head**-0.5)
        # wout_ref: (inner, dim) bf16
        # bout_ref: (1, dim) f32
        # o_ref:    (block_b, N, dim)
        # hv_buf:   (block_b*N, inner) f32 VMEM scratch (head-output staging)

        # ---- LayerNorm over the channel dim, f32 stats (PreNorm.norm) ----
        x = x_ref[...].astype(jnp.float32).reshape(rows_total, dim)
        mu = jnp.mean(x, axis=-1, keepdims=True)
        xc = x - mu
        var = jnp.mean(xc * xc, axis=-1, keepdims=True)
        xn = xc * lax.rsqrt(var + eps)
        xn = xn * g_ref[...] + beta_ref[...]                 # broadcast (1, dim)

        # ---- QKV projection: one (rows_total, dim) @ (dim, 3*inner) matmul ----
        # Weights arrive in bf16; activations cast at the matmul input; f32 acc.
        qkv = jnp.dot(xn.astype(compute_dtype), wqkv_ref[...],
                      preferred_element_type=jnp.float32)    # (rows, 3*inner) f32

        # ---- per-(batch, head) attention; stage head outputs at lane offset ----
        # heads / block_b are small & static -> unrolled Python loops.
        for b in range(block_b):
            r0 = b * n_tok
            rows = slice(r0, r0 + n_tok)
            for h in range(heads):
                c0 = h * dim_head
                q = qkv[rows, 0 * inner + c0: 0 * inner + c0 + dim_head]
                k = qkv[rows, 1 * inner + c0: 1 * inner + c0 + dim_head]
                v = qkv[rows, 2 * inner + c0: 2 * inner + c0 + dim_head]
                q = q.astype(compute_dtype)
                k = k.astype(compute_dtype)
                v = v.astype(compute_dtype)

                # q @ k^T without materializing a transpose (contract trailing
                # dims); the softmax scale is already folded into w_qkv's Q cols.
                dots = lax.dot_general(
                    q, k, (((1,), (1,)), ((), ())),
                    preferred_element_type=jnp.float32)       # (N, N) f32

                # numerically-stable softmax, stats in f32
                m = jnp.max(dots, axis=-1, keepdims=True)
                e = jnp.exp(dots - m)
                denom = jnp.sum(e, axis=-1, keepdims=True)
                attn = (e * pl.reciprocal(denom, approx=True)).astype(compute_dtype)
                # dropout p=0.0 -> identity

                hv = jnp.dot(attn, v,
                             preferred_element_type=jnp.float32)   # (N, dh) f32
                # stage this head's output at its lane offset (no concat)
                hv_buf[r0:r0 + n_tok, c0:c0 + dim_head] = hv

        # ---- single output projection for the whole block (K = inner) ----
        res = jnp.dot(hv_buf[...].astype(compute_dtype), wout_ref[...],
                      preferred_element_type=jnp.float32)     # (rows_total, dim)
        res = res + bout_ref[...]                             # bias added once
        # single store for the whole block (safe leading-dim split reshape)
        o_ref[...] = res.reshape(block_b, n_tok, dim).astype(o_ref.dtype)

    return kernel


def prenorm_attention_forward(x, gamma, beta, w_qkv, w_out, b_out, *,
                              heads, dim_head, eps=1e-5, block_b=None):
    """PreNorm(dim, Attention): LayerNorm over last dim, then MHSA.

    x: (B, N, dim) f32. gamma/beta: (dim,). w_qkv: (dim, 3*heads*dim_head)
    stored (in, out). w_out: (heads*dim_head, dim). b_out: (dim,).
    Returns (B, N, dim).
    """
    B, N, dim = x.shape
    inner = heads * dim_head
    scale = dim_head ** (-0.5)

    if block_b is None:
        # >= 2 grid steps so "parallel" megacore sharding feeds both v7x TCs.
        # On v5e/v6e (128 MiB VMEM) grow block_b so block_b*N >= 128/256 MXU rows.
        block_b = max(1, B // 2)
    assert B % block_b == 0, "B must be divisible by block_b"
    rows_total = block_b * N

    gamma2d = gamma.reshape(1, dim).astype(jnp.float32)
    beta2d = beta.reshape(1, dim).astype(jnp.float32)
    bout2d = b_out.reshape(1, dim).astype(jnp.float32)
    # bf16 weights prepared once in the wrapper; fold softmax scale into Q cols.
    wqkv_b16 = w_qkv.at[:, :inner].multiply(scale).astype(jnp.bfloat16)
    wout_b16 = w_out.astype(jnp.bfloat16)

    kernel = make_prenorm_attn_kernel(block_b, N, dim, heads, dim_head, eps)

    def build(buffer_weights):
        # single-buffer the resident (constant index_map) params when supported
        pm = {"pipeline_mode": pl.Buffered(1)} if buffer_weights else {}
        return pl.pallas_call(
            kernel,
            out_shape=jax.ShapeDtypeStruct((B, N, dim), x.dtype),
            grid_spec=pltpu.PrefetchScalarGridSpec(
                num_scalar_prefetch=0,
                grid=(B // block_b,),
                in_specs=[
                    pl.BlockSpec((block_b, N, dim), lambda i: (i, 0, 0)),
                    pl.BlockSpec((1, dim), lambda i: (0, 0), **pm),          # gamma
                    pl.BlockSpec((1, dim), lambda i: (0, 0), **pm),          # beta
                    pl.BlockSpec((dim, 3 * inner), lambda i: (0, 0), **pm),  # w_qkv
                    pl.BlockSpec((inner, dim), lambda i: (0, 0), **pm),      # w_out
                    pl.BlockSpec((1, dim), lambda i: (0, 0), **pm),          # b_out
                ],
                out_specs=pl.BlockSpec((block_b, N, dim), lambda i: (i, 0, 0)),
                scratch_shapes=[pltpu.VMEM((rows_total, inner), jnp.float32)],
            ),
            compiler_params=pltpu.CompilerParams(
                dimension_semantics=("parallel",),
                # fits comfortably in v7x's 64 MiB per-TC VMEM; raise on v5e/v6e
                # (128 MiB) together with block_b for fewer, larger grid steps.
                vmem_limit_bytes=32 * 1024 * 1024,
            ),
        )

    args = (x, gamma2d, beta2d, wqkv_b16, wout_b16, bout2d)
    try:
        return build(True)(*args)
    except Exception:
        # This JAX build rejected pipeline_mode=pl.Buffered(1); fall back to the
        # default double-buffered resident weights (correctness unchanged).
        return build(False)(*args)


def reference_forward(x, gamma, beta, w_qkv, w_out, b_out, *, heads, dim_head,
                      eps=1e-5):
    """Plain-JAX reference matching the PyTorch PreNorm(LayerNorm -> Attention)."""
    B, N, dim = x.shape
    inner = heads * dim_head
    scale = dim_head ** (-0.5)

    mu = x.mean(-1, keepdims=True)
    var = ((x - mu) ** 2).mean(-1, keepdims=True)
    xn = (x - mu) / jnp.sqrt(var + eps) * gamma + beta

    qkv = xn @ w_qkv                                  # (B, N, 3*inner)
    q, k, v = jnp.split(qkv, 3, axis=-1)

    def to_heads(t):                                  # b n (h d) -> b h n d
        return t.reshape(B, N, heads, dim_head).transpose(0, 2, 1, 3)

    q, k, v = map(to_heads, (q, k, v))
    dots = jnp.einsum("bhnd,bhmd->bhnm", q, k) * scale
    attn = jax.nn.softmax(dots, axis=-1)
    out = jnp.einsum("bhnm,bhmd->bhnd", attn, v)
    out = out.transpose(0, 2, 1, 3).reshape(B, N, inner)
    return out @ w_out + b_out


if __name__ == "__main__":
    # Small shapes consistent with the module's forward (token sequences):
    B, N, dim = 2, 8, 32
    heads, dim_head = 8, 16
    inner = heads * dim_head  # 128

    key = jax.random.PRNGKey(0)
    kx, kg, kbt, kq, kw, kb = jax.random.split(key, 6)

    x = jax.random.normal(kx, (B, N, dim), dtype=jnp.float32)
    # LayerNorm params (perturbed from identity to exercise the affine path)
    gamma = 1.0 + 0.1 * jax.random.normal(kg, (dim,), dtype=jnp.float32)
    beta = 0.1 * jax.random.normal(kbt, (dim,), dtype=jnp.float32)
    # Attention params stored as (in, out):
    w_qkv = jax.random.normal(kq, (dim, 3 * inner), dtype=jnp.float32) * 0.05
    w_out = jax.random.normal(kw, (inner, dim), dtype=jnp.float32) * 0.05
    b_out = jax.random.normal(kb, (dim,), dtype=jnp.float32) * 0.05

    y = prenorm_attention_forward(x, gamma, beta, w_qkv, w_out, b_out,
                                  heads=heads, dim_head=dim_head)
    y = jax.block_until_ready(y)

    y_ref = reference_forward(x, gamma, beta, w_qkv, w_out, b_out,
                              heads=heads, dim_head=dim_head)
    assert y.shape == (B, N, dim)
    # bf16 matmul inputs/weights + approx reciprocal -> looser tolerance vs. the
    # f32 reference (intentional inference-grade numerics).
    assert jnp.allclose(y, y_ref, atol=2e-2, rtol=2e-2), "mismatch vs reference"

    print("KERNEL_OK")
</pallas_src>

<mosaic_0001>
module attributes {stable_mosaic.version = 11 : i64} {
  func.func @kernel(%arg0: i32, %arg1: memref<1x8x32xf32, #tpu.memory_space<vmem>>, %arg2: memref<1x32xf32, #tpu.memory_space<vmem>>, %arg3: memref<1x32xf32, #tpu.memory_space<vmem>>, %arg4: memref<32x384xbf16, #tpu.memory_space<vmem>>, %arg5: memref<128x32xbf16, #tpu.memory_space<vmem>>, %arg6: memref<1x32xf32, #tpu.memory_space<vmem>>, %arg7: memref<1x8x32xf32, #tpu.memory_space<vmem>>, %arg8: memref<8x128xf32, #tpu.memory_space<vmem>>) attributes {dimension_semantics = [#tpu.dimension_semantics<parallel>], iteration_bounds = array<i64: 2>, scalar_prefetch = 0 : i64, scratch_operands = 1 : i64, tpu.core_type = #tpu.core_type<tc>, window_params = [{transform_indices = @transform_0, window_bounds = array<i64: 1, 8, 32>}, {pipeline_mode = #tpu.pipeline_mode<synchronous>, transform_indices = @transform_1, window_bounds = array<i64: 1, 32>}, {pipeline_mode = #tpu.pipeline_mode<synchronous>, transform_indices = @transform_2, window_bounds = array<i64: 1, 32>}, {pipeline_mode = #tpu.pipeline_mode<synchronous>, transform_indices = @transform_3, window_bounds = array<i64: 32, 384>}, {pipeline_mode = #tpu.pipeline_mode<synchronous>, transform_indices = @transform_4, window_bounds = array<i64: 128, 32>}, {pipeline_mode = #tpu.pipeline_mode<synchronous>, transform_indices = @transform_5, window_bounds = array<i64: 1, 32>}, {transform_indices = @transform_6, window_bounds = array<i64: 1, 8, 32>}]} {
    %c0 = arith.constant 0 : index
    %c0_0 = arith.constant 0 : index
    %c0_1 = arith.constant 0 : index
    %0 = vector.load %arg1[%c0, %c0_0, %c0_1] : memref<1x8x32xf32, #tpu.memory_space<vmem>>, vector<1x8x32xf32>
    %1 = vector.shape_cast %0 : vector<1x8x32xf32> to vector<8x32xf32>
    %cst = arith.constant dense<0.000000e+00> : vector<8xf32>
    %2 = vector.multi_reduction <add>, %1, %cst [1] : vector<8x32xf32> to vector<8xf32>
    %3 = vector.shape_cast %2 : vector<8xf32> to vector<8x1xf32>
    %cst_2 = arith.constant 3.200000e+01 : f32
    %4 = vector.broadcast %cst_2 : f32 to vector<8x1xf32>
    %5 = arith.divf %3, %4 : vector<8x1xf32>
    %6 = vector.broadcast %5 : vector<8x1xf32> to vector<8x32xf32>
    %7 = arith.subf %1, %6 : vector<8x32xf32>
    %8 = arith.mulf %7, %7 : vector<8x32xf32>
    %cst_3 = arith.constant dense<0.000000e+00> : vector<8xf32>
    %9 = vector.multi_reduction <add>, %8, %cst_3 [1] : vector<8x32xf32> to vector<8xf32>
    %10 = vector.shape_cast %9 : vector<8xf32> to vector<8x1xf32>
    %cst_4 = arith.constant 3.200000e+01 : f32
    %11 = vector.broadcast %cst_4 : f32 to vector<8x1xf32>
    %12 = arith.divf %10, %11 : vector<8x1xf32>
    %cst_5 = arith.constant 9.99999974E-6 : f32
    %13 = vector.broadcast %cst_5 : f32 to vector<8x1xf32>
    %14 = arith.addf %12, %13 : vector<8x1xf32>
    %15 = math.rsqrt %14 : vector<8x1xf32>
    %16 = vector.broadcast %15 : vector<8x1xf32> to vector<8x32xf32>
    %17 = arith.mulf %7, %16 : vector<8x32xf32>
    %c0_6 = arith.constant 0 : index
    %c0_7 = arith.constant 0 : index
    %18 = vector.load %arg2[%c0_6, %c0_7] : memref<1x32xf32, #tpu.memory_space<vmem>>, vector<1x32xf32>
    %19 = vector.broadcast %18 : vector<1x32xf32> to vector<8x32xf32>
    %20 = arith.mulf %17, %19 : vector<8x32xf32>
    %c0_8 = arith.constant 0 : index
    %c0_9 = arith.constant 0 : index
    %21 = vector.load %arg3[%c0_8, %c0_9] : memref<1x32xf32, #tpu.memory_space<vmem>>, vector<1x32xf32>
    %22 = vector.broadcast %21 : vector<1x32xf32> to vector<8x32xf32>
    %23 = arith.addf %20, %22 : vector<8x32xf32>
    %24 = arith.truncf %23 : vector<8x32xf32> to vector<8x32xbf16>
    %c0_10 = arith.constant 0 : index
    %c0_11 = arith.constant 0 : index
    %25 = vector.load %arg4[%c0_10, %c0_11] : memref<32x384xbf16, #tpu.memory_space<vmem>>, vector<32x384xbf16>
    %cst_12 = arith.constant dense<0.000000e+00> : vector<8x384xf32>
    %26 = tpu.matmul %24, %25, %cst_12 {dimension_numbers = #tpu.dot_dimension_numbers<[1], [0], [0], [1], [0, 0, 1, 1], [], []>} : vector<8x32xbf16>, vector<32x384xbf16>, vector<8x384xf32> -> vector<8x384xf32>
    %27 = vector.extract_strided_slice %26 {offsets = [0, 0], sizes = [8, 16], strides = [1, 1]} : vector<8x384xf32> to vector<8x16xf32>
    %28 = vector.extract_strided_slice %26 {offsets = [0, 128], sizes = [8, 16], strides = [1, 1]} : vector<8x384xf32> to vector<8x16xf32>
    %29 = vector.extract_strided_slice %26 {offsets = [0, 256], sizes = [8, 16], strides = [1, 1]} : vector<8x384xf32> to vector<8x16xf32>
    %30 = arith.truncf %27 : vector<8x16xf32> to vector<8x16xbf16>
    %31 = arith.truncf %28 : vector<8x16xf32> to vector<8x16xbf16>
    %32 = arith.truncf %29 : vector<8x16xf32> to vector<8x16xbf16>
    %cst_13 = arith.constant dense<0.000000e+00> : vector<8x8xf32>
    %33 = tpu.matmul %30, %31, %cst_13 {dimension_numbers = #tpu.dot_dimension_numbers<[1], [1], [0], [0], [0, 0, 1, 0], [], []>} : vector<8x16xbf16>, vector<8x16xbf16>, vector<8x8xf32> -> vector<8x8xf32>
    %cst_14 = arith.constant dense<0xFF800000> : vector<8xf32>
    %34 = vector.multi_reduction <maximumf>, %33, %cst_14 [1] : vector<8x8xf32> to vector<8xf32>
    %35 = vector.shape_cast %34 : vector<8xf32> to vector<8x1xf32>
    %36 = vector.broadcast %35 : vector<8x1xf32> to vector<8x8xf32>
    %37 = arith.subf %33, %36 : vector<8x8xf32>
    %38 = math.exp %37 : vector<8x8xf32>
    %cst_15 = arith.constant dense<0.000000e+00> : vector<8xf32>
    %39 = vector.multi_reduction <add>, %38, %cst_15 [1] : vector<8x8xf32> to vector<8xf32>
    %40 = vector.shape_cast %39 : vector<8xf32> to vector<8x1xf32>
    %41 = tpu.reciprocal %40 {approx = true} : vector<8x1xf32> -> vector<8x1xf32>
    %42 = vector.broadcast %41 : vector<8x1xf32> to vector<8x8xf32>
    %43 = arith.mulf %38, %42 : vector<8x8xf32>
    %44 = arith.truncf %43 : vector<8x8xf32> to vector<8x8xbf16>
    %cst_16 = arith.constant dense<0.000000e+00> : vector<8x16xf32>
    %45 = tpu.matmul %44, %32, %cst_16 {dimension_numbers = #tpu.dot_dimension_numbers<[1], [0], [0], [1], [0, 0, 1, 1], [], []>} : vector<8x8xbf16>, vector<8x16xbf16>, vector<8x16xf32> -> vector<8x16xf32>
    %c0_17 = arith.constant 0 : index
    %c0_18 = arith.constant 0 : index
    %46 = vector.load %arg8[%c0_17, %c0_18] : memref<8x128xf32, #tpu.memory_space<vmem>>, vector<8x16xf32>
    tpu.vector_store %arg8[%c0_17, %c0_18], %45 {strides = array<i32>} : memref<8x128xf32, #tpu.memory_space<vmem>>, vector<8x16xf32>,
    %47 = vector.extract_strided_slice %26 {offsets = [0, 16], sizes = [8, 16], strides = [1, 1]} : vector<8x384xf32> to vector<8x16xf32>
    %48 = vector.extract_strided_slice %26 {offsets = [0, 144], sizes = [8, 16], strides = [1, 1]} : vector<8x384xf32> to vector<8x16xf32>
    %49 = vector.extract_strided_slice %26 {offsets = [0, 272], sizes = [8, 16], strides = [1, 1]} : vector<8x384xf32> to vector<8x16xf32>
    %50 = arith.truncf %47 : vector<8x16xf32> to vector<8x16xbf16>
    %51 = arith.truncf %48 : vector<8x16xf32> to vector<8x16xbf16>
    %52 = arith.truncf %49 : vector<8x16xf32> to vector<8x16xbf16>
    %cst_19 = arith.constant dense<0.000000e+00> : vector<8x8xf32>
    %53 = tpu.matmul %50, %51, %cst_19 {dimension_numbers = #tpu.dot_dimension_numbers<[1], [1], [0], [0], [0, 0, 1, 0], [], []>} : vector<8x16xbf16>, vector<8x16xbf16>, vector<8x8xf32> -> vector<8x8xf32>
    %cst_20 = arith.constant dense<0xFF800000> : vector<8xf32>
    %54 = vector.multi_reduction <maximumf>, %53, %cst_20 [1] : vector<8x8xf32> to vector<8xf32>
    %55 = vector.shape_cast %54 : vector<8xf32> to vector<8x1xf32>
    %56 = vector.broadcast %55 : vector<8x1xf32> to vector<8x8xf32>
    %57 = arith.subf %53, %56 : vector<8x8xf32>
    %58 = math.exp %57 : vector<8x8xf32>
    %cst_21 = arith.constant dense<0.000000e+00> : vector<8xf32>
    %59 = vector.multi_reduction <add>, %58, %cst_21 [1] : vector<8x8xf32> to vector<8xf32>
    %60 = vector.shape_cast %59 : vector<8xf32> to vector<8x1xf32>
    %61 = tpu.reciprocal %60 {approx = true} : vector<8x1xf32> -> vector<8x1xf32>
    %62 = vector.broadcast %61 : vector<8x1xf32> to vector<8x8xf32>
    %63 = arith.mulf %58, %62 : vector<8x8xf32>
    %64 = arith.truncf %63 : vector<8x8xf32> to vector<8x8xbf16>
    %cst_22 = arith.constant dense<0.000000e+00> : vector<8x16xf32>
    %65 = tpu.matmul %64, %52, %cst_22 {dimension_numbers = #tpu.dot_dimension_numbers<[1], [0], [0], [1], [0, 0, 1, 1], [], []>} : vector<8x8xbf16>, vector<8x16xbf16>, vector<8x16xf32> -> vector<8x16xf32>
    %c0_23 = arith.constant 0 : index
    %c16 = arith.constant 16 : index
    %66 = vector.load %arg8[%c0_23, %c16] : memref<8x128xf32, #tpu.memory_space<vmem>>, vector<8x16xf32>
    tpu.vector_store %arg8[%c0_23, %c16], %65 {strides = array<i32>} : memref<8x128xf32, #tpu.memory_space<vmem>>, vector<8x16xf32>,
    %67 = vector.extract_strided_slice %26 {offsets = [0, 32], sizes = [8, 16], strides = [1, 1]} : vector<8x384xf32> to vector<8x16xf32>
    %68 = vector.extract_strided_slice %26 {offsets = [0, 160], sizes = [8, 16], strides = [1, 1]} : vector<8x384xf32> to vector<8x16xf32>
    %69 = vector.extract_strided_slice %26 {offsets = [0, 288], sizes = [8, 16], strides = [1, 1]} : vector<8x384xf32> to vector<8x16xf32>
    %70 = arith.truncf %67 : vector<8x16xf32> to vector<8x16xbf16>
    %71 = arith.truncf %68 : vector<8x16xf32> to vector<8x16xbf16>
    %72 = arith.truncf %69 : vector<8x16xf32> to vector<8x16xbf16>
    %cst_24 = arith.constant dense<0.000000e+00> : vector<8x8xf32>
    %73 = tpu.matmul %70, %71, %cst_24 {dimension_numbers = #tpu.dot_dimension_numbers<[1], [1], [0], [0], [0, 0, 1, 0], [], []>} : vector<8x16xbf16>, vector<8x16xbf16>, vector<8x8xf32> -> vector<8x8xf32>
    %cst_25 = arith.constant dense<0xFF800000> : vector<8xf32>
    %74 = vector.multi_reduction <maximumf>, %73, %cst_25 [1] : vector<8x8xf32> to vector<8xf32>
    %75 = vector.shape_cast %74 : vector<8xf32> to vector<8x1xf32>
    %76 = vector.broadcast %75 : vector<8x1xf32> to vector<8x8xf32>
    %77 = arith.subf %73, %76 : vector<8x8xf32>
    %78 = math.exp %77 : vector<8x8xf32>
    %cst_26 = arith.constant dense<0.000000e+00> : vector<8xf32>
    %79 = vector.multi_reduction <add>, %78, %cst_26 [1] : vector<8x8xf32> to vector<8xf32>
    %80 = vector.shape_cast %79 : vector<8xf32> to vector<8x1xf32>
    %81 = tpu.reciprocal %80 {approx = true} : vector<8x1xf32> -> vector<8x1xf32>
    %82 = vector.broadcast %81 : vector<8x1xf32> to vector<8x8xf32>
    %83 = arith.mulf %78, %82 : vector<8x8xf32>
    %84 = arith.truncf %83 : vector<8x8xf32> to vector<8x8xbf16>
    %cst_27 = arith.constant dense<0.000000e+00> : vector<8x16xf32>
    %85 = tpu.matmul %84, %72, %cst_27 {dimension_numbers = #tpu.dot_dimension_numbers<[1], [0], [0], [1], [0, 0, 1, 1], [], []>} : vector<8x8xbf16>, vector<8x16xbf16>, vector<8x16xf32> -> vector<8x16xf32>
    %c0_28 = arith.constant 0 : index
    %c32 = arith.constant 32 : index
    %86 = vector.load %arg8[%c0_28, %c32] : memref<8x128xf32, #tpu.memory_space<vmem>>, vector<8x16xf32>
    tpu.vector_store %arg8[%c0_28, %c32], %85 {strides = array<i32>} : memref<8x128xf32, #tpu.memory_space<vmem>>, vector<8x16xf32>,
    %87 = vector.extract_strided_slice %26 {offsets = [0, 48], sizes = [8, 16], strides = [1, 1]} : vector<8x384xf32> to vector<8x16xf32>
    %88 = vector.extract_strided_slice %26 {offsets = [0, 176], sizes = [8, 16], strides = [1, 1]} : vector<8x384xf32> to vector<8x16xf32>
    %89 = vector.extract_strided_slice %26 {offsets = [0, 304], sizes = [8, 16], strides = [1, 1]} : vector<8x384xf32> to vector<8x16xf32>
    %90 = arith.truncf %87 : vector<8x16xf32> to vector<8x16xbf16>
    %91 = arith.truncf %88 : vector<8x16xf32> to vector<8x16xbf16>
    %92 = arith.truncf %89 : vector<8x16xf32> to vector<8x16xbf16>
    %cst_29 = arith.constant dense<0.000000e+00> : vector<8x8xf32>
    %93 = tpu.matmul %90, %91, %cst_29 {dimension_numbers = #tpu.dot_dimension_numbers<[1], [1], [0], [0], [0, 0, 1, 0], [], []>} : vector<8x16xbf16>, vector<8x16xbf16>, vector<8x8xf32> -> vector<8x8xf32>
    %cst_30 = arith.constant dense<0xFF800000> : vector<8xf32>
    %94 = vector.multi_reduction <maximumf>, %93, %cst_30 [1] : vector<8x8xf32> to vector<8xf32>
    %95 = vector.shape_cast %94 : vector<8xf32> to vector<8x1xf32>
    %96 = vector.broadcast %95 : vector<8x1xf32> to vector<8x8xf32>
    %97 = arith.subf %93, %96 : vector<8x8xf32>
    %98 = math.exp %97 : vector<8x8xf32>
    %cst_31 = arith.constant dense<0.000000e+00> : vector<8xf32>
    %99 = vector.multi_reduction <add>, %98, %cst_31 [1] : vector<8x8xf32> to vector<8xf32>
    %100 = vector.shape_cast %99 : vector<8xf32> to vector<8x1xf32>
    %101 = tpu.reciprocal %100 {approx = true} : vector<8x1xf32> -> vector<8x1xf32>
    %102 = vector.broadcast %101 : vector<8x1xf32> to vector<8x8xf32>
    %103 = arith.mulf %98, %102 : vector<8x8xf32>
    %104 = arith.truncf %103 : vector<8x8xf32> to vector<8x8xbf16>
    %cst_32 = arith.constant dense<0.000000e+00> : vector<8x16xf32>
    %105 = tpu.matmul %104, %92, %cst_32 {dimension_numbers = #tpu.dot_dimension_numbers<[1], [0], [0], [1], [0, 0, 1, 1], [], []>} : vector<8x8xbf16>, vector<8x16xbf16>, vector<8x16xf32> -> vector<8x16xf32>
    %c0_33 = arith.constant 0 : index
    %c48 = arith.constant 48 : index
    %106 = vector.load %arg8[%c0_33, %c48] : memref<8x128xf32, #tpu.memory_space<vmem>>, vector<8x16xf32>
    tpu.vector_store %arg8[%c0_33, %c48], %105 {strides = array<i32>} : memref<8x128xf32, #tpu.memory_space<vmem>>, vector<8x16xf32>,
    %107 = vector.extract_strided_slice %26 {offsets = [0, 64], sizes = [8, 16], strides = [1, 1]} : vector<8x384xf32> to vector<8x16xf32>
    %108 = vector.extract_strided_slice %26 {offsets = [0, 192], sizes = [8, 16], strides = [1, 1]} : vector<8x384xf32> to vector<8x16xf32>
    %109 = vector.extract_strided_slice %26 {offsets = [0, 320], sizes = [8, 16], strides = [1, 1]} : vector<8x384xf32> to vector<8x16xf32>
    %110 = arith.truncf %107 : vector<8x16xf32> to vector<8x16xbf16>
    %111 = arith.truncf %108 : vector<8x16xf32> to vector<8x16xbf16>
    %112 = arith.truncf %109 : vector<8x16xf32> to vector<8x16xbf16>
    %cst_34 = arith.constant dense<0.000000e+00> : vector<8x8xf32>
    %113 = tpu.matmul %110, %111, %cst_34 {dimension_numbers = #tpu.dot_dimension_numbers<[1], [1], [0], [0], [0, 0, 1, 0], [], []>} : vector<8x16xbf16>, vector<8x16xbf16>, vector<8x8xf32> -> vector<8x8xf32>
    %cst_35 = arith.constant dense<0xFF800000> : vector<8xf32>
    %114 = vector.multi_reduction <maximumf>, %113, %cst_35 [1] : vector<8x8xf32> to vector<8xf32>
    %115 = vector.shape_cast %114 : vector<8xf32> to vector<8x1xf32>
    %116 = vector.broadcast %115 : vector<8x1xf32> to vector<8x8xf32>
    %117 = arith.subf %113, %116 : vector<8x8xf32>
    %118 = math.exp %117 : vector<8x8xf32>
    %cst_36 = arith.constant dense<0.000000e+00> : vector<8xf32>
    %119 = vector.multi_reduction <add>, %118, %cst_36 [1] : vector<8x8xf32> to vector<8xf32>
    %120 = vector.shape_cast %119 : vector<8xf32> to vector<8x1xf32>
    %121 = tpu.reciprocal %120 {approx = true} : vector<8x1xf32> -> vector<8x1xf32>
    %122 = vector.broadcast %121 : vector<8x1xf32> to vector<8x8xf32>
    %123 = arith.mulf %118, %122 : vector<8x8xf32>
    %124 = arith.truncf %123 : vector<8x8xf32> to vector<8x8xbf16>
    %cst_37 = arith.constant dense<0.000000e+00> : vector<8x16xf32>
    %125 = tpu.matmul %124, %112, %cst_37 {dimension_numbers = #tpu.dot_dimension_numbers<[1], [0], [0], [1], [0, 0, 1, 1], [], []>} : vector<8x8xbf16>, vector<8x16xbf16>, vector<8x16xf32> -> vector<8x16xf32>
    %c0_38 = arith.constant 0 : index
    %c64 = arith.constant 64 : index
    %126 = vector.load %arg8[%c0_38, %c64] : memref<8x128xf32, #tpu.memory_space<vmem>>, vector<8x16xf32>
    tpu.vector_store %arg8[%c0_38, %c64], %125 {strides = array<i32>} : memref<8x128xf32, #tpu.memory_space<vmem>>, vector<8x16xf32>,
    %127 = vector.extract_strided_slice %26 {offsets = [0, 80], sizes = [8, 16], strides = [1, 1]} : vector<8x384xf32> to vector<8x16xf32>
    %128 = vector.extract_strided_slice %26 {offsets = [0, 208], sizes = [8, 16], strides = [1, 1]} : vector<8x384xf32> to vector<8x16xf32>
    %129 = vector.extract_strided_slice %26 {offsets = [0, 336], sizes = [8, 16], strides = [1, 1]} : vector<8x384xf32> to vector<8x16xf32>
    %130 = arith.truncf %127 : vector<8x16xf32> to vector<8x16xbf16>
    %131 = arith.truncf %128 : vector<8x16xf32> to vector<8x16xbf16>
    %132 = arith.truncf %129 : vector<8x16xf32> to vector<8x16xbf16>
    %cst_39 = arith.constant dense<0.000000e+00> : vector<8x8xf32>
    %133 = tpu.matmul %130, %131, %cst_39 {dimension_numbers = #tpu.dot_dimension_numbers<[1], [1], [0], [0], [0, 0, 1, 0], [], []>} : vector<8x16xbf16>, vector<8x16xbf16>, vector<8x8xf32> -> vector<8x8xf32>
    %cst_40 = arith.constant dense<0xFF800000> : vector<8xf32>
    %134 = vector.multi_reduction <maximumf>, %133, %cst_40 [1] : vector<8x8xf32> to vector<8xf32>
    %135 = vector.shape_cast %134 : vector<8xf32> to vector<8x1xf32>
    %136 = vector.broadcast %135 : vector<8x1xf32> to vector<8x8xf32>
    %137 = arith.subf %133, %136 : vector<8x8xf32>
    %138 = math.exp %137 : vector<8x8xf32>
    %cst_41 = arith.constant dense<0.000000e+00> : vector<8xf32>
    %139 = vector.multi_reduction <add>, %138, %cst_41 [1] : vector<8x8xf32> to vector<8xf32>
    %140 = vector.shape_cast %139 : vector<8xf32> to vector<8x1xf32>
    %141 = tpu.reciprocal %140 {approx = true} : vector<8x1xf32> -> vector<8x1xf32>
    %142 = vector.broadcast %141 : vector<8x1xf32> to vector<8x8xf32>
    %143 = arith.mulf %138, %142 : vector<8x8xf32>
    %144 = arith.truncf %143 : vector<8x8xf32> to vector<8x8xbf16>
    %cst_42 = arith.constant dense<0.000000e+00> : vector<8x16xf32>
    %145 = tpu.matmul %144, %132, %cst_42 {dimension_numbers = #tpu.dot_dimension_numbers<[1], [0], [0], [1], [0, 0, 1, 1], [], []>} : vector<8x8xbf16>, vector<8x16xbf16>, vector<8x16xf32> -> vector<8x16xf32>
    %c0_43 = arith.constant 0 : index
    %c80 = arith.constant 80 : index
    %146 = vector.load %arg8[%c0_43, %c80] : memref<8x128xf32, #tpu.memory_space<vmem>>, vector<8x16xf32>
    tpu.vector_store %arg8[%c0_43, %c80], %145 {strides = array<i32>} : memref<8x128xf32, #tpu.memory_space<vmem>>, vector<8x16xf32>,
    %147 = vector.extract_strided_slice %26 {offsets = [0, 96], sizes = [8, 16], strides = [1, 1]} : vector<8x384xf32> to vector<8x16xf32>
    %148 = vector.extract_strided_slice %26 {offsets = [0, 224], sizes = [8, 16], strides = [1, 1]} : vector<8x384xf32> to vector<8x16xf32>
    %149 = vector.extract_strided_slice %26 {offsets = [0, 352], sizes = [8, 16], strides = [1, 1]} : vector<8x384xf32> to vector<8x16xf32>
    %150 = arith.truncf %147 : vector<8x16xf32> to vector<8x16xbf16>
    %151 = arith.truncf %148 : vector<8x16xf32> to vector<8x16xbf16>
    %152 = arith.truncf %149 : vector<8x16xf32> to vector<8x16xbf16>
    %cst_44 = arith.constant dense<0.000000e+00> : vector<8x8xf32>
    %153 = tpu.matmul %150, %151, %cst_44 {dimension_numbers = #tpu.dot_dimension_numbers<[1], [1], [0], [0], [0, 0, 1, 0], [], []>} : vector<8x16xbf16>, vector<8x16xbf16>, vector<8x8xf32> -> vector<8x8xf32>
    %cst_45 = arith.constant dense<0xFF800000> : vector<8xf32>
    %154 = vector.multi_reduction <maximumf>, %153, %cst_45 [1] : vector<8x8xf32> to vector<8xf32>
    %155 = vector.shape_cast %154 : vector<8xf32> to vector<8x1xf32>
    %156 = vector.broadcast %155 : vector<8x1xf32> to vector<8x8xf32>
    %157 = arith.subf %153, %156 : vector<8x8xf32>
    %158 = math.exp %157 : vector<8x8xf32>
    %cst_46 = arith.constant dense<0.000000e+00> : vector<8xf32>
    %159 = vector.multi_reduction <add>, %158, %cst_46 [1] : vector<8x8xf32> to vector<8xf32>
    %160 = vector.shape_cast %159 : vector<8xf32> to vector<8x1xf32>
    %161 = tpu.reciprocal %160 {approx = true} : vector<8x1xf32> -> vector<8x1xf32>
    %162 = vector.broadcast %161 : vector<8x1xf32> to vector<8x8xf32>
    %163 = arith.mulf %158, %162 : vector<8x8xf32>
    %164 = arith.truncf %163 : vector<8x8xf32> to vector<8x8xbf16>
    %cst_47 = arith.constant dense<0.000000e+00> : vector<8x16xf32>
    %165 = tpu.matmul %164, %152, %cst_47 {dimension_numbers = #tpu.dot_dimension_numbers<[1], [0], [0], [1], [0, 0, 1, 1], [], []>} : vector<8x8xbf16>, vector<8x16xbf16>, vector<8x16xf32> -> vector<8x16xf32>
    %c0_48 = arith.constant 0 : index
    %c96 = arith.constant 96 : index
    %166 = vector.load %arg8[%c0_48, %c96] : memref<8x128xf32, #tpu.memory_space<vmem>>, vector<8x16xf32>
    tpu.vector_store %arg8[%c0_48, %c96], %165 {strides = array<i32>} : memref<8x128xf32, #tpu.memory_space<vmem>>, vector<8x16xf32>,
    %167 = vector.extract_strided_slice %26 {offsets = [0, 112], sizes = [8, 16], strides = [1, 1]} : vector<8x384xf32> to vector<8x16xf32>
    %168 = vector.extract_strided_slice %26 {offsets = [0, 240], sizes = [8, 16], strides = [1, 1]} : vector<8x384xf32> to vector<8x16xf32>
    %169 = vector.extract_strided_slice %26 {offsets = [0, 368], sizes = [8, 16], strides = [1, 1]} : vector<8x384xf32> to vector<8x16xf32>
    %170 = arith.truncf %167 : vector<8x16xf32> to vector<8x16xbf16>
    %171 = arith.truncf %168 : vector<8x16xf32> to vector<8x16xbf16>
    %172 = arith.truncf %169 : vector<8x16xf32> to vector<8x16xbf16>
    %cst_49 = arith.constant dense<0.000000e+00> : vector<8x8xf32>
    %173 = tpu.matmul %170, %171, %cst_49 {dimension_numbers = #tpu.dot_dimension_numbers<[1], [1], [0], [0], [0, 0, 1, 0], [], []>} : vector<8x16xbf16>, vector<8x16xbf16>, vector<8x8xf32> -> vector<8x8xf32>
    %cst_50 = arith.constant dense<0xFF800000> : vector<8xf32>
    %174 = vector.multi_reduction <maximumf>, %173, %cst_50 [1] : vector<8x8xf32> to vector<8xf32>
    %175 = vector.shape_cast %174 : vector<8xf32> to vector<8x1xf32>
    %176 = vector.broadcast %175 : vector<8x1xf32> to vector<8x8xf32>
    %177 = arith.subf %173, %176 : vector<8x8xf32>
    %178 = math.exp %177 : vector<8x8xf32>
    %cst_51 = arith.constant dense<0.000000e+00> : vector<8xf32>
    %179 = vector.multi_reduction <add>, %178, %cst_51 [1] : vector<8x8xf32> to vector<8xf32>
    %180 = vector.shape_cast %179 : vector<8xf32> to vector<8x1xf32>
    %181 = tpu.reciprocal %180 {approx = true} : vector<8x1xf32> -> vector<8x1xf32>
    %182 = vector.broadcast %181 : vector<8x1xf32> to vector<8x8xf32>
    %183 = arith.mulf %178, %182 : vector<8x8xf32>
    %184 = arith.truncf %183 : vector<8x8xf32> to vector<8x8xbf16>
    %cst_52 = arith.constant dense<0.000000e+00> : vector<8x16xf32>
    %185 = tpu.matmul %184, %172, %cst_52 {dimension_numbers = #tpu.dot_dimension_numbers<[1], [0], [0], [1], [0, 0, 1, 1], [], []>} : vector<8x8xbf16>, vector<8x16xbf16>, vector<8x16xf32> -> vector<8x16xf32>
    %c0_53 = arith.constant 0 : index
    %c112 = arith.constant 112 : index
    %186 = vector.load %arg8[%c0_53, %c112] : memref<8x128xf32, #tpu.memory_space<vmem>>, vector<8x16xf32>
    tpu.vector_store %arg8[%c0_53, %c112], %185 {strides = array<i32>} : memref<8x128xf32, #tpu.memory_space<vmem>>, vector<8x16xf32>,
    %c0_54 = arith.constant 0 : index
    %c0_55 = arith.constant 0 : index
    %187 = vector.load %arg8[%c0_54, %c0_55] : memref<8x128xf32, #tpu.memory_space<vmem>>, vector<8x128xf32>
    %188 = arith.truncf %187 : vector<8x128xf32> to vector<8x128xbf16>
    %c0_56 = arith.constant 0 : index
    %c0_57 = arith.constant 0 : index
    %189 = vector.load %arg5[%c0_56, %c0_57] : memref<128x32xbf16, #tpu.memory_space<vmem>>, vector<128x32xbf16>
    %cst_58 = arith.constant dense<0.000000e+00> : vector<8x32xf32>
    %190 = tpu.matmul %188, %189, %cst_58 {dimension_numbers = #tpu.dot_dimension_numbers<[1], [0], [0], [1], [0, 0, 1, 1], [], []>} : vector<8x128xbf16>, vector<128x32xbf16>, vector<8x32xf32> -> vector<8x32xf32>
    %c0_59 = arith.constant 0 : index
    %c0_60 = arith.constant 0 : index
    %191 = vector.load %arg6[%c0_59, %c0_60] : memref<1x32xf32, #tpu.memory_space<vmem>>, vector<1x32xf32>
    %192 = vector.broadcast %191 : vector<1x32xf32> to vector<8x32xf32>
    %193 = arith.addf %190, %192 : vector<8x32xf32>
    %194 = vector.shape_cast %193 : vector<8x32xf32> to vector<1x8x32xf32>
    %c0_61 = arith.constant 0 : index
    %c0_62 = arith.constant 0 : index
    %c0_63 = arith.constant 0 : index
    %195 = vector.load %arg7[%c0_61, %c0_62, %c0_63] : memref<1x8x32xf32, #tpu.memory_space<vmem>>, vector<1x8x32xf32>
    tpu.vector_store %arg7[%c0_61, %c0_62, %c0_63], %194 {strides = array<i32>} : memref<1x8x32xf32, #tpu.memory_space<vmem>>, vector<1x8x32xf32>,
    return
  }
  func.func @transform_0(%arg0: i32) -> (i32, i32, i32) {
    %c0_i32 = arith.constant 0 : i32
    %c0_i32_0 = arith.constant 0 : i32
    %c0_i32_1 = arith.constant 0 : i32
    return %arg0, %c0_i32, %c0_i32_0 : i32, i32, i32
  }
  func.func @transform_1(%arg0: i32) -> (i32, i32) {
    %c0_i32 = arith.constant 0 : i32
    %c0_i32_0 = arith.constant 0 : i32
    %c0_i32_1 = arith.constant 0 : i32
    return %c0_i32, %c0_i32_0 : i32, i32
  }
  func.func @transform_2(%arg0: i32) -> (i32, i32) {
    %c0_i32 = arith.constant 0 : i32
    %c0_i32_0 = arith.constant 0 : i32
    %c0_i32_1 = arith.constant 0 : i32
    return %c0_i32, %c0_i32_0 : i32, i32
  }
  func.func @transform_3(%arg0: i32) -> (i32, i32) {
    %c0_i32 = arith.constant 0 : i32
    %c0_i32_0 = arith.constant 0 : i32
    %c0_i32_1 = arith.constant 0 : i32
    return %c0_i32, %c0_i32_0 : i32, i32
  }
  func.func @transform_4(%arg0: i32) -> (i32, i32) {
    %c0_i32 = arith.constant 0 : i32
    %c0_i32_0 = arith.constant 0 : i32
    %c0_i32_1 = arith.constant 0 : i32
    return %c0_i32, %c0_i32_0 : i32, i32
  }
  func.func @transform_5(%arg0: i32) -> (i32, i32) {
    %c0_i32 = arith.constant 0 : i32
    %c0_i32_0 = arith.constant 0 : i32
    %c0_i32_1 = arith.constant 0 : i32
    return %c0_i32, %c0_i32_0 : i32, i32
  }
  func.func @transform_6(%arg0: i32) -> (i32, i32, i32) {
    %c0_i32 = arith.constant 0 : i32
    %c0_i32_0 = arith.constant 0 : i32
    %c0_i32_1 = arith.constant 0 : i32
    return %arg0, %c0_i32, %c0_i32_0 : i32, i32, i32
  }
}

module attributes {stable_mosaic.version = 11 : i64} {
  func.func @kernel(%arg0: i32, %arg1: memref<1x8x32xf32, #tpu.memory_space<vmem>>, %arg2: memref<1x32xf32, #tpu.memory_space<vmem>>, %arg3: memref<1x32xf32, #tpu.memory_space<vmem>>, %arg4: memref<32x384xbf16, #tpu.memory_space<vmem>>, %arg5: memref<128x32xbf16, #tpu.memory_space<vmem>>, %arg6: memref<1x32xf32, #tpu.memory_space<vmem>>, %arg7: memref<1x8x32xf32, #tpu.memory_space<vmem>>, %arg8: memref<8x128xf32, #tpu.memory_space<vmem>>) attributes {dimension_semantics = [#tpu.dimension_semantics<parallel>], iteration_bounds = array<i64: 2>, scalar_prefetch = 0 : i64, scratch_operands = 1 : i64, tpu.core_type = #tpu.core_type<tc>, window_params = [{transform_indices = @transform_0, window_bounds = array<i64: 1, 8, 32>}, {pipeline_mode = #tpu.pipeline_mode<synchronous>, transform_indices = @transform_1, window_bounds = array<i64: 1, 32>}, {pipeline_mode = #tpu.pipeline_mode<synchronous>, transform_indices = @transform_2, window_bounds = array<i64: 1, 32>}, {pipeline_mode = #tpu.pipeline_mode<synchronous>, transform_indices = @transform_3, window_bounds = array<i64: 32, 384>}, {pipeline_mode = #tpu.pipeline_mode<synchronous>, transform_indices = @transform_4, window_bounds = array<i64: 128, 32>}, {pipeline_mode = #tpu.pipeline_mode<synchronous>, transform_indices = @transform_5, window_bounds = array<i64: 1, 32>}, {transform_indices = @transform_6, window_bounds = array<i64: 1, 8, 32>}]} {
    %c0 = arith.constant 0 : index
    %c0_0 = arith.constant 0 : index
    %c0_1 = arith.constant 0 : index
    %0 = vector.load %arg1[%c0, %c0_0, %c0_1] : memref<1x8x32xf32, #tpu.memory_space<vmem>>, vector<1x8x32xf32>
    %1 = vector.shape_cast %0 : vector<1x8x32xf32> to vector<8x32xf32>
    %cst = arith.constant dense<0.000000e+00> : vector<8xf32>
    %2 = vector.multi_reduction <add>, %1, %cst [1] : vector<8x32xf32> to vector<8xf32>
    %3 = vector.shape_cast %2 : vector<8xf32> to vector<8x1xf32>
    %cst_2 = arith.constant 3.200000e+01 : f32
    %4 = vector.broadcast %cst_2 : f32 to vector<8x1xf32>
    %5 = arith.divf %3, %4 : vector<8x1xf32>
    %6 = vector.broadcast %5 : vector<8x1xf32> to vector<8x32xf32>
    %7 = arith.subf %1, %6 : vector<8x32xf32>
    %8 = arith.mulf %7, %7 : vector<8x32xf32>
    %cst_3 = arith.constant dense<0.000000e+00> : vector<8xf32>
    %9 = vector.multi_reduction <add>, %8, %cst_3 [1] : vector<8x32xf32> to vector<8xf32>
    %10 = vector.shape_cast %9 : vector<8xf32> to vector<8x1xf32>
    %cst_4 = arith.constant 3.200000e+01 : f32
    %11 = vector.broadcast %cst_4 : f32 to vector<8x1xf32>
    %12 = arith.divf %10, %11 : vector<8x1xf32>
    %cst_5 = arith.constant 9.99999974E-6 : f32
    %13 = vector.broadcast %cst_5 : f32 to vector<8x1xf32>
    %14 = arith.addf %12, %13 : vector<8x1xf32>
    %15 = math.rsqrt %14 : vector<8x1xf32>
    %16 = vector.broadcast %15 : vector<8x1xf32> to vector<8x32xf32>
    %17 = arith.mulf %7, %16 : vector<8x32xf32>
    %c0_6 = arith.constant 0 : index
    %c0_7 = arith.constant 0 : index
    %18 = vector.load %arg2[%c0_6, %c0_7] : memref<1x32xf32, #tpu.memory_space<vmem>>, vector<1x32xf32>
    %19 = vector.broadcast %18 : vector<1x32xf32> to vector<8x32xf32>
    %20 = arith.mulf %17, %19 : vector<8x32xf32>
    %c0_8 = arith.constant 0 : index
    %c0_9 = arith.constant 0 : index
    %21 = vector.load %arg3[%c0_8, %c0_9] : memref<1x32xf32, #tpu.memory_space<vmem>>, vector<1x32xf32>
    %22 = vector.broadcast %21 : vector<1x32xf32> to vector<8x32xf32>
    %23 = arith.addf %20, %22 : vector<8x32xf32>
    %24 = arith.truncf %23 : vector<8x32xf32> to vector<8x32xbf16>
    %c0_10 = arith.constant 0 : index
    %c0_11 = arith.constant 0 : index
    %25 = vector.load %arg4[%c0_10, %c0_11] : memref<32x384xbf16, #tpu.memory_space<vmem>>, vector<32x384xbf16>
    %cst_12 = arith.constant dense<0.000000e+00> : vector<8x384xf32>
    %26 = tpu.matmul %24, %25, %cst_12 {dimension_numbers = #tpu.dot_dimension_numbers<[1], [0], [0], [1], [0, 0, 1, 1], [], []>} : vector<8x32xbf16>, vector<32x384xbf16>, vector<8x384xf32> -> vector<8x384xf32>
    %27 = vector.extract_strided_slice %26 {offsets = [0, 0], sizes = [8, 16], strides = [1, 1]} : vector<8x384xf32> to vector<8x16xf32>
    %28 = vector.extract_strided_slice %26 {offsets = [0, 128], sizes = [8, 16], strides = [1, 1]} : vector<8x384xf32> to vector<8x16xf32>
    %29 = vector.extract_strided_slice %26 {offsets = [0, 256], sizes = [8, 16], strides = [1, 1]} : vector<8x384xf32> to vector<8x16xf32>
    %30 = arith.truncf %27 : vector<8x16xf32> to vector<8x16xbf16>
    %31 = arith.truncf %28 : vector<8x16xf32> to vector<8x16xbf16>
    %32 = arith.truncf %29 : vector<8x16xf32> to vector<8x16xbf16>
    %cst_13 = arith.constant dense<0.000000e+00> : vector<8x8xf32>
    %33 = tpu.matmul %30, %31, %cst_13 {dimension_numbers = #tpu.dot_dimension_numbers<[1], [1], [0], [0], [0, 0, 1, 0], [], []>} : vector<8x16xbf16>, vector<8x16xbf16>, vector<8x8xf32> -> vector<8x8xf32>
    %cst_14 = arith.constant dense<0xFF800000> : vector<8xf32>
    %34 = vector.multi_reduction <maximumf>, %33, %cst_14 [1] : vector<8x8xf32> to vector<8xf32>
    %35 = vector.shape_cast %34 : vector<8xf32> to vector<8x1xf32>
    %36 = vector.broadcast %35 : vector<8x1xf32> to vector<8x8xf32>
    %37 = arith.subf %33, %36 : vector<8x8xf32>
    %38 = math.exp %37 : vector<8x8xf32>
    %cst_15 = arith.constant dense<0.000000e+00> : vector<8xf32>
    %39 = vector.multi_reduction <add>, %38, %cst_15 [1] : vector<8x8xf32> to vector<8xf32>
    %40 = vector.shape_cast %39 : vector<8xf32> to vector<8x1xf32>
    %41 = tpu.reciprocal %40 {approx = true} : vector<8x1xf32> -> vector<8x1xf32>
    %42 = vector.broadcast %41 : vector<8x1xf32> to vector<8x8xf32>
    %43 = arith.mulf %38, %42 : vector<8x8xf32>
    %44 = arith.truncf %43 : vector<8x8xf32> to vector<8x8xbf16>
    %cst_16 = arith.constant dense<0.000000e+00> : vector<8x16xf32>
    %45 = tpu.matmul %44, %32, %cst_16 {dimension_numbers = #tpu.dot_dimension_numbers<[1], [0], [0], [1], [0, 0, 1, 1], [], []>} : vector<8x8xbf16>, vector<8x16xbf16>, vector<8x16xf32> -> vector<8x16xf32>
    %c0_17 = arith.constant 0 : index
    %c0_18 = arith.constant 0 : index
    %46 = vector.load %arg8[%c0_17, %c0_18] : memref<8x128xf32, #tpu.memory_space<vmem>>, vector<8x16xf32>
    tpu.vector_store %arg8[%c0_17, %c0_18], %45 {strides = array<i32>} : memref<8x128xf32, #tpu.memory_space<vmem>>, vector<8x16xf32>,
    %47 = vector.extract_strided_slice %26 {offsets = [0, 16], sizes = [8, 16], strides = [1, 1]} : vector<8x384xf32> to vector<8x16xf32>
    %48 = vector.extract_strided_slice %26 {offsets = [0, 144], sizes = [8, 16], strides = [1, 1]} : vector<8x384xf32> to vector<8x16xf32>
    %49 = vector.extract_strided_slice %26 {offsets = [0, 272], sizes = [8, 16], strides = [1, 1]} : vector<8x384xf32> to vector<8x16xf32>
    %50 = arith.truncf %47 : vector<8x16xf32> to vector<8x16xbf16>
    %51 = arith.truncf %48 : vector<8x16xf32> to vector<8x16xbf16>
    %52 = arith.truncf %49 : vector<8x16xf32> to vector<8x16xbf16>
    %cst_19 = arith.constant dense<0.000000e+00> : vector<8x8xf32>
    %53 = tpu.matmul %50, %51, %cst_19 {dimension_numbers = #tpu.dot_dimension_numbers<[1], [1], [0], [0], [0, 0, 1, 0], [], []>} : vector<8x16xbf16>, vector<8x16xbf16>, vector<8x8xf32> -> vector<8x8xf32>
    %cst_20 = arith.constant dense<0xFF800000> : vector<8xf32>
    %54 = vector.multi_reduction <maximumf>, %53, %cst_20 [1] : vector<8x8xf32> to vector<8xf32>
    %55 = vector.shape_cast %54 : vector<8xf32> to vector<8x1xf32>
    %56 = vector.broadcast %55 : vector<8x1xf32> to vector<8x8xf32>
    %57 = arith.subf %53, %56 : vector<8x8xf32>
    %58 = math.exp %57 : vector<8x8xf32>
    %cst_21 = arith.constant dense<0.000000e+00> : vector<8xf32>
    %59 = vector.multi_reduction <add>, %58, %cst_21 [1] : vector<8x8xf32> to vector<8xf32>
    %60 = vector.shape_cast %59 : vector<8xf32> to vector<8x1xf32>
    %61 = tpu.reciprocal %60 {approx = true} : vector<8x1xf32> -> vector<8x1xf32>
    %62 = vector.broadcast %61 : vector<8x1xf32> to vector<8x8xf32>
    %63 = arith.mulf %58, %62 : vector<8x8xf32>
    %64 = arith.truncf %63 : vector<8x8xf32> to vector<8x8xbf16>
    %cst_22 = arith.constant dense<0.000000e+00> : vector<8x16xf32>
    %65 = tpu.matmul %64, %52, %cst_22 {dimension_numbers = #tpu.dot_dimension_numbers<[1], [0], [0], [1], [0, 0, 1, 1], [], []>} : vector<8x8xbf16>, vector<8x16xbf16>, vector<8x16xf32> -> vector<8x16xf32>
    %c0_23 = arith.constant 0 : index
    %c16 = arith.constant 16 : index
    %66 = vector.load %arg8[%c0_23, %c16] : memref<8x128xf32, #tpu.memory_space<vmem>>, vector<8x16xf32>
    tpu.vector_store %arg8[%c0_23, %c16], %65 {strides = array<i32>} : memref<8x128xf32, #tpu.memory_space<vmem>>, vector<8x16xf32>,
    %67 = vector.extract_strided_slice %26 {offsets = [0, 32], sizes = [8, 16], strides = [1, 1]} : vector<8x384xf32> to vector<8x16xf32>
    %68 = vector.extract_strided_slice %26 {offsets = [0, 160], sizes = [8, 16], strides = [1, 1]} : vector<8x384xf32> to vector<8x16xf32>
    %69 = vector.extract_strided_slice %26 {offsets = [0, 288], sizes = [8, 16], strides = [1, 1]} : vector<8x384xf32> to vector<8x16xf32>
    %70 = arith.truncf %67 : vector<8x16xf32> to vector<8x16xbf16>
    %71 = arith.truncf %68 : vector<8x16xf32> to vector<8x16xbf16>
    %72 = arith.truncf %69 : vector<8x16xf32> to vector<8x16xbf16>
    %cst_24 = arith.constant dense<0.000000e+00> : vector<8x8xf32>
    %73 = tpu.matmul %70, %71, %cst_24 {dimension_numbers = #tpu.dot_dimension_numbers<[1], [1], [0], [0], [0, 0, 1, 0], [], []>} : vector<8x16xbf16>, vector<8x16xbf16>, vector<8x8xf32> -> vector<8x8xf32>
    %cst_25 = arith.constant dense<0xFF800000> : vector<8xf32>
    %74 = vector.multi_reduction <maximumf>, %73, %cst_25 [1] : vector<8x8xf32> to vector<8xf32>
    %75 = vector.shape_cast %74 : vector<8xf32> to vector<8x1xf32>
    %76 = vector.broadcast %75 : vector<8x1xf32> to vector<8x8xf32>
    %77 = arith.subf %73, %76 : vector<8x8xf32>
    %78 = math.exp %77 : vector<8x8xf32>
    %cst_26 = arith.constant dense<0.000000e+00> : vector<8xf32>
    %79 = vector.multi_reduction <add>, %78, %cst_26 [1] : vector<8x8xf32> to vector<8xf32>
    %80 = vector.shape_cast %79 : vector<8xf32> to vector<8x1xf32>
    %81 = tpu.reciprocal %80 {approx = true} : vector<8x1xf32> -> vector<8x1xf32>
    %82 = vector.broadcast %81 : vector<8x1xf32> to vector<8x8xf32>
    %83 = arith.mulf %78, %82 : vector<8x8xf32>
    %84 = arith.truncf %83 : vector<8x8xf32> to vector<8x8xbf16>
    %cst_27 = arith.constant dense<0.000000e+00> : vector<8x16xf32>
    %85 = tpu.matmul %84, %72, %cst_27 {dimension_numbers = #tpu.dot_dimension_numbers<[1], [0], [0], [1], [0, 0, 1, 1], [], []>} : vector<8x8xbf16>, vector<8x16xbf16>, vector<8x16xf32> -> vector<8x16xf32>
    %c0_28 = arith.constant 0 : index
    %c32 = arith.constant 32 : index
    %86 = vector.load %arg8[%c0_28, %c32] : memref<8x128xf32, #tpu.memory_space<vmem>>, vector<8x16xf32>
    tpu.vector_store %arg8[%c0_28, %c32], %85 {strides = array<i32>} : memref<8x128xf32, #tpu.memory_space<vmem>>, vector<8x16xf32>,
    %87 = vector.extract_strided_slice %26 {offsets = [0, 48], sizes = [8, 16], strides = [1, 1]} : vector<8x384xf32> to vector<8x16xf32>
    %88 = vector.extract_strided_slice %26 {offsets = [0, 176], sizes = [8, 16], strides = [1, 1]} : vector<8x384xf32> to vector<8x16xf32>
    %89 = vector.extract_strided_slice %26 {offsets = [0, 304], sizes = [8, 16], strides = [1, 1]} : vector<8x384xf32> to vector<8x16xf32>
    %90 = arith.truncf %87 : vector<8x16xf32> to vector<8x16xbf16>
    %91 = arith.truncf %88 : vector<8x16xf32> to vector<8x16xbf16>
    %92 = arith.truncf %89 : vector<8x16xf32> to vector<8x16xbf16>
    %cst_29 = arith.constant dense<0.000000e+00> : vector<8x8xf32>
    %93 = tpu.matmul %90, %91, %cst_29 {dimension_numbers = #tpu.dot_dimension_numbers<[1], [1], [0], [0], [0, 0, 1, 0], [], []>} : vector<8x16xbf16>, vector<8x16xbf16>, vector<8x8xf32> -> vector<8x8xf32>
    %cst_30 = arith.constant dense<0xFF800000> : vector<8xf32>
    %94 = vector.multi_reduction <maximumf>, %93, %cst_30 [1] : vector<8x8xf32> to vector<8xf32>
    %95 = vector.shape_cast %94 : vector<8xf32> to vector<8x1xf32>
    %96 = vector.broadcast %95 : vector<8x1xf32> to vector<8x8xf32>
    %97 = arith.subf %93, %96 : vector<8x8xf32>
    %98 = math.exp %97 : vector<8x8xf32>
    %cst_31 = arith.constant dense<0.000000e+00> : vector<8xf32>
    %99 = vector.multi_reduction <add>, %98, %cst_31 [1] : vector<8x8xf32> to vector<8xf32>
    %100 = vector.shape_cast %99 : vector<8xf32> to vector<8x1xf32>
    %101 = tpu.reciprocal %100 {approx = true} : vector<8x1xf32> -> vector<8x1xf32>
    %102 = vector.broadcast %101 : vector<8x1xf32> to vector<8x8xf32>
    %103 = arith.mulf %98, %102 : vector<8x8xf32>
    %104 = arith.truncf %103 : vector<8x8xf32> to vector<8x8xbf16>
    %cst_32 = arith.constant dense<0.000000e+00> : vector<8x16xf32>
    %105 = tpu.matmul %104, %92, %cst_32 {dimension_numbers = #tpu.dot_dimension_numbers<[1], [0], [0], [1], [0, 0, 1, 1], [], []>} : vector<8x8xbf16>, vector<8x16xbf16>, vector<8x16xf32> -> vector<8x16xf32>
    %c0_33 = arith.constant 0 : index
    %c48 = arith.constant 48 : index
    %106 = vector.load %arg8[%c0_33, %c48] : memref<8x128xf32, #tpu.memory_space<vmem>>, vector<8x16xf32>
    tpu.vector_store %arg8[%c0_33, %c48], %105 {strides = array<i32>} : memref<8x128xf32, #tpu.memory_space<vmem>>, vector<8x16xf32>,
    %107 = vector.extract_strided_slice %26 {offsets = [0, 64], sizes = [8, 16], strides = [1, 1]} : vector<8x384xf32> to vector<8x16xf32>
    %108 = vector.extract_strided_slice %26 {offsets = [0, 192], sizes = [8, 16], strides = [1, 1]} : vector<8x384xf32> to vector<8x16xf32>
    %109 = vector.extract_strided_slice %26 {offsets = [0, 320], sizes = [8, 16], strides = [1, 1]} : vector<8x384xf32> to vector<8x16xf32>
    %110 = arith.truncf %107 : vector<8x16xf32> to vector<8x16xbf16>
    %111 = arith.truncf %108 : vector<8x16xf32> to vector<8x16xbf16>
    %112 = arith.truncf %109 : vector<8x16xf32> to vector<8x16xbf16>
    %cst_34 = arith.constant dense<0.000000e+00> : vector<8x8xf32>
    %113 = tpu.matmul %110, %111, %cst_34 {dimension_numbers = #tpu.dot_dimension_numbers<[1], [1], [0], [0], [0, 0, 1, 0], [], []>} : vector<8x16xbf16>, vector<8x16xbf16>, vector<8x8xf32> -> vector<8x8xf32>
    %cst_35 = arith.constant dense<0xFF800000> : vector<8xf32>
    %114 = vector.multi_reduction <maximumf>, %113, %cst_35 [1] : vector<8x8xf32> to vector<8xf32>
    %115 = vector.shape_cast %114 : vector<8xf32> to vector<8x1xf32>
    %116 = vector.broadcast %115 : vector<8x1xf32> to vector<8x8xf32>
    %117 = arith.subf %113, %116 : vector<8x8xf32>
    %118 = math.exp %117 : vector<8x8xf32>
    %cst_36 = arith.constant dense<0.000000e+00> : vector<8xf32>
    %119 = vector.multi_reduction <add>, %118, %cst_36 [1] : vector<8x8xf32> to vector<8xf32>
    %120 = vector.shape_cast %119 : vector<8xf32> to vector<8x1xf32>
    %121 = tpu.reciprocal %120 {approx = true} : vector<8x1xf32> -> vector<8x1xf32>
    %122 = vector.broadcast %121 : vector<8x1xf32> to vector<8x8xf32>
    %123 = arith.mulf %118, %122 : vector<8x8xf32>
    %124 = arith.truncf %123 : vector<8x8xf32> to vector<8x8xbf16>
    %cst_37 = arith.constant dense<0.000000e+00> : vector<8x16xf32>
    %125 = tpu.matmul %124, %112, %cst_37 {dimension_numbers = #tpu.dot_dimension_numbers<[1], [0], [0], [1], [0, 0, 1, 1], [], []>} : vector<8x8xbf16>, vector<8x16xbf16>, vector<8x16xf32> -> vector<8x16xf32>
    %c0_38 = arith.constant 0 : index
    %c64 = arith.constant 64 : index
    %126 = vector.load %arg8[%c0_38, %c64] : memref<8x128xf32, #tpu.memory_space<vmem>>, vector<8x16xf32>
    tpu.vector_store %arg8[%c0_38, %c64], %125 {strides = array<i32>} : memref<8x128xf32, #tpu.memory_space<vmem>>, vector<8x16xf32>,
    %127 = vector.extract_strided_slice %26 {offsets = [0, 80], sizes = [8, 16], strides = [1, 1]} : vector<8x384xf32> to vector<8x16xf32>
    %128 = vector.extract_strided_slice %26 {offsets = [0, 208], sizes = [8, 16], strides = [1, 1]} : vector<8x384xf32> to vector<8x16xf32>
    %129 = vector.extract_strided_slice %26 {offsets = [0, 336], sizes = [8, 16], strides = [1, 1]} : vector<8x384xf32> to vector<8x16xf32>
    %130 = arith.truncf %127 : vector<8x16xf32> to vector<8x16xbf16>
    %131 = arith.truncf %128 : vector<8x16xf32> to vector<8x16xbf16>
    %132 = arith.truncf %129 : vector<8x16xf32> to vector<8x16xbf16>
    %cst_39 = arith.constant dense<0.000000e+00> : vector<8x8xf32>
    %133 = tpu.matmul %130, %131, %cst_39 {dimension_numbers = #tpu.dot_dimension_numbers<[1], [1], [0], [0], [0, 0, 1, 0], [], []>} : vector<8x16xbf16>, vector<8x16xbf16>, vector<8x8xf32> -> vector<8x8xf32>
    %cst_40 = arith.constant dense<0xFF800000> : vector<8xf32>
    %134 = vector.multi_reduction <maximumf>, %133, %cst_40 [1] : vector<8x8xf32> to vector<8xf32>
    %135 = vector.shape_cast %134 : vector<8xf32> to vector<8x1xf32>
    %136 = vector.broadcast %135 : vector<8x1xf32> to vector<8x8xf32>
    %137 = arith.subf %133, %136 : vector<8x8xf32>
    %138 = math.exp %137 : vector<8x8xf32>
    %cst_41 = arith.constant dense<0.000000e+00> : vector<8xf32>
    %139 = vector.multi_reduction <add>, %138, %cst_41 [1] : vector<8x8xf32> to vector<8xf32>
    %140 = vector.shape_cast %139 : vector<8xf32> to vector<8x1xf32>
    %141 = tpu.reciprocal %140 {approx = true} : vector<8x1xf32> -> vector<8x1xf32>
    %142 = vector.broadcast %141 : vector<8x1xf32> to vector<8x8xf32>
    %143 = arith.mulf %138, %142 : vector<8x8xf32>
    %144 = arith.truncf %143 : vector<8x8xf32> to vector<8x8xbf16>
    %cst_42 = arith.constant dense<0.000000e+00> : vector<8x16xf32>
    %145 = tpu.matmul %144, %132, %cst_42 {dimension_numbers = #tpu.dot_dimension_numbers<[1], [0], [0], [1], [0, 0, 1, 1], [], []>} : vector<8x8xbf16>, vector<8x16xbf16>, vector<8x16xf32> -> vector<8x16xf32>
    %c0_43 = arith.constant 0 : index
    %c80 = arith.constant 80 : index
    %146 = vector.load %arg8[%c0_43, %c80] : memref<8x128xf32, #tpu.memory_space<vmem>>, vector<8x16xf32>
    tpu.vector_store %arg8[%c0_43, %c80], %145 {strides = array<i32>} : memref<8x128xf32, #tpu.memory_space<vmem>>, vector<8x16xf32>,
    %147 = vector.extract_strided_slice %26 {offsets = [0, 96], sizes = [8, 16], strides = [1, 1]} : vector<8x384xf32> to vector<8x16xf32>
    %148 = vector.extract_strided_slice %26 {offsets = [0, 224], sizes = [8, 16], strides = [1, 1]} : vector<8x384xf32> to vector<8x16xf32>
    %149 = vector.extract_strided_slice %26 {offsets = [0, 352], sizes = [8, 16], strides = [1, 1]} : vector<8x384xf32> to vector<8x16xf32>
    %150 = arith.truncf %147 : vector<8x16xf32> to vector<8x16xbf16>
    %151 = arith.truncf %148 : vector<8x16xf32> to vector<8x16xbf16>
    %152 = arith.truncf %149 : vector<8x16xf32> to vector<8x16xbf16>
    %cst_44 = arith.constant dense<0.000000e+00> : vector<8x8xf32>
    %153 = tpu.matmul %150, %151, %cst_44 {dimension_numbers = #tpu.dot_dimension_numbers<[1], [1], [0], [0], [0, 0, 1, 0], [], []>} : vector<8x16xbf16>, vector<8x16xbf16>, vector<8x8xf32> -> vector<8x8xf32>
    %cst_45 = arith.constant dense<0xFF800000> : vector<8xf32>
    %154 = vector.multi_reduction <maximumf>, %153, %cst_45 [1] : vector<8x8xf32> to vector<8xf32>
    %155 = vector.shape_cast %154 : vector<8xf32> to vector<8x1xf32>
    %156 = vector.broadcast %155 : vector<8x1xf32> to vector<8x8xf32>
    %157 = arith.subf %153, %156 : vector<8x8xf32>
    %158 = math.exp %157 : vector<8x8xf32>
    %cst_46 = arith.constant dense<0.000000e+00> : vector<8xf32>
    %159 = vector.multi_reduction <add>, %158, %cst_46 [1] : vector<8x8xf32> to vector<8xf32>
    %160 = vector.shape_cast %159 : vector<8xf32> to vector<8x1xf32>
    %161 = tpu.reciprocal %160 {approx = true} : vector<8x1xf32> -> vector<8x1xf32>
    %162 = vector.broadcast %161 : vector<8x1xf32> to vector<8x8xf32>
    %163 = arith.mulf %158, %162 : vector<8x8xf32>
    %164 = arith.truncf %163 : vector<8x8xf32> to vector<8x8xbf16>
    %cst_47 = arith.constant dense<0.000000e+00> : vector<8x16xf32>
    %165 = tpu.matmul %164, %152, %cst_47 {dimension_numbers = #tpu.dot_dimension_numbers<[1], [0], [0], [1], [0, 0, 1, 1], [], []>} : vector<8x8xbf16>, vector<8x16xbf16>, vector<8x16xf32> -> vector<8x16xf32>
    %c0_48 = arith.constant 0 : index
    %c96 = arith.constant 96 : index
    %166 = vector.load %arg8[%c0_48, %c96] : memref<8x128xf32, #tpu.memory_space<vmem>>, vector<8x16xf32>
    tpu.vector_store %arg8[%c0_48, %c96], %165 {strides = array<i32>} : memref<8x128xf32, #tpu.memory_space<vmem>>, vector<8x16xf32>,
    %167 = vector.extract_strided_slice %26 {offsets = [0, 112], sizes = [8, 16], strides = [1, 1]} : vector<8x384xf32> to vector<8x16xf32>
    %168 = vector.extract_strided_slice %26 {offsets = [0, 240], sizes = [8, 16], strides = [1, 1]} : vector<8x384xf32> to vector<8x16xf32>
    %169 = vector.extract_strided_slice %26 {offsets = [0, 368], sizes = [8, 16], strides = [1, 1]} : vector<8x384xf32> to vector<8x16xf32>
    %170 = arith.truncf %167 : vector<8x16xf32> to vector<8x16xbf16>
    %171 = arith.truncf %168 : vector<8x16xf32> to vector<8x16xbf16>
    %172 = arith.truncf %169 : vector<8x16xf32> to vector<8x16xbf16>
    %cst_49 = arith.constant dense<0.000000e+00> : vector<8x8xf32>
    %173 = tpu.matmul %170, %171, %cst_49 {dimension_numbers = #tpu.dot_dimension_numbers<[1], [1], [0], [0], [0, 0, 1, 0], [], []>} : vector<8x16xbf16>, vector<8x16xbf16>, vector<8x8xf32> -> vector<8x8xf32>
    %cst_50 = arith.constant dense<0xFF800000> : vector<8xf32>
    %174 = vector.multi_reduction <maximumf>, %173, %cst_50 [1] : vector<8x8xf32> to vector<8xf32>
    %175 = vector.shape_cast %174 : vector<8xf32> to vector<8x1xf32>
    %176 = vector.broadcast %175 : vector<8x1xf32> to vector<8x8xf32>
    %177 = arith.subf %173, %176 : vector<8x8xf32>
    %178 = math.exp %177 : vector<8x8xf32>
    %cst_51 = arith.constant dense<0.000000e+00> : vector<8xf32>
    %179 = vector.multi_reduction <add>, %178, %cst_51 [1] : vector<8x8xf32> to vector<8xf32>
    %180 = vector.shape_cast %179 : vector<8xf32> to vector<8x1xf32>
    %181 = tpu.reciprocal %180 {approx = true} : vector<8x1xf32> -> vector<8x1xf32>
    %182 = vector.broadcast %181 : vector<8x1xf32> to vector<8x8xf32>
    %183 = arith.mulf %178, %182 : vector<8x8xf32>
    %184 = arith.truncf %183 : vector<8x8xf32> to vector<8x8xbf16>
    %cst_52 = arith.constant dense<0.000000e+00> : vector<8x16xf32>
    %185 = tpu.matmul %184, %172, %cst_52 {dimension_numbers = #tpu.dot_dimension_numbers<[1], [0], [0], [1], [0, 0, 1, 1], [], []>} : vector<8x8xbf16>, vector<8x16xbf16>, vector<8x16xf32> -> vector<8x16xf32>
    %c0_53 = arith.constant 0 : index
    %c112 = arith.constant 112 : index
    %186 = vector.load %arg8[%c0_53, %c112] : memref<8x128xf32, #tpu.memory_space<vmem>>, vector<8x16xf32>
    tpu.vector_store %arg8[%c0_53, %c112], %185 {strides = array<i32>} : memref<8x128xf32, #tpu.memory_space<vmem>>, vector<8x16xf32>,
    %c0_54 = arith.constant 0 : index
    %c0_55 = arith.constant 0 : index
    %187 = vector.load %arg8[%c0_54, %c0_55] : memref<8x128xf32, #tpu.memory_space<vmem>>, vector<8x128xf32>
    %188 = arith.truncf %187 : vector<8x128xf32> to vector<8x128xbf16>
    %c0_56 = arith.constant 0 : index
    %c0_57 = arith.constant 0 : index
    %189 = vector.load %arg5[%c0_56, %c0_57] : memref<128x32xbf16, #tpu.memory_space<vmem>>, vector<128x32xbf16>
    %cst_58 = arith.constant dense<0.000000e+00> : vector<8x32xf32>
    %190 = tpu.matmul %188, %189, %cst_58 {dimension_numbers = #tpu.dot_dimension_numbers<[1], [0], [0], [1], [0, 0, 1, 1], [], []>} : vector<8x128xbf16>, vector<128x32xbf16>, vector<8x32xf32> -> vector<8x32xf32>
    %c0_59 = arith.constant 0 : index
    %c0_60 = arith.constant 0 : index
    %191 = vector.load %arg6[%c0_59, %c0_60] : memref<1x32xf32, #tpu.memory_space<vmem>>, vector<1x32xf32>
    %192 = vector.broadcast %191 : vector<1x32xf32> to vector<8x32xf32>
    %193 = arith.addf %190, %192 : vector<8x32xf32>
    %194 = vector.shape_cast %193 : vector<8x32xf32> to vector<1x8x32xf32>
    %c0_61 = arith.constant 0 : index
    %c0_62 = arith.constant 0 : index
    %c0_63 = arith.constant 0 : index
    %195 = vector.load %arg7[%c0_61, %c0_62, %c0_63] : memref<1x8x32xf32, #tpu.memory_space<vmem>>, vector<1x8x32xf32>
    tpu.vector_store %arg7[%c0_61, %c0_62, %c0_63], %194 {strides = array<i32>} : memref<1x8x32xf32, #tpu.memory_space<vmem>>, vector<1x8x32xf32>,
    return
  }
  func.func @transform_0(%arg0: i32) -> (i32, i32, i32) {
    %c0_i32 = arith.constant 0 : i32
    %c0_i32_0 = arith.constant 0 : i32
    %c0_i32_1 = arith.constant 0 : i32
    return %arg0, %c0_i32, %c0_i32_0 : i32, i32, i32
  }
  func.func @transform_1(%arg0: i32) -> (i32, i32) {
    %c0_i32 = arith.constant 0 : i32
    %c0_i32_0 = arith.constant 0 : i32
    %c0_i32_1 = arith.constant 0 : i32
    return %c0_i32, %c0_i32_0 : i32, i32
  }
  func.func @transform_2(%arg0: i32) -> (i32, i32) {
    %c0_i32 = arith.constant 0 : i32
    %c0_i32_0 = arith.constant 0 : i32
    %c0_i32_1 = arith.constant 0 : i32
    return %c0_i32, %c0_i32_0 : i32, i32
  }
  func.func @transform_3(%arg0: i32) -> (i32, i32) {
    %c0_i32 = arith.constant 0 : i32
    %c0_i32_0 = arith.constant 0 : i32
    %c0_i32_1 = arith.constant 0 : i32
    return %c0_i32, %c0_i32_0 : i32, i32
  }
  func.func @transform_4(%arg0: i32) -> (i32, i32) {
    %c0_i32 = arith.constant 0 : i32
    %c0_i32_0 = arith.constant 0 : i32
    %c0_i32_1 = arith.constant 0 : i32
    return %c0_i32, %c0_i32_0 : i32, i32
  }
  func.func @transform_5(%arg0: i32) -> (i32, i32) {
    %c0_i32 = arith.constant 0 : i32
    %c0_i32_0 = arith.constant 0 : i32
    %c0_i32_1 = arith.constant 0 : i32
    return %c0_i32, %c0_i32_0 : i32, i32
  }
  func.func @transform_6(%arg0: i32) -> (i32, i32, i32) {
    %c0_i32 = arith.constant 0 : i32
    %c0_i32_0 = arith.constant 0 : i32
    %c0_i32_1 = arith.constant 0 : i32
    return %arg0, %c0_i32, %c0_i32_0 : i32, i32, i32
  }
}

</mosaic_0001>

<llo_original>
// kernel: tpu_custom_call.1
$region0: #{tpu_custom_call.1}
  #allocation0 [shape = 'u32[]', space=smem, size = 0x4, offset = 0x4, fixed_abs, tag = 'smem constant byte address 0x4 - core index']
  #allocation1 [shape = 'u32[144,128]{1,0:T(1,128)}', space=vmem, size = 0x12000, scoped, tag = 'internal scratch']
  #allocation2 [shape = 'f32[8,128]{1,0:T(8,128)}', space=vmem, size = 0x1000, scoped, tag = 'scratch operand']
  %s0 = inlined_call_operand.vmem [shape: f32[2,8,32], index: 0, kind: input, shape index: {}]
  %s1 = inlined_call_operand.vmem [shape: f32[1,32], index: 1, kind: input, shape index: {}]
  %s2 = inlined_call_operand.vmem [shape: f32[1,32], index: 2, kind: input, shape index: {}]
  %s3 = inlined_call_operand.vmem [shape: bf16[32,384], index: 3, kind: input, shape index: {}]
  %s4 = inlined_call_operand.vmem [shape: bf16[128,32], index: 4, kind: input, shape index: {}]
  %s5 = inlined_call_operand.vmem [shape: f32[1,32], index: 5, kind: input, shape index: {}]
  %s6 = inlined_call_operand.hbm [shape: f32[2,8,32], index: 6, kind: output, shape index: {}]
  %s7 = sld [smem:[#allocation0]]
  $region57: #{tpu_custom_call.1} parent=0
    _
  %s9 = ssub.s32 1, %s7
  %s10 = scalar_select 0, %s9, %s7
  $region1: #{tpu_custom_call.1} parent=0
    #allocation3 [shape = 'u8[8192]{0}', space=vmem, size = 0x2000, scoped, tag = 'output window, operand 0']
    #allocation4 [shape = 's32[2]{0}', space=sflag, size = 0x8, scoped, tag = 'scoped memory for tpu_custom_call.1']
    %11 = vsyncpa [#allocation4], 0
    %s12 = scalar_lea.sflag [#allocation4], 1
    %13 = vsyncpa %s12, 0
    loop: start=0, step=1, limit=4
    $region2: #{tpu_custom_call.1} parent=1 // loop_pre_header
      _
    $region3: #{tpu_custom_call.1} parent=1 // loop_header
      %s15 = sphi 0, %s19
      %p16 = scmp.ge.s32.totalorder %s15, 4
      %s25 = sphi 0, %s27
      %s28 = sphi 0, %s25
      %s29 = sphi 0, %s28
      %s45 = sphi 0, %s29
      %s49 = sphi 0, %s49
      %s51 = sphi 0, %s49
      %s52 = sphi 0, %s51
      %s66 = sphi 0, %s52
      %s70 = sphi 0, %s70
      %s72 = sphi 0, %s70
      %s73 = sphi 0, %s72
      %s87 = sphi 0, %s73
      %s91 = sphi 0, %s91
      %s93 = sphi 0, %s91
      %s94 = sphi 0, %s93
      %s108 = sphi 0, %s94
      %s112 = sphi 0, %s112
      %s114 = sphi 0, %s112
      %s115 = sphi 0, %s114
      %s129 = sphi 0, %s115
      %s133 = sphi 0, %s133
      %s135 = sphi 0, %s133
      %s136 = sphi 0, %s135
      %s150 = sphi 0, %s136
      %s156 = sphi 0, %s158
      %s159 = sphi 0, %s156
      %s160 = sphi 0, %s159
      %s176 = sphi 0, %s160
    $region4: #{tpu_custom_call.1} parent=1 // loop_header_branch
      %18 = sbr.rel (%p16) target = $region8
    $region5: #{tpu_custom_call.1} parent=1 // loop_body
      %s20 = ssub.s32 %s15, 1
      %s21 = ssub.s32 %s15, 2
      %s22 = sadd.s32 %s15, 1
      %s23 = ssub.s32 %s15, %s22
      %p24 = scmp.eq.s32.totalorder %s23, 0
      %s26 = sadd.s32 %s25, 1
      %s27 = scalar_select %p24, %s25, %s26
      %p30 = pneg %p24
      %p31 = scmp.eq.s32.totalorder %s15, 1
      %p32 = por %p30, %p31
      %p33 = scmp.ne.s32.totalorder %s25, %s28
      %p34 = scmp.eq.s32.totalorder %s15, 0
      %p35 = por %p33, %p34
      %p36 = scmp.ne.s32.totalorder %s25, %s28
      %p37 = scmp.eq.s32.totalorder %s20, 1
      %p38 = por %p36, %p37
      %p39 = scmp.ne.s32.totalorder %s28, %s29
      %p40 = scmp.eq.s32.totalorder %s20, 0
      %p41 = por %p39, %p40
      %p42 = scmp.ne.s32.totalorder %s28, %s29
      %p43 = scmp.eq.s32.totalorder %s21, 1
      %p44 = por %p42, %p43
      %p46 = scmp.ne.s32.totalorder %s29, %s45
      %p47 = scmp.eq.s32.totalorder %s21, 0
      %p48 = por %p46, %p47
      %s50 = sadd.s32 %s49, 1
      %p53 = scmp.eq.s32.totalorder %s15, 1
      %p54 = scmp.ne.s32.totalorder %s49, %s51
      %p55 = scmp.eq.s32.totalorder %s15, 0
      %p56 = por %p54, %p55
      %p57 = scmp.ne.s32.totalorder %s49, %s51
      %p58 = scmp.eq.s32.totalorder %s20, 1
      %p59 = por %p57, %p58
      %p60 = scmp.ne.s32.totalorder %s51, %s52
      %p61 = scmp.eq.s32.totalorder %s20, 0
      %p62 = por %p60, %p61
      %p63 = scmp.ne.s32.totalorder %s51, %s52
      %p64 = scmp.eq.s32.totalorder %s21, 1
      %p65 = por %p63, %p64
      %p67 = scmp.ne.s32.totalorder %s52, %s66
      %p68 = scmp.eq.s32.totalorder %s21, 0
      %p69 = por %p67, %p68
      %s71 = sadd.s32 %s70, 1
      %p74 = scmp.eq.s32.totalorder %s15, 1
      %p75 = scmp.ne.s32.totalorder %s70, %s72
      %p76 = scmp.eq.s32.totalorder %s15, 0
      %p77 = por %p75, %p76
      %p78 = scmp.ne.s32.totalorder %s70, %s72
      %p79 = scmp.eq.s32.totalorder %s20, 1
      %p80 = por %p78, %p79
      %p81 = scmp.ne.s32.totalorder %s72, %s73
      %p82 = scmp.eq.s32.totalorder %s20, 0
      %p83 = por %p81, %p82
      %p84 = scmp.ne.s32.totalorder %s72, %s73
      %p85 = scmp.eq.s32.totalorder %s21, 1
      %p86 = por %p84, %p85
      %p88 = scmp.ne.s32.totalorder %s73, %s87
      %p89 = scmp.eq.s32.totalorder %s21, 0
      %p90 = por %p88, %p89
      %s92 = sadd.s32 %s91, 1
      %p95 = scmp.eq.s32.totalorder %s15, 1
      %p96 = scmp.ne.s32.totalorder %s91, %s93
      %p97 = scmp.eq.s32.totalorder %s15, 0
      %p98 = por %p96, %p97
      %p99 = scmp.ne.s32.totalorder %s91, %s93
      %p100 = scmp.eq.s32.totalorder %s20, 1
      %p101 = por %p99, %p100
      %p102 = scmp.ne.s32.totalorder %s93, %s94
      %p103 = scmp.eq.s32.totalorder %s20, 0
      %p104 = por %p102, %p103
      %p105 = scmp.ne.s32.totalorder %s93, %s94
      %p106 = scmp.eq.s32.totalorder %s21, 1
      %p107 = por %p105, %p106
      %p109 = scmp.ne.s32.totalorder %s94, %s108
      %p110 = scmp.eq.s32.totalorder %s21, 0
      %p111 = por %p109, %p110
      %s113 = sadd.s32 %s112, 1
      %p116 = scmp.eq.s32.totalorder %s15, 1
      %p117 = scmp.ne.s32.totalorder %s112, %s114
      %p118 = scmp.eq.s32.totalorder %s15, 0
      %p119 = por %p117, %p118
      %p120 = scmp.ne.s32.totalorder %s112, %s114
      %p121 = scmp.eq.s32.totalorder %s20, 1
      %p122 = por %p120, %p121
      %p123 = scmp.ne.s32.totalorder %s114, %s115
      %p124 = scmp.eq.s32.totalorder %s20, 0
      %p125 = por %p123, %p124
      %p126 = scmp.ne.s32.totalorder %s114, %s115
      %p127 = scmp.eq.s32.totalorder %s21, 1
      %p128 = por %p126, %p127
      %p130 = scmp.ne.s32.totalorder %s115, %s129
      %p131 = scmp.eq.s32.totalorder %s21, 0
      %p132 = por %p130, %p131
      %s134 = sadd.s32 %s133, 1
      %p137 = scmp.eq.s32.totalorder %s15, 1
      %p138 = scmp.ne.s32.totalorder %s133, %s135
      %p139 = scmp.eq.s32.totalorder %s15, 0
      %p140 = por %p138, %p139
      %p141 = scmp.ne.s32.totalorder %s133, %s135
      %p142 = scmp.eq.s32.totalorder %s20, 1
      %p143 = por %p141, %p142
      %p144 = scmp.ne.s32.totalorder %s135, %s136
      %p145 = scmp.eq.s32.totalorder %s20, 0
      %p146 = por %p144, %p145
      %p147 = scmp.ne.s32.totalorder %s135, %s136
      %p148 = scmp.eq.s32.totalorder %s21, 1
      %p149 = por %p147, %p148
      %p151 = scmp.ne.s32.totalorder %s136, %s150
      %p152 = scmp.eq.s32.totalorder %s21, 0
      %p153 = por %p151, %p152
      %s154 = ssub.s32 %s15, %s22
      %p155 = scmp.eq.s32.totalorder %s154, 0
      %s157 = sadd.s32 %s156, 1
      %s158 = scalar_select %p155, %s156, %s157
      %p161 = pneg %p155
      %p162 = scmp.eq.s32.totalorder %s15, 1
      %p163 = por %p161, %p162
      %p164 = scmp.ne.s32.totalorder %s156, %s159
      %p165 = scmp.eq.s32.totalorder %s15, 0
      %p166 = por %p164, %p165
      %p167 = scmp.ne.s32.totalorder %s156, %s159
      %p168 = scmp.eq.s32.totalorder %s20, 1
      %p169 = por %p167, %p168
      %p170 = scmp.ne.s32.totalorder %s159, %s160
      %p171 = scmp.eq.s32.totalorder %s20, 0
      %p172 = por %p170, %p171
      %p173 = scmp.ne.s32.totalorder %s159, %s160
      %p174 = scmp.eq.s32.totalorder %s21, 1
      %p175 = por %p173, %p174
      %p177 = scmp.ne.s32.totalorder %s160, %s176
      %p178 = scmp.eq.s32.totalorder %s21, 0
      %p179 = por %p177, %p178
      %p180 = scmp.le.s32.totalorder 1, %s15
      %p181 = scmp.lt.s32.totalorder %s15, 3
      %p182 = pnand %p180, %p181
      %p183 = pneg %p182
      // Predicated region
      $region9: #{tpu_custom_call.1} parent=5 // pred_check
        _
      $region10: #{tpu_custom_call.1} parent=5 // pred_check_branch
        %185 = sbr.rel (%p182) target = $region12
      $region11: #{tpu_custom_call.1} parent=5 // pred_region
        %s186 = ssub.s32 %s15, 1
        // Predicated region
        $region13: #{tpu_custom_call.1} parent=11 // pred_check
          %p187 = pneg %p62
        $region14: #{tpu_custom_call.1} parent=11 // pred_check_branch
          %189 = sbr.rel (%p187) target = $region16
        $region15: #{tpu_custom_call.1} parent=11 // pred_region
          _
        $region16: #{tpu_custom_call.1} parent=11 // pred_fallthru
          _
        // Predicated region
        $region17: #{tpu_custom_call.1} parent=11 // pred_check
          %p190 = pneg %p83
        $region18: #{tpu_custom_call.1} parent=11 // pred_check_branch
          %192 = sbr.rel (%p190) target = $region20
        $region19: #{tpu_custom_call.1} parent=11 // pred_region
          _
        $region20: #{tpu_custom_call.1} parent=11 // pred_fallthru
          _
        // Predicated region
        $region21: #{tpu_custom_call.1} parent=11 // pred_check
          %p193 = pneg %p104
        $region22: #{tpu_custom_call.1} parent=11 // pred_check_branch
          %195 = sbr.rel (%p193) target = $region24
        $region23: #{tpu_custom_call.1} parent=11 // pred_region
          _
        $region24: #{tpu_custom_call.1} parent=11 // pred_fallthru
          _
        // Predicated region
        $region25: #{tpu_custom_call.1} parent=11 // pred_check
          %p196 = pneg %p125
        $region26: #{tpu_custom_call.1} parent=11 // pred_check_branch
          %198 = sbr.rel (%p196) target = $region28
        $region27: #{tpu_custom_call.1} parent=11 // pred_region
          _
        $region28: #{tpu_custom_call.1} parent=11 // pred_fallthru
          _
        // Predicated region
        $region29: #{tpu_custom_call.1} parent=11 // pred_check
          %p199 = pneg %p146
        $region30: #{tpu_custom_call.1} parent=11 // pred_check_branch
          %201 = sbr.rel (%p199) target = $region32
        $region31: #{tpu_custom_call.1} parent=11 // pred_region
          _
        $region32: #{tpu_custom_call.1} parent=11 // pred_fallthru
          _
      $region12: #{tpu_custom_call.1} parent=5 // pred_fallthru
        _
      %p202 = scmp.lt.s32.totalorder %s15, 2
      // Predicated region
      $region33: #{tpu_custom_call.1} parent=5 // pred_check
        %p203 = pneg %p202
      $region34: #{tpu_custom_call.1} parent=5 // pred_check_branch
        %205 = sbr.rel (%p203) target = $region36
      $region35: #{tpu_custom_call.1} parent=5 // pred_region
        // Predicated region
        $region37: #{tpu_custom_call.1} parent=35 // pred_check
          %p206 = pneg %p35
        $region38: #{tpu_custom_call.1} parent=35 // pred_check_branch
          %208 = sbr.rel (%p206) target = $region40
        $region39: #{tpu_custom_call.1} parent=35 // pred_region
          %p209 = scmp.lt.s32.totalorder %s15, 1
          %s210 = scalar_select %p209, %s15, 1
          %s211 = smul.addr %s210, 8
          %s212 = scalar_lea.vmem %s0, %s211
        $region40: #{tpu_custom_call.1} parent=35 // pred_fallthru
          _
      $region36: #{tpu_custom_call.1} parent=5 // pred_fallthru
        _
      %p213 = scmp.le.s32.totalorder 1, %s15
      %p214 = scmp.lt.s32.totalorder %s15, 3
      %p215 = pnand %p213, %p214
      %p216 = pneg %p215
      // Predicated region
      $region41: #{tpu_custom_call.1} parent=5 // pred_check
        _
      $region42: #{tpu_custom_call.1} parent=5 // pred_check_branch
        %218 = sbr.rel (%p215) target = $region44
      $region43: #{tpu_custom_call.1} parent=5 // pred_region
        %s219 = ssub.s32 %s15, 1
        %p220 = scmp.lt.s32.totalorder %s20, 1
        %s221 = scalar_select %p220, %s20, 1
        %s222 = smul.addr %s221, 8
        %s223 = scalar_lea.vmem %s0, %s222
        %p224 = pneg %p41
        %p225 = pneg %p38
        %p226 = pneg %p62
        %p227 = pneg %p59
        %p228 = pneg %p83
        %p229 = pneg %p80
        %p230 = pneg %p104
        %p231 = pneg %p101
        %p232 = pneg %p125
        %p233 = pneg %p122
        %p234 = pneg %p146
        %p235 = pneg %p143
        %p236 = pneg %p172
        %p237 = pneg %p169
        %s238 = sand.u32 %s159, 1
        %s239 = scalar_lea.sflag [#allocation4], %s238
        %s240 = sand.u32 %s159, 1
        %s241 = smul.addr %s240, 8
        %s242 = scalar_lea.vmem [#allocation3], %s241
        %p243 = scmp.lt.s32.totalorder %s20, 1
        %s244 = scalar_select %p243, %s20, 1
        %s245 = smul.addr %s244, 8
        %s246 = scalar_lea.vmem %s0, %s245
        %v248 = vld [vmem:[%s246] sm:$0xff]
        %vm249 = vcmask 261120
        %v250 = vsel %vm249, %v248, 0.0
        %251 = vadd.xlane.f32.xlu0 %v250
        %v252 = vpop.xlane.xlu0 %251
        %v253 = vrcp.pop 32.0
        %v254 = vmul.f32 %v252, %v253
        %v255 = vsub.f32 %v248, %v254
        %v256 = vmul.f32 %v255, %v255
        %v257 = vsel %vm249, %v256, 0.0
        %258 = vadd.xlane.f32.xlu0 %v257
        %v259 = vpop.xlane.xlu0 %258
        %v260 = vmul.f32 %v259, %v253
        %v261 = vadd.f32 %v260, 1e-05
        %v262 = vrsqrt.pop %v261
        %v263 = vmul.f32 %v255, %v262
        %v264 = vld [vmem:[%s1] sm:$0x1]
        %v266 = vlaneseq
        %v267 = vshrl.u32 %v266, 7
        %v268 = vsub.s32 0, %v267
        %v269 = vrot.slane %v264, %v268
        %v271 = vmul.f32 %v263, %v269
        %v272 = vld [vmem:[%s2] sm:$0x1]
        %v274 = vlaneseq
        %v275 = vshrl.u32 %v274, 7
        %v276 = vsub.s32 0, %v275
        %v277 = vrot.slane %v272, %v276
        %v279 = vadd.f32 %v271, %v277
        %v280 = vpack.c.bf16 %v279, %v279
        %v281 = vld [vmem:[%s3] sm:$0xff]
        %v282 = vld [vmem:[%s3 + $0x8] sm:$0xf]
        %v283 = vld [vmem:[%s3 + $0xc] sm:$0xff]
        %v284 = vld [vmem:[%s3 + $0x14] sm:$0xf]
        %v285 = vld [vmem:[%s3 + $0x18] sm:$0xff]
        %v286 = vld [vmem:[%s3 + $0x20] sm:$0xf]
        %v287 = vld [vmem:[%s3 + $0x24] sm:$0xff]
        %v288 = vld [vmem:[%s3 + $0x2c] sm:$0xf]
        %v297 = vunpack.c.l.b16 %v281
        %v298 = vunpack.c.h.b16 %v281
        %v299 = vunpack.c.l.b16 %v282
        %v300 = vunpack.c.l.b16 %v283
        %v301 = vunpack.c.h.b16 %v283
        %v302 = vunpack.c.l.b16 %v284
        %v303 = vunpack.c.l.b16 %v285
        %v304 = vunpack.c.h.b16 %v285
        %v305 = vunpack.c.l.b16 %v286
        %v306 = vunpack.c.l.b16 %v287
        %v307 = vunpack.c.h.b16 %v287
        %v308 = vunpack.c.l.b16 %v288
        %v309 = vpack.c.b16 %v300, %v297
        %v310 = vpack.c.b16 %v301, %v298
        %v311 = vpack.c.b16 %v302, %v299
        %v312 = vpack.c.b16 %v306, %v303
        %v313 = vpack.c.b16 %v307, %v304
        %v314 = vpack.c.b16 %v308, %v305
        %v322 = vsel %vm249, %v280, 0
        %324 = vmatprep.subr.bf16.mxu0 %v310
        %325 = vmatpush1.bf16.msra.mxu0 %v309
        %326 = vmatprep.subr.bf16.mxu0 %v313
        %327 = vmatpush1.bf16.msra.mxu0 %v312
        %328 = vmatprep.subr.bf16.mxu0 0
        %329 = vmatpush1.bf16.msra.mxu0 0
        %330 = vmatprep.subr.bf16.mxu0 0
        %331 = vmatpush1.bf16.msra.mxu0 0
        %332 = vmatprep.subr.bf16.mxu0 0
        %333 = vmatpush1.bf16.msra.mxu0 0
        %334 = vmatprep.subr.bf16.mxu0 0
        %335 = vmatpush1.bf16.msra.mxu0 0
        %336 = vmatprep.subr.bf16.mxu0 0
        %337 = vmatpush1.bf16.msra.mxu0 0
        %338 = vmatprep.subr.bf16.mxu0 0
        %339 = vmatpush1.bf16.msra.mxu0 0
        %340 = vmatprep.subr.bf16.mxu0 0
        %341 = vmatpush1.bf16.msra.mxu0 0
        %342 = vmatprep.subr.bf16.mxu0 0
        %343 = vmatpush1.bf16.msra.mxu0 0
        %344 = vmatprep.subr.bf16.mxu0 0
        %345 = vmatpush1.bf16.msra.mxu0 0
        %346 = vmatprep.subr.bf16.mxu0 0
        %347 = vmatpush1.bf16.msra.mxu0 0
        %348 = vmatprep.subr.bf16.mxu0 0
        %349 = vmatpush1.bf16.msra.mxu0 0
        %350 = vmatprep.subr.bf16.mxu0 0
        %351 = vmatpush1.bf16.msra.mxu0 0
        %352 = vmatprep.subr.bf16.mxu0 0
        %353 = vmatpush1.bf16.msra.mxu0 0
        %354 = vmatprep.subr.bf16.mxu0 0
        %355 = vmatpush1.bf16.msra.mxu0 0
        %356 = vmatprep.mubr.bf16.mxu0 0
        %357 = vmatmul.mubr.bf16.gmra.mrb[0].mxu0 %v322
        %v358 = vpop.f32.mrb[0].mxu0
        %v359 = vadd.f32 0.0, %v358
        %v360 = vpop.f32.mrb[0].mxu0
        %v361 = vadd.f32 0.0, %v360
        %v362 = vpop.f32.mrb[0].mxu0
        %v363 = vpop.f32.mrb[0].mxu0
        %364 = vdwg.mxu0
        %365 = vmatprep.subr.bf16.mxu0 0
        %366 = vmatpush1.bf16.msra.mxu0 %v311
        %367 = vmatprep.subr.bf16.mxu0 0
        %368 = vmatpush1.bf16.msra.mxu0 %v314
        %369 = vmatprep.subr.bf16.mxu0 0
        %370 = vmatpush1.bf16.msra.mxu0 0
        %371 = vmatprep.subr.bf16.mxu0 0
        %372 = vmatpush1.bf16.msra.mxu0 0
        %373 = vmatprep.subr.bf16.mxu0 0
        %374 = vmatpush1.bf16.msra.mxu0 0
        %375 = vmatprep.subr.bf16.mxu0 0
        %376 = vmatpush1.bf16.msra.mxu0 0
        %377 = vmatprep.subr.bf16.mxu0 0
        %378 = vmatpush1.bf16.msra.mxu0 0
        %379 = vmatprep.subr.bf16.mxu0 0
        %380 = vmatpush1.bf16.msra.mxu0 0
        %381 = vmatprep.subr.bf16.mxu0 0
        %382 = vmatpush1.bf16.msra.mxu0 0
        %383 = vmatprep.subr.bf16.mxu0 0
        %384 = vmatpush1.bf16.msra.mxu0 0
        %385 = vmatprep.subr.bf16.mxu0 0
        %386 = vmatpush1.bf16.msra.mxu0 0
        %387 = vmatprep.subr.bf16.mxu0 0
        %388 = vmatpush1.bf16.msra.mxu0 0
        %389 = vmatprep.subr.bf16.mxu0 0
        %390 = vmatpush1.bf16.msra.mxu0 0
        %391 = vmatprep.subr.bf16.mxu0 0
        %392 = vmatpush1.bf16.msra.mxu0 0
        %393 = vmatprep.subr.bf16.mxu0 0
        %394 = vmatpush1.bf16.msra.mxu0 0
        %395 = vmatprep.subr.bf16.mxu0 0
        %396 = vmatpush1.bf16.msra.mxu0 0
        %397 = vmatprep.mubr.bf16.mxu0 0
        %398 = vmatmul.mubr.bf16.gmra.mrb[0].mxu0 %v322
        %v399 = vpop.f32.mrb[0].mxu0
        %v400 = vadd.f32 0.0, %v399
        %v401 = vpop.f32.mrb[0].mxu0
        %v402 = vpop.f32.mrb[0].mxu0
        %v403 = vpop.f32.mrb[0].mxu0
        %404 = vdwg.mxu0
        %v405 = vpack.c.bf16 %v359, %v359
        %v406 = vpack.c.bf16 %v361, %v361
        %v407 = vpack.c.bf16 %v400, %v400
        %vm408 = vcmask 130048
        %v410 = vsel %vm408, %v405, 0
        %v413 = vsel %vm408, %v406, 0
        %415 = vmatprep.subr.bf16.mxu0 0
        %416 = vmatpush1.bf16.xpose.msra.mxu0 %v413
        %417 = vmatprep.subr.bf16.mxu0 0
        %418 = vmatpush1.bf16.xpose.msra.mxu0 0
        %419 = vmatprep.subr.bf16.mxu0 0
        %420 = vmatpush1.bf16.xpose.msra.mxu0 0
        %421 = vmatprep.subr.bf16.mxu0 0
        %422 = vmatpush1.bf16.xpose.msra.mxu0 0
        %423 = vmatprep.subr.bf16.mxu0 0
        %424 = vmatpush1.bf16.xpose.msra.mxu0 0
        %425 = vmatprep.subr.bf16.mxu0 0
        %426 = vmatpush1.bf16.xpose.msra.mxu0 0
        %427 = vmatprep.subr.bf16.mxu0 0
        %428 = vmatpush1.bf16.xpose.msra.mxu0 0
        %429 = vmatprep.subr.bf16.mxu0 0
        %430 = vmatpush1.bf16.xpose.msra.mxu0 0
        %431 = vmatprep.subr.bf16.mxu0 0
        %432 = vmatpush1.bf16.xpose.msra.mxu0 0
        %433 = vmatprep.subr.bf16.mxu0 0
        %434 = vmatpush1.bf16.xpose.msra.mxu0 0
        %435 = vmatprep.subr.bf16.mxu0 0
        %436 = vmatpush1.bf16.xpose.msra.mxu0 0
        %437 = vmatprep.subr.bf16.mxu0 0
        %438 = vmatpush1.bf16.xpose.msra.mxu0 0
        %439 = vmatprep.subr.bf16.mxu0 0
        %440 = vmatpush1.bf16.xpose.msra.mxu0 0
        %441 = vmatprep.subr.bf16.mxu0 0
        %442 = vmatpush1.bf16.xpose.msra.mxu0 0
        %443 = vmatprep.subr.bf16.mxu0 0
        %444 = vmatpush1.bf16.xpose.msra.mxu0 0
        %445 = vmatprep.subr.bf16.mxu0 0
        %446 = vmatpush1.bf16.xpose.msra.mxu0 0
        %447 = vmatprep.mubr.bf16.mxu0 0
        %448 = vmatmul.mubr.bf16.gmra.mrb[0].mxu0 %v410
        %v449 = vpop.f32.mrb[0].mxu0
        %v450 = vadd.f32 0.0, %v449
        %v451 = vpop.f32.mrb[0].mxu0
        %v452 = vpop.f32.mrb[0].mxu0
        %v453 = vpop.f32.mrb[0].mxu0
        %454 = vdwg.mxu0
        %vm455 = vcmask 64512
        %v456 = vsel %vm455, %v450, -inf
        %457 = vmax.xlane.f32.xlu0 %v456
        %v458 = vpop.xlane.xlu0 %457
        %v459 = vsub.f32 %v450, %v458
        %v460 = vmul.f32 %v459, 1.442695
        %v461 = vpow.pop %v460
        %v462 = vsel %vm455, %v461, 0.0
        %463 = vadd.xlane.f32.xlu0 %v462
        %v464 = vpop.xlane.xlu0 %463
        %v465 = vrcp.pop %v464
        %v466 = vmul.f32 %v461, %v465
        %v467 = vpack.c.bf16 %v466, %v466
        %v469 = vsel %vm455, %v467, 0
        %vm471 = vcmask 1043456
        %v473 = vsel %vm471, %v407, 0
        %475 = vmatprep.subr.bf16.mxu0 0
        %476 = vmatpush1.bf16.msra.mxu0 %v473
        %477 = vmatprep.subr.bf16.mxu0 0
        %478 = vmatpush1.bf16.msra.mxu0 0
        %479 = vmatprep.subr.bf16.mxu0 0
        %480 = vmatpush1.bf16.msra.mxu0 0
        %481 = vmatprep.subr.bf16.mxu0 0
        %482 = vmatpush1.bf16.msra.mxu0 0
        %483 = vmatprep.subr.bf16.mxu0 0
        %484 = vmatpush1.bf16.msra.mxu0 0
        %485 = vmatprep.subr.bf16.mxu0 0
        %486 = vmatpush1.bf16.msra.mxu0 0
        %487 = vmatprep.subr.bf16.mxu0 0
        %488 = vmatpush1.bf16.msra.mxu0 0
        %489 = vmatprep.subr.bf16.mxu0 0
        %490 = vmatpush1.bf16.msra.mxu0 0
        %491 = vmatprep.subr.bf16.mxu0 0
        %492 = vmatpush1.bf16.msra.mxu0 0
        %493 = vmatprep.subr.bf16.mxu0 0
        %494 = vmatpush1.bf16.msra.mxu0 0
        %495 = vmatprep.subr.bf16.mxu0 0
        %496 = vmatpush1.bf16.msra.mxu0 0
        %497 = vmatprep.subr.bf16.mxu0 0
        %498 = vmatpush1.bf16.msra.mxu0 0
        %499 = vmatprep.subr.bf16.mxu0 0
        %500 = vmatpush1.bf16.msra.mxu0 0
        %501 = vmatprep.subr.bf16.mxu0 0
        %502 = vmatpush1.bf16.msra.mxu0 0
        %503 = vmatprep.subr.bf16.mxu0 0
        %504 = vmatpush1.bf16.msra.mxu0 0
        %505 = vmatprep.subr.bf16.mxu0 0
        %506 = vmatpush1.bf16.msra.mxu0 0
        %507 = vmatprep.mubr.bf16.mxu0 0
        %508 = vmatmul.mubr.bf16.gmra.mrb[0].mxu0 %v469
        %v509 = vpop.f32.mrb[0].mxu0
        %v510 = vadd.f32 0.0, %v509
        %v511 = vpop.f32.mrb[0].mxu0
        %v512 = vpop.f32.mrb[0].mxu0
        %v513 = vpop.f32.mrb[0].mxu0
        %514 = vdwg.mxu0
        %515 = vst.msk [vmem:[#allocation2] sm:$0xff] %vm408, %v510
        %517 = vrot.lane.b32.xlu0 %v405, 112
        %v518 = vpop.permute.xlu0 %517
        %520 = vrot.lane.b32.xlu0 %v406, 112
        %v521 = vpop.permute.xlu0 %520
        %v523 = vsel %vm408, %v518, 0
        %v526 = vsel %vm408, %v521, 0
        %528 = vmatprep.subr.bf16.mxu0 0
        %529 = vmatpush1.bf16.xpose.msra.mxu0 %v526
        %530 = vmatprep.subr.bf16.mxu0 0
        %531 = vmatpush1.bf16.xpose.msra.mxu0 0
        %532 = vmatprep.subr.bf16.mxu0 0
        %533 = vmatpush1.bf16.xpose.msra.mxu0 0
        %534 = vmatprep.subr.bf16.mxu0 0
        %535 = vmatpush1.bf16.xpose.msra.mxu0 0
        %536 = vmatprep.subr.bf16.mxu0 0
        %537 = vmatpush1.bf16.xpose.msra.mxu0 0
        %538 = vmatprep.subr.bf16.mxu0 0
        %539 = vmatpush1.bf16.xpose.msra.mxu0 0
        %540 = vmatprep.subr.bf16.mxu0 0
        %541 = vmatpush1.bf16.xpose.msra.mxu0 0
        %542 = vmatprep.subr.bf16.mxu0 0
        %543 = vmatpush1.bf16.xpose.msra.mxu0 0
        %544 = vmatprep.subr.bf16.mxu0 0
        %545 = vmatpush1.bf16.xpose.msra.mxu0 0
        %546 = vmatprep.subr.bf16.mxu0 0
        %547 = vmatpush1.bf16.xpose.msra.mxu0 0
        %548 = vmatprep.subr.bf16.mxu0 0
        %549 = vmatpush1.bf16.xpose.msra.mxu0 0
        %550 = vmatprep.subr.bf16.mxu0 0
        %551 = vmatpush1.bf16.xpose.msra.mxu0 0
        %552 = vmatprep.subr.bf16.mxu0 0
        %553 = vmatpush1.bf16.xpose.msra.mxu0 0
        %554 = vmatprep.subr.bf16.mxu0 0
        %555 = vmatpush1.bf16.xpose.msra.mxu0 0
        %556 = vmatprep.subr.bf16.mxu0 0
        %557 = vmatpush1.bf16.xpose.msra.mxu0 0
        %558 = vmatprep.subr.bf16.mxu0 0
        %559 = vmatpush1.bf16.xpose.msra.mxu0 0
        %560 = vmatprep.mubr.bf16.mxu0 0
        %561 = vmatmul.mubr.bf16.gmra.mrb[0].mxu0 %v523
        %v562 = vpop.f32.mrb[0].mxu0
        %v563 = vadd.f32 0.0, %v562
        %v564 = vpop.f32.mrb[0].mxu0
        %v565 = vpop.f32.mrb[0].mxu0
        %v566 = vpop.f32.mrb[0].mxu0
        %567 = vdwg.mxu0
        %v568 = vsel %vm455, %v563, -inf
        %569 = vmax.xlane.f32.xlu0 %v568
        %v570 = vpop.xlane.xlu0 %569
        %v571 = vsub.f32 %v563, %v570
        %v572 = vmul.f32 %v571, 1.442695
        %v573 = vpow.pop %v572
        %v574 = vsel %vm455, %v573, 0.0
        %575 = vadd.xlane.f32.xlu0 %v574
        %v576 = vpop.xlane.xlu0 %575
        %v577 = vrcp.pop %v576
        %v578 = vmul.f32 %v573, %v577
        %v579 = vpack.c.bf16 %v578, %v578
        %581 = vrot.lane.b32.xlu0 %v407, 112
        %v582 = vpop.permute.xlu0 %581
        %v584 = vsel %vm455, %v579, 0
        %v587 = vsel %vm471, %v582, 0
        %589 = vmatprep.subr.bf16.mxu0 0
        %590 = vmatpush1.bf16.msra.mxu0 %v587
        %591 = vmatprep.subr.bf16.mxu0 0
        %592 = vmatpush1.bf16.msra.mxu0 0
        %593 = vmatprep.subr.bf16.mxu0 0
        %594 = vmatpush1.bf16.msra.mxu0 0
        %595 = vmatprep.subr.bf16.mxu0 0
        %596 = vmatpush1.bf16.msra.mxu0 0
        %597 = vmatprep.subr.bf16.mxu0 0
        %598 = vmatpush1.bf16.msra.mxu0 0
        %599 = vmatprep.subr.bf16.mxu0 0
        %600 = vmatpush1.bf16.msra.mxu0 0
        %601 = vmatprep.subr.bf16.mxu0 0
        %602 = vmatpush1.bf16.msra.mxu0 0
        %603 = vmatprep.subr.bf16.mxu0 0
        %604 = vmatpush1.bf16.msra.mxu0 0
        %605 = vmatprep.subr.bf16.mxu0 0
        %606 = vmatpush1.bf16.msra.mxu0 0
        %607 = vmatprep.subr.bf16.mxu0 0
        %608 = vmatpush1.bf16.msra.mxu0 0
        %609 = vmatprep.subr.bf16.mxu0 0
        %610 = vmatpush1.bf16.msra.mxu0 0
        %611 = vmatprep.subr.bf16.mxu0 0
        %612 = vmatpush1.bf16.msra.mxu0 0
        %613 = vmatprep.subr.bf16.mxu0 0
        %614 = vmatpush1.bf16.msra.mxu0 0
        %615 = vmatprep.subr.bf16.mxu0 0
        %616 = vmatpush1.bf16.msra.mxu0 0
        %617 = vmatprep.subr.bf16.mxu0 0
        %618 = vmatpush1.bf16.msra.mxu0 0
        %619 = vmatprep.subr.bf16.mxu0 0
        %620 = vmatpush1.bf16.msra.mxu0 0
        %621 = vmatprep.mubr.bf16.mxu0 0
        %622 = vmatmul.mubr.bf16.gmra.mrb[0].mxu0 %v584
        %v623 = vpop.f32.mrb[0].mxu0
        %v624 = vadd.f32 0.0, %v623
        %v625 = vpop.f32.mrb[0].mxu0
        %v626 = vpop.f32.mrb[0].mxu0
        %v627 = vpop.f32.mrb[0].mxu0
        %628 = vdwg.mxu0
        %630 = vrot.lane.b32.xlu0 %v624, 16
        %v631 = vpop.permute.xlu0 %630
        %vm633 = vcmask 261248
        %634 = vst.msk [vmem:[#allocation2] sm:$0xff] %vm633, %v631
        %635 = vrot.lane.b32.xlu0 %v405, 96
        %v636 = vpop.permute.xlu0 %635
        %637 = vrot.lane.b32.xlu0 %v406, 96
        %v638 = vpop.permute.xlu0 %637
        %v640 = vsel %vm408, %v636, 0
        %v643 = vsel %vm408, %v638, 0
        %645 = vmatprep.subr.bf16.mxu0 0
        %646 = vmatpush1.bf16.xpose.msra.mxu0 %v643
        %647 = vmatprep.subr.bf16.mxu0 0
        %648 = vmatpush1.bf16.xpose.msra.mxu0 0
        %649 = vmatprep.subr.bf16.mxu0 0
        %650 = vmatpush1.bf16.xpose.msra.mxu0 0
        %651 = vmatprep.subr.bf16.mxu0 0
        %652 = vmatpush1.bf16.xpose.msra.mxu0 0
        %653 = vmatprep.subr.bf16.mxu0 0
        %654 = vmatpush1.bf16.xpose.msra.mxu0 0
        %655 = vmatprep.subr.bf16.mxu0 0
        %656 = vmatpush1.bf16.xpose.msra.mxu0 0
        %657 = vmatprep.subr.bf16.mxu0 0
        %658 = vmatpush1.bf16.xpose.msra.mxu0 0
        %659 = vmatprep.subr.bf16.mxu0 0
        %660 = vmatpush1.bf16.xpose.msra.mxu0 0
        %661 = vmatprep.subr.bf16.mxu0 0
        %662 = vmatpush1.bf16.xpose.msra.mxu0 0
        %663 = vmatprep.subr.bf16.mxu0 0
        %664 = vmatpush1.bf16.xpose.msra.mxu0 0
        %665 = vmatprep.subr.bf16.mxu0 0
        %666 = vmatpush1.bf16.xpose.msra.mxu0 0
        %667 = vmatprep.subr.bf16.mxu0 0
        %668 = vmatpush1.bf16.xpose.msra.mxu0 0
        %669 = vmatprep.subr.bf16.mxu0 0
        %670 = vmatpush1.bf16.xpose.msra.mxu0 0
        %671 = vmatprep.subr.bf16.mxu0 0
        %672 = vmatpush1.bf16.xpose.msra.mxu0 0
        %673 = vmatprep.subr.bf16.mxu0 0
        %674 = vmatpush1.bf16.xpose.msra.mxu0 0
        %675 = vmatprep.subr.bf16.mxu0 0
        %676 = vmatpush1.bf16.xpose.msra.mxu0 0
        %677 = vmatprep.mubr.bf16.mxu0 0
        %678 = vmatmul.mubr.bf16.gmra.mrb[0].mxu0 %v640
        %v679 = vpop.f32.mrb[0].mxu0
        %v680 = vadd.f32 0.0, %v679
        %v681 = vpop.f32.mrb[0].mxu0
        %v682 = vpop.f32.mrb[0].mxu0
        %v683 = vpop.f32.mrb[0].mxu0
        %684 = vdwg.mxu0
        %v685 = vsel %vm455, %v680, -inf
        %686 = vmax.xlane.f32.xlu0 %v685
        %v687 = vpop.xlane.xlu0 %686
        %v688 = vsub.f32 %v680, %v687
        %v689 = vmul.f32 %v688, 1.442695
        %v690 = vpow.pop %v689
        %v691 = vsel %vm455, %v690, 0.0
        %692 = vadd.xlane.f32.xlu0 %v691
        %v693 = vpop.xlane.xlu0 %692
        %v694 = vrcp.pop %v693
        %v695 = vmul.f32 %v690, %v694
        %v696 = vpack.c.bf16 %v695, %v695
        %697 = vrot.lane.b32.xlu0 %v407, 96
        %v698 = vpop.permute.xlu0 %697
        %v700 = vsel %vm455, %v696, 0
        %v703 = vsel %vm471, %v698, 0
        %705 = vmatprep.subr.bf16.mxu0 0
        %706 = vmatpush1.bf16.msra.mxu0 %v703
        %707 = vmatprep.subr.bf16.mxu0 0
        %708 = vmatpush1.bf16.msra.mxu0 0
        %709 = vmatprep.subr.bf16.mxu0 0
        %710 = vmatpush1.bf16.msra.mxu0 0
        %711 = vmatprep.subr.bf16.mxu0 0
        %712 = vmatpush1.bf16.msra.mxu0 0
        %713 = vmatprep.subr.bf16.mxu0 0
        %714 = vmatpush1.bf16.msra.mxu0 0
        %715 = vmatprep.subr.bf16.mxu0 0
        %716 = vmatpush1.bf16.msra.mxu0 0
        %717 = vmatprep.subr.bf16.mxu0 0
        %718 = vmatpush1.bf16.msra.mxu0 0
        %719 = vmatprep.subr.bf16.mxu0 0
        %720 = vmatpush1.bf16.msra.mxu0 0
        %721 = vmatprep.subr.bf16.mxu0 0
        %722 = vmatpush1.bf16.msra.mxu0 0
        %723 = vmatprep.subr.bf16.mxu0 0
        %724 = vmatpush1.bf16.msra.mxu0 0
        %725 = vmatprep.subr.bf16.mxu0 0
        %726 = vmatpush1.bf16.msra.mxu0 0
        %727 = vmatprep.subr.bf16.mxu0 0
        %728 = vmatpush1.bf16.msra.mxu0 0
        %729 = vmatprep.subr.bf16.mxu0 0
        %730 = vmatpush1.bf16.msra.mxu0 0
        %731 = vmatprep.subr.bf16.mxu0 0
        %732 = vmatpush1.bf16.msra.mxu0 0
        %733 = vmatprep.subr.bf16.mxu0 0
        %734 = vmatpush1.bf16.msra.mxu0 0
        %735 = vmatprep.subr.bf16.mxu0 0
        %736 = vmatpush1.bf16.msra.mxu0 0
        %737 = vmatprep.mubr.bf16.mxu0 0
        %738 = vmatmul.mubr.bf16.gmra.mrb[0].mxu0 %v700
        %v739 = vpop.f32.mrb[0].mxu0
        %v740 = vadd.f32 0.0, %v739
        %v741 = vpop.f32.mrb[0].mxu0
        %v742 = vpop.f32.mrb[0].mxu0
        %v743 = vpop.f32.mrb[0].mxu0
        %744 = vdwg.mxu0
        %746 = vrot.lane.b32.xlu0 %v740, 32
        %v747 = vpop.permute.xlu0 %746
        %vm749 = vcmask 392448
        %750 = vst.msk [vmem:[#allocation2] sm:$0xff] %vm749, %v747
        %751 = vrot.lane.b32.xlu0 %v405, 80
        %v752 = vpop.permute.xlu0 %751
        %753 = vrot.lane.b32.xlu0 %v406, 80
        %v754 = vpop.permute.xlu0 %753
        %v756 = vsel %vm408, %v752, 0
        %v759 = vsel %vm408, %v754, 0
        %761 = vmatprep.subr.bf16.mxu0 0
        %762 = vmatpush1.bf16.xpose.msra.mxu0 %v759
        %763 = vmatprep.subr.bf16.mxu0 0
        %764 = vmatpush1.bf16.xpose.msra.mxu0 0
        %765 = vmatprep.subr.bf16.mxu0 0
        %766 = vmatpush1.bf16.xpose.msra.mxu0 0
        %767 = vmatprep.subr.bf16.mxu0 0
        %768 = vmatpush1.bf16.xpose.msra.mxu0 0
        %769 = vmatprep.subr.bf16.mxu0 0
        %770 = vmatpush1.bf16.xpose.msra.mxu0 0
        %771 = vmatprep.subr.bf16.mxu0 0
        %772 = vmatpush1.bf16.xpose.msra.mxu0 0
        %773 = vmatprep.subr.bf16.mxu0 0
        %774 = vmatpush1.bf16.xpose.msra.mxu0 0
        %775 = vmatprep.subr.bf16.mxu0 0
        %776 = vmatpush1.bf16.xpose.msra.mxu0 0
        %777 = vmatprep.subr.bf16.mxu0 0
        %778 = vmatpush1.bf16.xpose.msra.mxu0 0
        %779 = vmatprep.subr.bf16.mxu0 0
        %780 = vmatpush1.bf16.xpose.msra.mxu0 0
        %781 = vmatprep.subr.bf16.mxu0 0
        %782 = vmatpush1.bf16.xpose.msra.mxu0 0
        %783 = vmatprep.subr.bf16.mxu0 0
        %784 = vmatpush1.bf16.xpose.msra.mxu0 0
        %785 = vmatprep.subr.bf16.mxu0 0
        %786 = vmatpush1.bf16.xpose.msra.mxu0 0
        %787 = vmatprep.subr.bf16.mxu0 0
        %788 = vmatpush1.bf16.xpose.msra.mxu0 0
        %789 = vmatprep.subr.bf16.mxu0 0
        %790 = vmatpush1.bf16.xpose.msra.mxu0 0
        %791 = vmatprep.subr.bf16.mxu0 0
        %792 = vmatpush1.bf16.xpose.msra.mxu0 0
        %793 = vmatprep.mubr.bf16.mxu0 0
        %794 = vmatmul.mubr.bf16.gmra.mrb[0].mxu0 %v756
        %v795 = vpop.f32.mrb[0].mxu0
        %v796 = vadd.f32 0.0, %v795
        %v797 = vpop.f32.mrb[0].mxu0
        %v798 = vpop.f32.mrb[0].mxu0
        %v799 = vpop.f32.mrb[0].mxu0
        %800 = vdwg.mxu0
        %v801 = vsel %vm455, %v796, -inf
        %802 = vmax.xlane.f32.xlu0 %v801
        %v803 = vpop.xlane.xlu0 %802
        %v804 = vsub.f32 %v796, %v803
        %v805 = vmul.f32 %v804, 1.442695
        %v806 = vpow.pop %v805
        %v807 = vsel %vm455, %v806, 0.0
        %808 = vadd.xlane.f32.xlu0 %v807
        %v809 = vpop.xlane.xlu0 %808
        %v810 = vrcp.pop %v809
        %v811 = vmul.f32 %v806, %v810
        %v812 = vpack.c.bf16 %v811, %v811
        %813 = vrot.lane.b32.xlu0 %v407, 80
        %v814 = vpop.permute.xlu0 %813
        %v816 = vsel %vm455, %v812, 0
        %v819 = vsel %vm471, %v814, 0
        %821 = vmatprep.subr.bf16.mxu0 0
        %822 = vmatpush1.bf16.msra.mxu0 %v819
        %823 = vmatprep.subr.bf16.mxu0 0
        %824 = vmatpush1.bf16.msra.mxu0 0
        %825 = vmatprep.subr.bf16.mxu0 0
        %826 = vmatpush1.bf16.msra.mxu0 0
        %827 = vmatprep.subr.bf16.mxu0 0
        %828 = vmatpush1.bf16.msra.mxu0 0
        %829 = vmatprep.subr.bf16.mxu0 0
        %830 = vmatpush1.bf16.msra.mxu0 0
        %831 = vmatprep.subr.bf16.mxu0 0
        %832 = vmatpush1.bf16.msra.mxu0 0
        %833 = vmatprep.subr.bf16.mxu0 0
        %834 = vmatpush1.bf16.msra.mxu0 0
        %835 = vmatprep.subr.bf16.mxu0 0
        %836 = vmatpush1.bf16.msra.mxu0 0
        %837 = vmatprep.subr.bf16.mxu0 0
        %838 = vmatpush1.bf16.msra.mxu0 0
        %839 = vmatprep.subr.bf16.mxu0 0
        %840 = vmatpush1.bf16.msra.mxu0 0
        %841 = vmatprep.subr.bf16.mxu0 0
        %842 = vmatpush1.bf16.msra.mxu0 0
        %843 = vmatprep.subr.bf16.mxu0 0
        %844 = vmatpush1.bf16.msra.mxu0 0
        %845 = vmatprep.subr.bf16.mxu0 0
        %846 = vmatpush1.bf16.msra.mxu0 0
        %847 = vmatprep.subr.bf16.mxu0 0
        %848 = vmatpush1.bf16.msra.mxu0 0
        %849 = vmatprep.subr.bf16.mxu0 0
        %850 = vmatpush1.bf16.msra.mxu0 0
        %851 = vmatprep.subr.bf16.mxu0 0
        %852 = vmatpush1.bf16.msra.mxu0 0
        %853 = vmatprep.mubr.bf16.mxu0 0
        %854 = vmatmul.mubr.bf16.gmra.mrb[0].mxu0 %v816
        %v855 = vpop.f32.mrb[0].mxu0
        %v856 = vadd.f32 0.0, %v855
        %v857 = vpop.f32.mrb[0].mxu0
        %v858 = vpop.f32.mrb[0].mxu0
        %v859 = vpop.f32.mrb[0].mxu0
        %860 = vdwg.mxu0
        %862 = vrot.lane.b32.xlu0 %v856, 48
        %v863 = vpop.permute.xlu0 %862
        %vm865 = vcmask 523648
        %866 = vst.msk [vmem:[#allocation2] sm:$0xff] %vm865, %v863
        %867 = vrot.lane.b32.xlu0 %v405, 64
        %v868 = vpop.permute.xlu0 %867
        %869 = vrot.lane.b32.xlu0 %v406, 64
        %v870 = vpop.permute.xlu0 %869
        %v872 = vsel %vm408, %v868, 0
        %v875 = vsel %vm408, %v870, 0
        %877 = vmatprep.subr.bf16.mxu0 0
        %878 = vmatpush1.bf16.xpose.msra.mxu0 %v875
        %879 = vmatprep.subr.bf16.mxu0 0
        %880 = vmatpush1.bf16.xpose.msra.mxu0 0
        %881 = vmatprep.subr.bf16.mxu0 0
        %882 = vmatpush1.bf16.xpose.msra.mxu0 0
        %883 = vmatprep.subr.bf16.mxu0 0
        %884 = vmatpush1.bf16.xpose.msra.mxu0 0
        %885 = vmatprep.subr.bf16.mxu0 0
        %886 = vmatpush1.bf16.xpose.msra.mxu0 0
        %887 = vmatprep.subr.bf16.mxu0 0
        %888 = vmatpush1.bf16.xpose.msra.mxu0 0
        %889 = vmatprep.subr.bf16.mxu0 0
        %890 = vmatpush1.bf16.xpose.msra.mxu0 0
        %891 = vmatprep.subr.bf16.mxu0 0
        %892 = vmatpush1.bf16.xpose.msra.mxu0 0
        %893 = vmatprep.subr.bf16.mxu0 0
        %894 = vmatpush1.bf16.xpose.msra.mxu0 0
        %895 = vmatprep.subr.bf16.mxu0 0
        %896 = vmatpush1.bf16.xpose.msra.mxu0 0
        %897 = vmatprep.subr.bf16.mxu0 0
        %898 = vmatpush1.bf16.xpose.msra.mxu0 0
        %899 = vmatprep.subr.bf16.mxu0 0
        %900 = vmatpush1.bf16.xpose.msra.mxu0 0
        %901 = vmatprep.subr.bf16.mxu0 0
        %902 = vmatpush1.bf16.xpose.msra.mxu0 0
        %903 = vmatprep.subr.bf16.mxu0 0
        %904 = vmatpush1.bf16.xpose.msra.mxu0 0
        %905 = vmatprep.subr.bf16.mxu0 0
        %906 = vmatpush1.bf16.xpose.msra.mxu0 0
        %907 = vmatprep.subr.bf16.mxu0 0
        %908 = vmatpush1.bf16.xpose.msra.mxu0 0
        %909 = vmatprep.mubr.bf16.mxu0 0
        %910 = vmatmul.mubr.bf16.gmra.mrb[0].mxu0 %v872
        %v911 = vpop.f32.mrb[0].mxu0
        %v912 = vadd.f32 0.0, %v911
        %v913 = vpop.f32.mrb[0].mxu0
        %v914 = vpop.f32.mrb[0].mxu0
        %v915 = vpop.f32.mrb[0].mxu0
        %916 = vdwg.mxu0
        %v917 = vsel %vm455, %v912, -inf
        %918 = vmax.xlane.f32.xlu0 %v917
        %v919 = vpop.xlane.xlu0 %918
        %v920 = vsub.f32 %v912, %v919
        %v921 = vmul.f32 %v920, 1.442695
        %v922 = vpow.pop %v921
        %v923 = vsel %vm455, %v922, 0.0
        %924 = vadd.xlane.f32.xlu0 %v923
        %v925 = vpop.xlane.xlu0 %924
        %v926 = vrcp.pop %v925
        %v927 = vmul.f32 %v922, %v926
        %v928 = vpack.c.bf16 %v927, %v927
        %929 = vrot.lane.b32.xlu0 %v407, 64
        %v930 = vpop.permute.xlu0 %929
        %v932 = vsel %vm455, %v928, 0
        %v935 = vsel %vm471, %v930, 0
        %937 = vmatprep.subr.bf16.mxu0 0
        %938 = vmatpush1.bf16.msra.mxu0 %v935
        %939 = vmatprep.subr.bf16.mxu0 0
        %940 = vmatpush1.bf16.msra.mxu0 0
        %941 = vmatprep.subr.bf16.mxu0 0
        %942 = vmatpush1.bf16.msra.mxu0 0
        %943 = vmatprep.subr.bf16.mxu0 0
        %944 = vmatpush1.bf16.msra.mxu0 0
        %945 = vmatprep.subr.bf16.mxu0 0
        %946 = vmatpush1.bf16.msra.mxu0 0
        %947 = vmatprep.subr.bf16.mxu0 0
        %948 = vmatpush1.bf16.msra.mxu0 0
        %949 = vmatprep.subr.bf16.mxu0 0
        %950 = vmatpush1.bf16.msra.mxu0 0
        %951 = vmatprep.subr.bf16.mxu0 0
        %952 = vmatpush1.bf16.msra.mxu0 0
        %953 = vmatprep.subr.bf16.mxu0 0
        %954 = vmatpush1.bf16.msra.mxu0 0
        %955 = vmatprep.subr.bf16.mxu0 0
        %956 = vmatpush1.bf16.msra.mxu0 0
        %957 = vmatprep.subr.bf16.mxu0 0
        %958 = vmatpush1.bf16.msra.mxu0 0
        %959 = vmatprep.subr.bf16.mxu0 0
        %960 = vmatpush1.bf16.msra.mxu0 0
        %961 = vmatprep.subr.bf16.mxu0 0
        %962 = vmatpush1.bf16.msra.mxu0 0
        %963 = vmatprep.subr.bf16.mxu0 0
        %964 = vmatpush1.bf16.msra.mxu0 0
        %965 = vmatprep.subr.bf16.mxu0 0
        %966 = vmatpush1.bf16.msra.mxu0 0
        %967 = vmatprep.subr.bf16.mxu0 0
        %968 = vmatpush1.bf16.msra.mxu0 0
        %969 = vmatprep.mubr.bf16.mxu0 0
        %970 = vmatmul.mubr.bf16.gmra.mrb[0].mxu0 %v932
        %v971 = vpop.f32.mrb[0].mxu0
        %v972 = vadd.f32 0.0, %v971
        %v973 = vpop.f32.mrb[0].mxu0
        %v974 = vpop.f32.mrb[0].mxu0
        %v975 = vpop.f32.mrb[0].mxu0
        %976 = vdwg.mxu0
        %978 = vrot.lane.b32.xlu0 %v972, 64
        %v979 = vpop.permute.xlu0 %978
        %vm981 = vcmask 654848
        %982 = vst.msk [vmem:[#allocation2] sm:$0xff] %vm981, %v979
        %983 = vrot.lane.b32.xlu0 %v405, 48
        %v984 = vpop.permute.xlu0 %983
        %985 = vrot.lane.b32.xlu0 %v406, 48
        %v986 = vpop.permute.xlu0 %985
        %v988 = vsel %vm408, %v984, 0
        %v991 = vsel %vm408, %v986, 0
        %993 = vmatprep.subr.bf16.mxu0 0
        %994 = vmatpush1.bf16.xpose.msra.mxu0 %v991
        %995 = vmatprep.subr.bf16.mxu0 0
        %996 = vmatpush1.bf16.xpose.msra.mxu0 0
        %997 = vmatprep.subr.bf16.mxu0 0
        %998 = vmatpush1.bf16.xpose.msra.mxu0 0
        %999 = vmatprep.subr.bf16.mxu0 0
        %1000 = vmatpush1.bf16.xpose.msra.mxu0 0
        %1001 = vmatprep.subr.bf16.mxu0 0
        %1002 = vmatpush1.bf16.xpose.msra.mxu0 0
        %1003 = vmatprep.subr.bf16.mxu0 0
        %1004 = vmatpush1.bf16.xpose.msra.mxu0 0
        %1005 = vmatprep.subr.bf16.mxu0 0
        %1006 = vmatpush1.bf16.xpose.msra.mxu0 0
        %1007 = vmatprep.subr.bf16.mxu0 0
        %1008 = vmatpush1.bf16.xpose.msra.mxu0 0
        %1009 = vmatprep.subr.bf16.mxu0 0
        %1010 = vmatpush1.bf16.xpose.msra.mxu0 0
        %1011 = vmatprep.subr.bf16.mxu0 0
        %1012 = vmatpush1.bf16.xpose.msra.mxu0 0
        %1013 = vmatprep.subr.bf16.mxu0 0
        %1014 = vmatpush1.bf16.xpose.msra.mxu0 0
        %1015 = vmatprep.subr.bf16.mxu0 0
        %1016 = vmatpush1.bf16.xpose.msra.mxu0 0
        %1017 = vmatprep.subr.bf16.mxu0 0
        %1018 = vmatpush1.bf16.xpose.msra.mxu0 0
        %1019 = vmatprep.subr.bf16.mxu0 0
        %1020 = vmatpush1.bf16.xpose.msra.mxu0 0
        %1021 = vmatprep.subr.bf16.mxu0 0
        %1022 = vmatpush1.bf16.xpose.msra.mxu0 0
        %1023 = vmatprep.subr.bf16.mxu0 0
        %1024 = vmatpush1.bf16.xpose.msra.mxu0 0
        %1025 = vmatprep.mubr.bf16.mxu0 0
        %1026 = vmatmul.mubr.bf16.gmra.mrb[0].mxu0 %v988
        %v1027 = vpop.f32.mrb[0].mxu0
        %v1028 = vadd.f32 0.0, %v1027
        %v1029 = vpop.f32.mrb[0].mxu0
        %v1030 = vpop.f32.mrb[0].mxu0
        %v1031 = vpop.f32.mrb[0].mxu0
        %1032 = vdwg.mxu0
        %v1033 = vsel %vm455, %v1028, -inf
        %1034 = vmax.xlane.f32.xlu0 %v1033
        %v1035 = vpop.xlane.xlu0 %1034
        %v1036 = vsub.f32 %v1028, %v1035
        %v1037 = vmul.f32 %v1036, 1.442695
        %v1038 = vpow.pop %v1037
        %v1039 = vsel %vm455, %v1038, 0.0
        %1040 = vadd.xlane.f32.xlu0 %v1039
        %v1041 = vpop.xlane.xlu0 %1040
        %v1042 = vrcp.pop %v1041
        %v1043 = vmul.f32 %v1038, %v1042
        %v1044 = vpack.c.bf16 %v1043, %v1043
        %1045 = vrot.lane.b32.xlu0 %v407, 48
        %v1046 = vpop.permute.xlu0 %1045
        %v1048 = vsel %vm455, %v1044, 0
        %v1051 = vsel %vm471, %v1046, 0
        %1053 = vmatprep.subr.bf16.mxu0 0
        %1054 = vmatpush1.bf16.msra.mxu0 %v1051
        %1055 = vmatprep.subr.bf16.mxu0 0
        %1056 = vmatpush1.bf16.msra.mxu0 0
        %1057 = vmatprep.subr.bf16.mxu0 0
        %1058 = vmatpush1.bf16.msra.mxu0 0
        %1059 = vmatprep.subr.bf16.mxu0 0
        %1060 = vmatpush1.bf16.msra.mxu0 0
        %1061 = vmatprep.subr.bf16.mxu0 0
        %1062 = vmatpush1.bf16.msra.mxu0 0
        %1063 = vmatprep.subr.bf16.mxu0 0
        %1064 = vmatpush1.bf16.msra.mxu0 0
        %1065 = vmatprep.subr.bf16.mxu0 0
        %1066 = vmatpush1.bf16.msra.mxu0 0
        %1067 = vmatprep.subr.bf16.mxu0 0
        %1068 = vmatpush1.bf16.msra.mxu0 0
        %1069 = vmatprep.subr.bf16.mxu0 0
        %1070 = vmatpush1.bf16.msra.mxu0 0
        %1071 = vmatprep.subr.bf16.mxu0 0
        %1072 = vmatpush1.bf16.msra.mxu0 0
        %1073 = vmatprep.subr.bf16.mxu0 0
        %1074 = vmatpush1.bf16.msra.mxu0 0
        %1075 = vmatprep.subr.bf16.mxu0 0
        %1076 = vmatpush1.bf16.msra.mxu0 0
        %1077 = vmatprep.subr.bf16.mxu0 0
        %1078 = vmatpush1.bf16.msra.mxu0 0
        %1079 = vmatprep.subr.bf16.mxu0 0
        %1080 = vmatpush1.bf16.msra.mxu0 0
        %1081 = vmatprep.subr.bf16.mxu0 0
        %1082 = vmatpush1.bf16.msra.mxu0 0
        %1083 = vmatprep.subr.bf16.mxu0 0
        %1084 = vmatpush1.bf16.msra.mxu0 0
        %1085 = vmatprep.mubr.bf16.mxu0 0
        %1086 = vmatmul.mubr.bf16.gmra.mrb[0].mxu0 %v1048
        %v1087 = vpop.f32.mrb[0].mxu0
        %v1088 = vadd.f32 0.0, %v1087
        %v1089 = vpop.f32.mrb[0].mxu0
        %v1090 = vpop.f32.mrb[0].mxu0
        %v1091 = vpop.f32.mrb[0].mxu0
        %1092 = vdwg.mxu0
        %1094 = vrot.lane.b32.xlu0 %v1088, 80
        %v1095 = vpop.permute.xlu0 %1094
        %vm1097 = vcmask 786048
        %1098 = vst.msk [vmem:[#allocation2] sm:$0xff] %vm1097, %v1095
        %1099 = vrot.lane.b32.xlu0 %v405, 32
        %v1100 = vpop.permute.xlu0 %1099
        %1101 = vrot.lane.b32.xlu0 %v406, 32
        %v1102 = vpop.permute.xlu0 %1101
        %v1104 = vsel %vm408, %v1100, 0
        %v1107 = vsel %vm408, %v1102, 0
        %1109 = vmatprep.subr.bf16.mxu0 0
        %1110 = vmatpush1.bf16.xpose.msra.mxu0 %v1107
        %1111 = vmatprep.subr.bf16.mxu0 0
        %1112 = vmatpush1.bf16.xpose.msra.mxu0 0
        %1113 = vmatprep.subr.bf16.mxu0 0
        %1114 = vmatpush1.bf16.xpose.msra.mxu0 0
        %1115 = vmatprep.subr.bf16.mxu0 0
        %1116 = vmatpush1.bf16.xpose.msra.mxu0 0
        %1117 = vmatprep.subr.bf16.mxu0 0
        %1118 = vmatpush1.bf16.xpose.msra.mxu0 0
        %1119 = vmatprep.subr.bf16.mxu0 0
        %1120 = vmatpush1.bf16.xpose.msra.mxu0 0
        %1121 = vmatprep.subr.bf16.mxu0 0
        %1122 = vmatpush1.bf16.xpose.msra.mxu0 0
        %1123 = vmatprep.subr.bf16.mxu0 0
        %1124 = vmatpush1.bf16.xpose.msra.mxu0 0
        %1125 = vmatprep.subr.bf16.mxu0 0
        %1126 = vmatpush1.bf16.xpose.msra.mxu0 0
        %1127 = vmatprep.subr.bf16.mxu0 0
        %1128 = vmatpush1.bf16.xpose.msra.mxu0 0
        %1129 = vmatprep.subr.bf16.mxu0 0
        %1130 = vmatpush1.bf16.xpose.msra.mxu0 0
        %1131 = vmatprep.subr.bf16.mxu0 0
        %1132 = vmatpush1.bf16.xpose.msra.mxu0 0
        %1133 = vmatprep.subr.bf16.mxu0 0
        %1134 = vmatpush1.bf16.xpose.msra.mxu0 0
        %1135 = vmatprep.subr.bf16.mxu0 0
        %1136 = vmatpush1.bf16.xpose.msra.mxu0 0
        %1137 = vmatprep.subr.bf16.mxu0 0
        %1138 = vmatpush1.bf16.xpose.msra.mxu0 0
        %1139 = vmatprep.subr.bf16.mxu0 0
        %1140 = vmatpush1.bf16.xpose.msra.mxu0 0
        %1141 = vmatprep.mubr.bf16.mxu0 0
        %1142 = vmatmul.mubr.bf16.gmra.mrb[0].mxu0 %v1104
        %v1143 = vpop.f32.mrb[0].mxu0
        %v1144 = vadd.f32 0.0, %v1143
        %v1145 = vpop.f32.mrb[0].mxu0
        %v1146 = vpop.f32.mrb[0].mxu0
        %v1147 = vpop.f32.mrb[0].mxu0
        %1148 = vdwg.mxu0
        %v1149 = vsel %vm455, %v1144, -inf
        %1150 = vmax.xlane.f32.xlu0 %v1149
        %v1151 = vpop.xlane.xlu0 %1150
        %v1152 = vsub.f32 %v1144, %v1151
        %v1153 = vmul.f32 %v1152, 1.442695
        %v1154 = vpow.pop %v1153
        %v1155 = vsel %vm455, %v1154, 0.0
        %1156 = vadd.xlane.f32.xlu0 %v1155
        %v1157 = vpop.xlane.xlu0 %1156
        %v1158 = vrcp.pop %v1157
        %v1159 = vmul.f32 %v1154, %v1158
        %v1160 = vpack.c.bf16 %v1159, %v1159
        %1161 = vrot.lane.b32.xlu0 %v407, 32
        %v1162 = vpop.permute.xlu0 %1161
        %v1164 = vsel %vm455, %v1160, 0
        %v1167 = vsel %vm471, %v1162, 0
        %1169 = vmatprep.subr.bf16.mxu0 0
        %1170 = vmatpush1.bf16.msra.mxu0 %v1167
        %1171 = vmatprep.subr.bf16.mxu0 0
        %1172 = vmatpush1.bf16.msra.mxu0 0
        %1173 = vmatprep.subr.bf16.mxu0 0
        %1174 = vmatpush1.bf16.msra.mxu0 0
        %1175 = vmatprep.subr.bf16.mxu0 0
        %1176 = vmatpush1.bf16.msra.mxu0 0
        %1177 = vmatprep.subr.bf16.mxu0 0
        %1178 = vmatpush1.bf16.msra.mxu0 0
        %1179 = vmatprep.subr.bf16.mxu0 0
        %1180 = vmatpush1.bf16.msra.mxu0 0
        %1181 = vmatprep.subr.bf16.mxu0 0
        %1182 = vmatpush1.bf16.msra.mxu0 0
        %1183 = vmatprep.subr.bf16.mxu0 0
        %1184 = vmatpush1.bf16.msra.mxu0 0
        %1185 = vmatprep.subr.bf16.mxu0 0
        %1186 = vmatpush1.bf16.msra.mxu0 0
        %1187 = vmatprep.subr.bf16.mxu0 0
        %1188 = vmatpush1.bf16.msra.mxu0 0
        %1189 = vmatprep.subr.bf16.mxu0 0
        %1190 = vmatpush1.bf16.msra.mxu0 0
        %1191 = vmatprep.subr.bf16.mxu0 0
        %1192 = vmatpush1.bf16.msra.mxu0 0
        %1193 = vmatprep.subr.bf16.mxu0 0
        %1194 = vmatpush1.bf16.msra.mxu0 0
        %1195 = vmatprep.subr.bf16.mxu0 0
        %1196 = vmatpush1.bf16.msra.mxu0 0
        %1197 = vmatprep.subr.bf16.mxu0 0
        %1198 = vmatpush1.bf16.msra.mxu0 0
        %1199 = vmatprep.subr.bf16.mxu0 0
        %1200 = vmatpush1.bf16.msra.mxu0 0
        %1201 = vmatprep.mubr.bf16.mxu0 0
        %1202 = vmatmul.mubr.bf16.gmra.mrb[0].mxu0 %v1164
        %v1203 = vpop.f32.mrb[0].mxu0
        %v1204 = vadd.f32 0.0, %v1203
        %v1205 = vpop.f32.mrb[0].mxu0
        %v1206 = vpop.f32.mrb[0].mxu0
        %v1207 = vpop.f32.mrb[0].mxu0
        %1208 = vdwg.mxu0
        %1210 = vrot.lane.b32.xlu0 %v1204, 96
        %v1211 = vpop.permute.xlu0 %1210
        %vm1213 = vcmask 917248
        %1214 = vst.msk [vmem:[#allocation2] sm:$0xff] %vm1213, %v1211
        %1215 = vrot.lane.b32.xlu0 %v405, 16
        %v1216 = vpop.permute.xlu0 %1215
        %1217 = vrot.lane.b32.xlu0 %v406, 16
        %v1218 = vpop.permute.xlu0 %1217
        %v1220 = vsel %vm408, %v1216, 0
        %v1223 = vsel %vm408, %v1218, 0
        %1225 = vmatprep.subr.bf16.mxu0 0
        %1226 = vmatpush1.bf16.xpose.msra.mxu0 %v1223
        %1227 = vmatprep.subr.bf16.mxu0 0
        %1228 = vmatpush1.bf16.xpose.msra.mxu0 0
        %1229 = vmatprep.subr.bf16.mxu0 0
        %1230 = vmatpush1.bf16.xpose.msra.mxu0 0
        %1231 = vmatprep.subr.bf16.mxu0 0
        %1232 = vmatpush1.bf16.xpose.msra.mxu0 0
        %1233 = vmatprep.subr.bf16.mxu0 0
        %1234 = vmatpush1.bf16.xpose.msra.mxu0 0
        %1235 = vmatprep.subr.bf16.mxu0 0
        %1236 = vmatpush1.bf16.xpose.msra.mxu0 0
        %1237 = vmatprep.subr.bf16.mxu0 0
        %1238 = vmatpush1.bf16.xpose.msra.mxu0 0
        %1239 = vmatprep.subr.bf16.mxu0 0
        %1240 = vmatpush1.bf16.xpose.msra.mxu0 0
        %1241 = vmatprep.subr.bf16.mxu0 0
        %1242 = vmatpush1.bf16.xpose.msra.mxu0 0
        %1243 = vmatprep.subr.bf16.mxu0 0
        %1244 = vmatpush1.bf16.xpose.msra.mxu0 0
        %1245 = vmatprep.subr.bf16.mxu0 0
        %1246 = vmatpush1.bf16.xpose.msra.mxu0 0
        %1247 = vmatprep.subr.bf16.mxu0 0
        %1248 = vmatpush1.bf16.xpose.msra.mxu0 0
        %1249 = vmatprep.subr.bf16.mxu0 0
        %1250 = vmatpush1.bf16.xpose.msra.mxu0 0
        %1251 = vmatprep.subr.bf16.mxu0 0
        %1252 = vmatpush1.bf16.xpose.msra.mxu0 0
        %1253 = vmatprep.subr.bf16.mxu0 0
        %1254 = vmatpush1.bf16.xpose.msra.mxu0 0
        %1255 = vmatprep.subr.bf16.mxu0 0
        %1256 = vmatpush1.bf16.xpose.msra.mxu0 0
        %1257 = vmatprep.mubr.bf16.mxu0 0
        %1258 = vmatmul.mubr.bf16.gmra.mrb[0].mxu0 %v1220
        %v1259 = vpop.f32.mrb[0].mxu0
        %v1260 = vadd.f32 0.0, %v1259
        %v1261 = vpop.f32.mrb[0].mxu0
        %v1262 = vpop.f32.mrb[0].mxu0
        %v1263 = vpop.f32.mrb[0].mxu0
        %1264 = vdwg.mxu0
        %v1265 = vsel %vm455, %v1260, -inf
        %1266 = vmax.xlane.f32.xlu0 %v1265
        %v1267 = vpop.xlane.xlu0 %1266
        %v1268 = vsub.f32 %v1260, %v1267
        %v1269 = vmul.f32 %v1268, 1.442695
        %v1270 = vpow.pop %v1269
        %v1271 = vsel %vm455, %v1270, 0.0
        %1272 = vadd.xlane.f32.xlu0 %v1271
        %v1273 = vpop.xlane.xlu0 %1272
        %v1274 = vrcp.pop %v1273
        %v1275 = vmul.f32 %v1270, %v1274
        %v1276 = vpack.c.bf16 %v1275, %v1275
        %1277 = vrot.lane.b32.xlu0 %v407, 16
        %v1278 = vpop.permute.xlu0 %1277
        %v1280 = vsel %vm455, %v1276, 0
        %v1283 = vsel %vm471, %v1278, 0
        %1285 = vmatprep.subr.bf16.mxu0 0
        %1286 = vmatpush1.bf16.msra.mxu0 %v1283
        %1287 = vmatprep.subr.bf16.mxu0 0
        %1288 = vmatpush1.bf16.msra.mxu0 0
        %1289 = vmatprep.subr.bf16.mxu0 0
        %1290 = vmatpush1.bf16.msra.mxu0 0
        %1291 = vmatprep.subr.bf16.mxu0 0
        %1292 = vmatpush1.bf16.msra.mxu0 0
        %1293 = vmatprep.subr.bf16.mxu0 0
        %1294 = vmatpush1.bf16.msra.mxu0 0
        %1295 = vmatprep.subr.bf16.mxu0 0
        %1296 = vmatpush1.bf16.msra.mxu0 0
        %1297 = vmatprep.subr.bf16.mxu0 0
        %1298 = vmatpush1.bf16.msra.mxu0 0
        %1299 = vmatprep.subr.bf16.mxu0 0
        %1300 = vmatpush1.bf16.msra.mxu0 0
        %1301 = vmatprep.subr.bf16.mxu0 0
        %1302 = vmatpush1.bf16.msra.mxu0 0
        %1303 = vmatprep.subr.bf16.mxu0 0
        %1304 = vmatpush1.bf16.msra.mxu0 0
        %1305 = vmatprep.subr.bf16.mxu0 0
        %1306 = vmatpush1.bf16.msra.mxu0 0
        %1307 = vmatprep.subr.bf16.mxu0 0
        %1308 = vmatpush1.bf16.msra.mxu0 0
        %1309 = vmatprep.subr.bf16.mxu0 0
        %1310 = vmatpush1.bf16.msra.mxu0 0
        %1311 = vmatprep.subr.bf16.mxu0 0
        %1312 = vmatpush1.bf16.msra.mxu0 0
        %1313 = vmatprep.subr.bf16.mxu0 0
        %1314 = vmatpush1.bf16.msra.mxu0 0
        %1315 = vmatprep.subr.bf16.mxu0 0
        %1316 = vmatpush1.bf16.msra.mxu0 0
        %1317 = vmatprep.mubr.bf16.mxu0 0
        %1318 = vmatmul.mubr.bf16.gmra.mrb[0].mxu0 %v1280
        %v1319 = vpop.f32.mrb[0].mxu0
        %v1320 = vadd.f32 0.0, %v1319
        %v1321 = vpop.f32.mrb[0].mxu0
        %v1322 = vpop.f32.mrb[0].mxu0
        %v1323 = vpop.f32.mrb[0].mxu0
        %1324 = vdwg.mxu0
        %1326 = vrot.lane.b32.xlu0 %v1320, 112
        %v1327 = vpop.permute.xlu0 %1326
        %vm1329 = vcmask 1048448
        %1330 = vst.msk [vmem:[#allocation2] sm:$0xff] %vm1329, %v1327
        %v1331 = vld [vmem:[#allocation2] sm:$0xff]
        %v1332 = vpack.c.bf16 %v1331, %v1331
        %v1333 = vld [vmem:[%s4] sm:$0xf]
        %v1334 = vld [vmem:[%s4 + $0x4] sm:$0xf]
        %v1335 = vld [vmem:[%s4 + $0x8] sm:$0xf]
        %v1336 = vld [vmem:[%s4 + $0xc] sm:$0xf]
        %v1337 = vld [vmem:[%s4 + $0x10] sm:$0xf]
        %v1338 = vld [vmem:[%s4 + $0x14] sm:$0xf]
        %v1339 = vld [vmem:[%s4 + $0x18] sm:$0xf]
        %v1340 = vld [vmem:[%s4 + $0x1c] sm:$0xf]
        %v1341 = vld [vmem:[%s4 + $0x20] sm:$0xf]
        %v1342 = vld [vmem:[%s4 + $0x24] sm:$0xf]
        %v1343 = vld [vmem:[%s4 + $0x28] sm:$0xf]
        %v1344 = vld [vmem:[%s4 + $0x2c] sm:$0xf]
        %v1345 = vld [vmem:[%s4 + $0x30] sm:$0xf]
        %v1346 = vld [vmem:[%s4 + $0x34] sm:$0xf]
        %v1347 = vld [vmem:[%s4 + $0x38] sm:$0xf]
        %v1348 = vld [vmem:[%s4 + $0x3c] sm:$0xf]
        %v1349 = vld [vmem:[%s5] sm:$0x1]
        %v1351 = vlaneseq
        %v1352 = vshrl.u32 %v1351, 7
        %v1353 = vsub.s32 0, %v1352
        %v1354 = vrot.slane %v1349, %v1353
        %v1372 = vunpack.c.l.b16 %v1333
        %v1373 = vunpack.c.l.b16 %v1334
        %v1374 = vunpack.c.l.b16 %v1335
        %v1375 = vunpack.c.l.b16 %v1336
        %v1376 = vunpack.c.l.b16 %v1337
        %v1377 = vunpack.c.l.b16 %v1338
        %v1378 = vunpack.c.l.b16 %v1339
        %v1379 = vunpack.c.l.b16 %v1340
        %v1380 = vunpack.c.l.b16 %v1341
        %v1381 = vunpack.c.l.b16 %v1342
        %v1382 = vunpack.c.l.b16 %v1343
        %v1383 = vunpack.c.l.b16 %v1344
        %v1384 = vunpack.c.l.b16 %v1345
        %v1385 = vunpack.c.l.b16 %v1346
        %v1386 = vunpack.c.l.b16 %v1347
        %v1387 = vunpack.c.l.b16 %v1348
        %v1388 = vpack.c.b16 %v1373, %v1372
        %v1389 = vpack.c.b16 %v1375, %v1374
        %v1390 = vpack.c.b16 %v1377, %v1376
        %v1391 = vpack.c.b16 %v1379, %v1378
        %v1392 = vpack.c.b16 %v1381, %v1380
        %v1393 = vpack.c.b16 %v1383, %v1382
        %v1394 = vpack.c.b16 %v1385, %v1384
        %v1395 = vpack.c.b16 %v1387, %v1386
        %1404 = vmatprep.subr.bf16.mxu0 0
        %1405 = vmatpush1.bf16.msra.mxu0 %v1388
        %1406 = vmatprep.subr.bf16.mxu0 0
        %1407 = vmatpush1.bf16.msra.mxu0 %v1389
        %1408 = vmatprep.subr.bf16.mxu0 0
        %1409 = vmatpush1.bf16.msra.mxu0 %v1390
        %1410 = vmatprep.subr.bf16.mxu0 0
        %1411 = vmatpush1.bf16.msra.mxu0 %v1391
        %1412 = vmatprep.subr.bf16.mxu0 0
        %1413 = vmatpush1.bf16.msra.mxu0 %v1392
        %1414 = vmatprep.subr.bf16.mxu0 0
        %1415 = vmatpush1.bf16.msra.mxu0 %v1393
        %1416 = vmatprep.subr.bf16.mxu0 0
        %1417 = vmatpush1.bf16.msra.mxu0 %v1394
        %1418 = vmatprep.subr.bf16.mxu0 0
        %1419 = vmatpush1.bf16.msra.mxu0 %v1395
        %1420 = vmatprep.subr.bf16.mxu0 0
        %1421 = vmatpush1.bf16.msra.mxu0 0
        %1422 = vmatprep.subr.bf16.mxu0 0
        %1423 = vmatpush1.bf16.msra.mxu0 0
        %1424 = vmatprep.subr.bf16.mxu0 0
        %1425 = vmatpush1.bf16.msra.mxu0 0
        %1426 = vmatprep.subr.bf16.mxu0 0
        %1427 = vmatpush1.bf16.msra.mxu0 0
        %1428 = vmatprep.subr.bf16.mxu0 0
        %1429 = vmatpush1.bf16.msra.mxu0 0
        %1430 = vmatprep.subr.bf16.mxu0 0
        %1431 = vmatpush1.bf16.msra.mxu0 0
        %1432 = vmatprep.subr.bf16.mxu0 0
        %1433 = vmatpush1.bf16.msra.mxu0 0
        %1434 = vmatprep.subr.bf16.mxu0 0
        %1435 = vmatpush1.bf16.msra.mxu0 0
        %1436 = vmatprep.mubr.bf16.mxu0 0
        %1437 = vmatmul.mubr.bf16.gmra.mrb[0].mxu0 %v1332
        %v1438 = vpop.f32.mrb[0].mxu0
        %v1439 = vadd.f32 %v1354, %v1438
        %v1440 = vpop.f32.mrb[0].mxu0
        %v1441 = vpop.f32.mrb[0].mxu0
        %v1442 = vpop.f32.mrb[0].mxu0
        %1443 = vdwg.mxu0
        %1444 = vst.msk [vmem:[%s242] sm:$0xff] %vm249, %v1439
        %s1445 = sand.u32 %s159, 1
        %s1446 = scalar_lea.sflag [#allocation4], %s1445
        %s1447 = sand.u32 %s159, 1
        %s1448 = smul.addr %s1447, 8
        %s1449 = scalar_lea.vmem [#allocation3], %s1448
        // Predicated region
        $region45: #{tpu_custom_call.1} parent=43 // pred_check
          %p1450 = pneg %p169
        $region46: #{tpu_custom_call.1} parent=43 // pred_check_branch
          %1452 = sbr.rel (%p1450) target = $region48
        $region47: #{tpu_custom_call.1} parent=43 // pred_region
          %s1454 = ssub.s32 128, 128
          %1455 = vsyncadd %s1446, %s1454
          %s1456 = smul.addr %s20, 128
          %s1457 = scalar_lea.hbm %s6, %s1456
          %s1459 = sshll.u32 %s1449, 4
          %s1460 = int_to_ptr.vmem [resolvable:$true] %s1459
          %1462 = dma.vmem_to_hbm [thread:$0]  %s1460, 128, %s1457, %s1446
        $region48: #{tpu_custom_call.1} parent=43 // pred_fallthru
          _
      $region44: #{tpu_custom_call.1} parent=5 // pred_fallthru
        _
      %p1463 = scmp.le.s32.totalorder 2, %s15
      // Predicated region
      $region49: #{tpu_custom_call.1} parent=5 // pred_check
        %p1464 = pneg %p1463
      $region50: #{tpu_custom_call.1} parent=5 // pred_check_branch
        %1466 = sbr.rel (%p1464) target = $region52
      $region51: #{tpu_custom_call.1} parent=5 // pred_region
        %s1467 = ssub.s32 %s15, 2
        // Predicated region
        $region53: #{tpu_custom_call.1} parent=51 // pred_check
          %p1468 = pneg %p175
        $region54: #{tpu_custom_call.1} parent=51 // pred_check_branch
          %1470 = sbr.rel (%p1468) target = $region56
        $region55: #{tpu_custom_call.1} parent=51 // pred_region
          %s1471 = sand.u32 %s160, 1
          %s1472 = scalar_lea.sflag [#allocation4], %s1471
          %s1473 = sand.u32 %s160, 1
          %s1474 = smul.addr %s1473, 8
          %s1475 = scalar_lea.vmem [#allocation3], %s1474
          %1476 = dma.done %s1472, 128
        $region56: #{tpu_custom_call.1} parent=51 // pred_fallthru
          _
      $region52: #{tpu_custom_call.1} parent=5 // pred_fallthru
        _
    $region6: #{tpu_custom_call.1} parent=1 // loop_footer
      %s19 = sadd.s32 1, %s15
    $region7: #{tpu_custom_call.1} parent=1 // loop_footer_branch
      %14 = sbr.rel target = $region3
    $region8: #{tpu_custom_call.1} parent=1 // loop_exit
      _
    %1477 = vsyncpa [#allocation4], 1
    %s1478 = scalar_lea.sflag [#allocation4], 1
    %1479 = vsyncpa %s1478, 1

// kernel: tpu_custom_call.1
$region0: #{tpu_custom_call.1}
  #allocation0 [shape = 'u32[]', space=smem, size = 0x4, offset = 0x4, fixed_abs, tag = 'smem constant byte address 0x4 - core index']
  #allocation1 [shape = 'u32[144,128]{1,0:T(1,128)}', space=vmem, size = 0x12000, scoped, tag = 'internal scratch']
  #allocation2 [shape = 'f32[8,128]{1,0:T(8,128)}', space=vmem, size = 0x1000, scoped, tag = 'scratch operand']
  %s0 = inlined_call_operand.vmem [shape: f32[2,8,32], index: 0, kind: input, shape index: {}]
  %s1 = inlined_call_operand.vmem [shape: f32[1,32], index: 1, kind: input, shape index: {}]
  %s2 = inlined_call_operand.vmem [shape: f32[1,32], index: 2, kind: input, shape index: {}]
  %s3 = inlined_call_operand.vmem [shape: bf16[32,384], index: 3, kind: input, shape index: {}]
  %s4 = inlined_call_operand.vmem [shape: bf16[128,32], index: 4, kind: input, shape index: {}]
  %s5 = inlined_call_operand.vmem [shape: f32[1,32], index: 5, kind: input, shape index: {}]
  %s6 = inlined_call_operand.hbm [shape: f32[2,8,32], index: 6, kind: output, shape index: {}]
  %s7 = sld [smem:[#allocation0]]
  $region57: #{tpu_custom_call.1} parent=0
    _
  %s9 = ssub.s32 1, %s7
  %s10 = scalar_select 0, %s9, %s7
  $region1: #{tpu_custom_call.1} parent=0
    #allocation3 [shape = 'u8[8192]{0}', space=vmem, size = 0x2000, scoped, tag = 'output window, operand 0']
    #allocation4 [shape = 's32[2]{0}', space=sflag, size = 0x8, scoped, tag = 'scoped memory for tpu_custom_call.1']
    %11 = vsyncpa [#allocation4], 0
    %s12 = scalar_lea.sflag [#allocation4], 1
    %13 = vsyncpa %s12, 0
    loop: start=0, step=1, limit=4
    $region2: #{tpu_custom_call.1} parent=1 // loop_pre_header
      _
    $region3: #{tpu_custom_call.1} parent=1 // loop_header
      %s15 = sphi 0, %s19
      %p16 = scmp.ge.s32.totalorder %s15, 4
      %s25 = sphi 0, %s27
      %s28 = sphi 0, %s25
      %s29 = sphi 0, %s28
      %s45 = sphi 0, %s29
      %s49 = sphi 0, %s49
      %s51 = sphi 0, %s49
      %s52 = sphi 0, %s51
      %s66 = sphi 0, %s52
      %s70 = sphi 0, %s70
      %s72 = sphi 0, %s70
      %s73 = sphi 0, %s72
      %s87 = sphi 0, %s73
      %s91 = sphi 0, %s91
      %s93 = sphi 0, %s91
      %s94 = sphi 0, %s93
      %s108 = sphi 0, %s94
      %s112 = sphi 0, %s112
      %s114 = sphi 0, %s112
      %s115 = sphi 0, %s114
      %s129 = sphi 0, %s115
      %s133 = sphi 0, %s133
      %s135 = sphi 0, %s133
      %s136 = sphi 0, %s135
      %s150 = sphi 0, %s136
      %s156 = sphi 0, %s158
      %s159 = sphi 0, %s156
      %s160 = sphi 0, %s159
      %s176 = sphi 0, %s160
    $region4: #{tpu_custom_call.1} parent=1 // loop_header_branch
      %18 = sbr.rel (%p16) target = $region8
    $region5: #{tpu_custom_call.1} parent=1 // loop_body
      %s20 = ssub.s32 %s15, 1
      %s21 = ssub.s32 %s15, 2
      %s22 = sadd.s32 %s15, 1
      %s23 = ssub.s32 %s15, %s22
      %p24 = scmp.eq.s32.totalorder %s23, 0
      %s26 = sadd.s32 %s25, 1
      %s27 = scalar_select %p24, %s25, %s26
      %p30 = pneg %p24
      %p31 = scmp.eq.s32.totalorder %s15, 1
      %p32 = por %p30, %p31
      %p33 = scmp.ne.s32.totalorder %s25, %s28
      %p34 = scmp.eq.s32.totalorder %s15, 0
      %p35 = por %p33, %p34
      %p36 = scmp.ne.s32.totalorder %s25, %s28
      %p37 = scmp.eq.s32.totalorder %s20, 1
      %p38 = por %p36, %p37
      %p39 = scmp.ne.s32.totalorder %s28, %s29
      %p40 = scmp.eq.s32.totalorder %s20, 0
      %p41 = por %p39, %p40
      %p42 = scmp.ne.s32.totalorder %s28, %s29
      %p43 = scmp.eq.s32.totalorder %s21, 1
      %p44 = por %p42, %p43
      %p46 = scmp.ne.s32.totalorder %s29, %s45
      %p47 = scmp.eq.s32.totalorder %s21, 0
      %p48 = por %p46, %p47
      %s50 = sadd.s32 %s49, 1
      %p53 = scmp.eq.s32.totalorder %s15, 1
      %p54 = scmp.ne.s32.totalorder %s49, %s51
      %p55 = scmp.eq.s32.totalorder %s15, 0
      %p56 = por %p54, %p55
      %p57 = scmp.ne.s32.totalorder %s49, %s51
      %p58 = scmp.eq.s32.totalorder %s20, 1
      %p59 = por %p57, %p58
      %p60 = scmp.ne.s32.totalorder %s51, %s52
      %p61 = scmp.eq.s32.totalorder %s20, 0
      %p62 = por %p60, %p61
      %p63 = scmp.ne.s32.totalorder %s51, %s52
      %p64 = scmp.eq.s32.totalorder %s21, 1
      %p65 = por %p63, %p64
      %p67 = scmp.ne.s32.totalorder %s52, %s66
      %p68 = scmp.eq.s32.totalorder %s21, 0
      %p69 = por %p67, %p68
      %s71 = sadd.s32 %s70, 1
      %p74 = scmp.eq.s32.totalorder %s15, 1
      %p75 = scmp.ne.s32.totalorder %s70, %s72
      %p76 = scmp.eq.s32.totalorder %s15, 0
      %p77 = por %p75, %p76
      %p78 = scmp.ne.s32.totalorder %s70, %s72
      %p79 = scmp.eq.s32.totalorder %s20, 1
      %p80 = por %p78, %p79
      %p81 = scmp.ne.s32.totalorder %s72, %s73
      %p82 = scmp.eq.s32.totalorder %s20, 0
      %p83 = por %p81, %p82
      %p84 = scmp.ne.s32.totalorder %s72, %s73
      %p85 = scmp.eq.s32.totalorder %s21, 1
      %p86 = por %p84, %p85
      %p88 = scmp.ne.s32.totalorder %s73, %s87
      %p89 = scmp.eq.s32.totalorder %s21, 0
      %p90 = por %p88, %p89
      %s92 = sadd.s32 %s91, 1
      %p95 = scmp.eq.s32.totalorder %s15, 1
      %p96 = scmp.ne.s32.totalorder %s91, %s93
      %p97 = scmp.eq.s32.totalorder %s15, 0
      %p98 = por %p96, %p97
      %p99 = scmp.ne.s32.totalorder %s91, %s93
      %p100 = scmp.eq.s32.totalorder %s20, 1
      %p101 = por %p99, %p100
      %p102 = scmp.ne.s32.totalorder %s93, %s94
      %p103 = scmp.eq.s32.totalorder %s20, 0
      %p104 = por %p102, %p103
      %p105 = scmp.ne.s32.totalorder %s93, %s94
      %p106 = scmp.eq.s32.totalorder %s21, 1
      %p107 = por %p105, %p106
      %p109 = scmp.ne.s32.totalorder %s94, %s108
      %p110 = scmp.eq.s32.totalorder %s21, 0
      %p111 = por %p109, %p110
      %s113 = sadd.s32 %s112, 1
      %p116 = scmp.eq.s32.totalorder %s15, 1
      %p117 = scmp.ne.s32.totalorder %s112, %s114
      %p118 = scmp.eq.s32.totalorder %s15, 0
      %p119 = por %p117, %p118
      %p120 = scmp.ne.s32.totalorder %s112, %s114
      %p121 = scmp.eq.s32.totalorder %s20, 1
      %p122 = por %p120, %p121
      %p123 = scmp.ne.s32.totalorder %s114, %s115
      %p124 = scmp.eq.s32.totalorder %s20, 0
      %p125 = por %p123, %p124
      %p126 = scmp.ne.s32.totalorder %s114, %s115
      %p127 = scmp.eq.s32.totalorder %s21, 1
      %p128 = por %p126, %p127
      %p130 = scmp.ne.s32.totalorder %s115, %s129
      %p131 = scmp.eq.s32.totalorder %s21, 0
      %p132 = por %p130, %p131
      %s134 = sadd.s32 %s133, 1
      %p137 = scmp.eq.s32.totalorder %s15, 1
      %p138 = scmp.ne.s32.totalorder %s133, %s135
      %p139 = scmp.eq.s32.totalorder %s15, 0
      %p140 = por %p138, %p139
      %p141 = scmp.ne.s32.totalorder %s133, %s135
      %p142 = scmp.eq.s32.totalorder %s20, 1
      %p143 = por %p141, %p142
      %p144 = scmp.ne.s32.totalorder %s135, %s136
      %p145 = scmp.eq.s32.totalorder %s20, 0
      %p146 = por %p144, %p145
      %p147 = scmp.ne.s32.totalorder %s135, %s136
      %p148 = scmp.eq.s32.totalorder %s21, 1
      %p149 = por %p147, %p148
      %p151 = scmp.ne.s32.totalorder %s136, %s150
      %p152 = scmp.eq.s32.totalorder %s21, 0
      %p153 = por %p151, %p152
      %s154 = ssub.s32 %s15, %s22
      %p155 = scmp.eq.s32.totalorder %s154, 0
      %s157 = sadd.s32 %s156, 1
      %s158 = scalar_select %p155, %s156, %s157
      %p161 = pneg %p155
      %p162 = scmp.eq.s32.totalorder %s15, 1
      %p163 = por %p161, %p162
      %p164 = scmp.ne.s32.totalorder %s156, %s159
      %p165 = scmp.eq.s32.totalorder %s15, 0
      %p166 = por %p164, %p165
      %p167 = scmp.ne.s32.totalorder %s156, %s159
      %p168 = scmp.eq.s32.totalorder %s20, 1
      %p169 = por %p167, %p168
      %p170 = scmp.ne.s32.totalorder %s159, %s160
      %p171 = scmp.eq.s32.totalorder %s20, 0
      %p172 = por %p170, %p171
      %p173 = scmp.ne.s32.totalorder %s159, %s160
      %p174 = scmp.eq.s32.totalorder %s21, 1
      %p175 = por %p173, %p174
      %p177 = scmp.ne.s32.totalorder %s160, %s176
      %p178 = scmp.eq.s32.totalorder %s21, 0
      %p179 = por %p177, %p178
      %p180 = scmp.le.s32.totalorder 1, %s15
      %p181 = scmp.lt.s32.totalorder %s15, 3
      %p182 = pnand %p180, %p181
      %p183 = pneg %p182
      // Predicated region
      $region9: #{tpu_custom_call.1} parent=5 // pred_check
        _
      $region10: #{tpu_custom_call.1} parent=5 // pred_check_branch
        %185 = sbr.rel (%p182) target = $region12
      $region11: #{tpu_custom_call.1} parent=5 // pred_region
        %s186 = ssub.s32 %s15, 1
        // Predicated region
        $region13: #{tpu_custom_call.1} parent=11 // pred_check
          %p187 = pneg %p62
        $region14: #{tpu_custom_call.1} parent=11 // pred_check_branch
          %189 = sbr.rel (%p187) target = $region16
        $region15: #{tpu_custom_call.1} parent=11 // pred_region
          _
        $region16: #{tpu_custom_call.1} parent=11 // pred_fallthru
          _
        // Predicated region
        $region17: #{tpu_custom_call.1} parent=11 // pred_check
          %p190 = pneg %p83
        $region18: #{tpu_custom_call.1} parent=11 // pred_check_branch
          %192 = sbr.rel (%p190) target = $region20
        $region19: #{tpu_custom_call.1} parent=11 // pred_region
          _
        $region20: #{tpu_custom_call.1} parent=11 // pred_fallthru
          _
        // Predicated region
        $region21: #{tpu_custom_call.1} parent=11 // pred_check
          %p193 = pneg %p104
        $region22: #{tpu_custom_call.1} parent=11 // pred_check_branch
          %195 = sbr.rel (%p193) target = $region24
        $region23: #{tpu_custom_call.1} parent=11 // pred_region
          _
        $region24: #{tpu_custom_call.1} parent=11 // pred_fallthru
          _
        // Predicated region
        $region25: #{tpu_custom_call.1} parent=11 // pred_check
          %p196 = pneg %p125
        $region26: #{tpu_custom_call.1} parent=11 // pred_check_branch
          %198 = sbr.rel (%p196) target = $region28
        $region27: #{tpu_custom_call.1} parent=11 // pred_region
          _
        $region28: #{tpu_custom_call.1} parent=11 // pred_fallthru
          _
        // Predicated region
        $region29: #{tpu_custom_call.1} parent=11 // pred_check
          %p199 = pneg %p146
        $region30: #{tpu_custom_call.1} parent=11 // pred_check_branch
          %201 = sbr.rel (%p199) target = $region32
        $region31: #{tpu_custom_call.1} parent=11 // pred_region
          _
        $region32: #{tpu_custom_call.1} parent=11 // pred_fallthru
          _
      $region12: #{tpu_custom_call.1} parent=5 // pred_fallthru
        _
      %p202 = scmp.lt.s32.totalorder %s15, 2
      // Predicated region
      $region33: #{tpu_custom_call.1} parent=5 // pred_check
        %p203 = pneg %p202
      $region34: #{tpu_custom_call.1} parent=5 // pred_check_branch
        %205 = sbr.rel (%p203) target = $region36
      $region35: #{tpu_custom_call.1} parent=5 // pred_region
        // Predicated region
        $region37: #{tpu_custom_call.1} parent=35 // pred_check
          %p206 = pneg %p35
        $region38: #{tpu_custom_call.1} parent=35 // pred_check_branch
          %208 = sbr.rel (%p206) target = $region40
        $region39: #{tpu_custom_call.1} parent=35 // pred_region
          %p209 = scmp.lt.s32.totalorder %s15, 1
          %s210 = scalar_select %p209, %s15, 1
          %s211 = smul.addr %s210, 8
          %s212 = scalar_lea.vmem %s0, %s211
        $region40: #{tpu_custom_call.1} parent=35 // pred_fallthru
          _
      $region36: #{tpu_custom_call.1} parent=5 // pred_fallthru
        _
      %p213 = scmp.le.s32.totalorder 1, %s15
      %p214 = scmp.lt.s32.totalorder %s15, 3
      %p215 = pnand %p213, %p214
      %p216 = pneg %p215
      // Predicated region
      $region41: #{tpu_custom_call.1} parent=5 // pred_check
        _
      $region42: #{tpu_custom_call.1} parent=5 // pred_check_branch
        %218 = sbr.rel (%p215) target = $region44
      $region43: #{tpu_custom_call.1} parent=5 // pred_region
        %s219 = ssub.s32 %s15, 1
        %p220 = scmp.lt.s32.totalorder %s20, 1
        %s221 = scalar_select %p220, %s20, 1
        %s222 = smul.addr %s221, 8
        %s223 = scalar_lea.vmem %s0, %s222
        %p224 = pneg %p41
        %p225 = pneg %p38
        %p226 = pneg %p62
        %p227 = pneg %p59
        %p228 = pneg %p83
        %p229 = pneg %p80
        %p230 = pneg %p104
        %p231 = pneg %p101
        %p232 = pneg %p125
        %p233 = pneg %p122
        %p234 = pneg %p146
        %p235 = pneg %p143
        %p236 = pneg %p172
        %p237 = pneg %p169
        %s238 = sand.u32 %s159, 1
        %s239 = scalar_lea.sflag [#allocation4], %s238
        %s240 = sand.u32 %s159, 1
        %s241 = smul.addr %s240, 8
        %s242 = scalar_lea.vmem [#allocation3], %s241
        %p243 = scmp.lt.s32.totalorder %s20, 1
        %s244 = scalar_select %p243, %s20, 1
        %s245 = smul.addr %s244, 8
        %s246 = scalar_lea.vmem %s0, %s245
        %v248 = vld [vmem:[%s246] sm:$0xff]
        %vm249 = vcmask 261120
        %v250 = vsel %vm249, %v248, 0.0
        %251 = vadd.xlane.f32.xlu0 %v250
        %v252 = vpop.xlane.xlu0 %251
        %v253 = vrcp.pop 32.0
        %v254 = vmul.f32 %v252, %v253
        %v255 = vsub.f32 %v248, %v254
        %v256 = vmul.f32 %v255, %v255
        %v257 = vsel %vm249, %v256, 0.0
        %258 = vadd.xlane.f32.xlu0 %v257
        %v259 = vpop.xlane.xlu0 %258
        %v260 = vmul.f32 %v259, %v253
        %v261 = vadd.f32 %v260, 1e-05
        %v262 = vrsqrt.pop %v261
        %v263 = vmul.f32 %v255, %v262
        %v264 = vld [vmem:[%s1] sm:$0x1]
        %v266 = vlaneseq
        %v267 = vshrl.u32 %v266, 7
        %v268 = vsub.s32 0, %v267
        %v269 = vrot.slane %v264, %v268
        %v271 = vmul.f32 %v263, %v269
        %v272 = vld [vmem:[%s2] sm:$0x1]
        %v274 = vlaneseq
        %v275 = vshrl.u32 %v274, 7
        %v276 = vsub.s32 0, %v275
        %v277 = vrot.slane %v272, %v276
        %v279 = vadd.f32 %v271, %v277
        %v280 = vpack.c.bf16 %v279, %v279
        %v281 = vld [vmem:[%s3] sm:$0xff]
        %v282 = vld [vmem:[%s3 + $0x8] sm:$0xf]
        %v283 = vld [vmem:[%s3 + $0xc] sm:$0xff]
        %v284 = vld [vmem:[%s3 + $0x14] sm:$0xf]
        %v285 = vld [vmem:[%s3 + $0x18] sm:$0xff]
        %v286 = vld [vmem:[%s3 + $0x20] sm:$0xf]
        %v287 = vld [vmem:[%s3 + $0x24] sm:$0xff]
        %v288 = vld [vmem:[%s3 + $0x2c] sm:$0xf]
        %v297 = vunpack.c.l.b16 %v281
        %v298 = vunpack.c.h.b16 %v281
        %v299 = vunpack.c.l.b16 %v282
        %v300 = vunpack.c.l.b16 %v283
        %v301 = vunpack.c.h.b16 %v283
        %v302 = vunpack.c.l.b16 %v284
        %v303 = vunpack.c.l.b16 %v285
        %v304 = vunpack.c.h.b16 %v285
        %v305 = vunpack.c.l.b16 %v286
        %v306 = vunpack.c.l.b16 %v287
        %v307 = vunpack.c.h.b16 %v287
        %v308 = vunpack.c.l.b16 %v288
        %v309 = vpack.c.b16 %v300, %v297
        %v310 = vpack.c.b16 %v301, %v298
        %v311 = vpack.c.b16 %v302, %v299
        %v312 = vpack.c.b16 %v306, %v303
        %v313 = vpack.c.b16 %v307, %v304
        %v314 = vpack.c.b16 %v308, %v305
        %v322 = vsel %vm249, %v280, 0
        %324 = vmatprep.subr.bf16.mxu0 %v310
        %325 = vmatpush1.bf16.msra.mxu0 %v309
        %326 = vmatprep.subr.bf16.mxu0 %v313
        %327 = vmatpush1.bf16.msra.mxu0 %v312
        %328 = vmatprep.subr.bf16.mxu0 0
        %329 = vmatpush1.bf16.msra.mxu0 0
        %330 = vmatprep.subr.bf16.mxu0 0
        %331 = vmatpush1.bf16.msra.mxu0 0
        %332 = vmatprep.subr.bf16.mxu0 0
        %333 = vmatpush1.bf16.msra.mxu0 0
        %334 = vmatprep.subr.bf16.mxu0 0
        %335 = vmatpush1.bf16.msra.mxu0 0
        %336 = vmatprep.subr.bf16.mxu0 0
        %337 = vmatpush1.bf16.msra.mxu0 0
        %338 = vmatprep.subr.bf16.mxu0 0
        %339 = vmatpush1.bf16.msra.mxu0 0
        %340 = vmatprep.subr.bf16.mxu0 0
        %341 = vmatpush1.bf16.msra.mxu0 0
        %342 = vmatprep.subr.bf16.mxu0 0
        %343 = vmatpush1.bf16.msra.mxu0 0
        %344 = vmatprep.subr.bf16.mxu0 0
        %345 = vmatpush1.bf16.msra.mxu0 0
        %346 = vmatprep.subr.bf16.mxu0 0
        %347 = vmatpush1.bf16.msra.mxu0 0
        %348 = vmatprep.subr.bf16.mxu0 0
        %349 = vmatpush1.bf16.msra.mxu0 0
        %350 = vmatprep.subr.bf16.mxu0 0
        %351 = vmatpush1.bf16.msra.mxu0 0
        %352 = vmatprep.subr.bf16.mxu0 0
        %353 = vmatpush1.bf16.msra.mxu0 0
        %354 = vmatprep.subr.bf16.mxu0 0
        %355 = vmatpush1.bf16.msra.mxu0 0
        %356 = vmatprep.mubr.bf16.mxu0 0
        %357 = vmatmul.mubr.bf16.gmra.mrb[0].mxu0 %v322
        %v358 = vpop.f32.mrb[0].mxu0
        %v359 = vadd.f32 0.0, %v358
        %v360 = vpop.f32.mrb[0].mxu0
        %v361 = vadd.f32 0.0, %v360
        %v362 = vpop.f32.mrb[0].mxu0
        %v363 = vpop.f32.mrb[0].mxu0
        %364 = vdwg.mxu0
        %365 = vmatprep.subr.bf16.mxu0 0
        %366 = vmatpush1.bf16.msra.mxu0 %v311
        %367 = vmatprep.subr.bf16.mxu0 0
        %368 = vmatpush1.bf16.msra.mxu0 %v314
        %369 = vmatprep.subr.bf16.mxu0 0
        %370 = vmatpush1.bf16.msra.mxu0 0
        %371 = vmatprep.subr.bf16.mxu0 0
        %372 = vmatpush1.bf16.msra.mxu0 0
        %373 = vmatprep.subr.bf16.mxu0 0
        %374 = vmatpush1.bf16.msra.mxu0 0
        %375 = vmatprep.subr.bf16.mxu0 0
        %376 = vmatpush1.bf16.msra.mxu0 0
        %377 = vmatprep.subr.bf16.mxu0 0
        %378 = vmatpush1.bf16.msra.mxu0 0
        %379 = vmatprep.subr.bf16.mxu0 0
        %380 = vmatpush1.bf16.msra.mxu0 0
        %381 = vmatprep.subr.bf16.mxu0 0
        %382 = vmatpush1.bf16.msra.mxu0 0
        %383 = vmatprep.subr.bf16.mxu0 0
        %384 = vmatpush1.bf16.msra.mxu0 0
        %385 = vmatprep.subr.bf16.mxu0 0
        %386 = vmatpush1.bf16.msra.mxu0 0
        %387 = vmatprep.subr.bf16.mxu0 0
        %388 = vmatpush1.bf16.msra.mxu0 0
        %389 = vmatprep.subr.bf16.mxu0 0
        %390 = vmatpush1.bf16.msra.mxu0 0
        %391 = vmatprep.subr.bf16.mxu0 0
        %392 = vmatpush1.bf16.msra.mxu0 0
        %393 = vmatprep.subr.bf16.mxu0 0
        %394 = vmatpush1.bf16.msra.mxu0 0
        %395 = vmatprep.subr.bf16.mxu0 0
        %396 = vmatpush1.bf16.msra.mxu0 0
        %397 = vmatprep.mubr.bf16.mxu0 0
        %398 = vmatmul.mubr.bf16.gmra.mrb[0].mxu0 %v322
        %v399 = vpop.f32.mrb[0].mxu0
        %v400 = vadd.f32 0.0, %v399
        %v401 = vpop.f32.mrb[0].mxu0
        %v402 = vpop.f32.mrb[0].mxu0
        %v403 = vpop.f32.mrb[0].mxu0
        %404 = vdwg.mxu0
        %v405 = vpack.c.bf16 %v359, %v359
        %v406 = vpack.c.bf16 %v361, %v361
        %v407 = vpack.c.bf16 %v400, %v400
        %vm408 = vcmask 130048
        %v410 = vsel %vm408, %v405, 0
        %v413 = vsel %vm408, %v406, 0
        %415 = vmatprep.subr.bf16.mxu0 0
        %416 = vmatpush1.bf16.xpose.msra.mxu0 %v413
        %417 = vmatprep.subr.bf16.mxu0 0
        %418 = vmatpush1.bf16.xpose.msra.mxu0 0
        %419 = vmatprep.subr.bf16.mxu0 0
        %420 = vmatpush1.bf16.xpose.msra.mxu0 0
        %421 = vmatprep.subr.bf16.mxu0 0
        %422 = vmatpush1.bf16.xpose.msra.mxu0 0
        %423 = vmatprep.subr.bf16.mxu0 0
        %424 = vmatpush1.bf16.xpose.msra.mxu0 0
        %425 = vmatprep.subr.bf16.mxu0 0
        %426 = vmatpush1.bf16.xpose.msra.mxu0 0
        %427 = vmatprep.subr.bf16.mxu0 0
        %428 = vmatpush1.bf16.xpose.msra.mxu0 0
        %429 = vmatprep.subr.bf16.mxu0 0
        %430 = vmatpush1.bf16.xpose.msra.mxu0 0
        %431 = vmatprep.subr.bf16.mxu0 0
        %432 = vmatpush1.bf16.xpose.msra.mxu0 0
        %433 = vmatprep.subr.bf16.mxu0 0
        %434 = vmatpush1.bf16.xpose.msra.mxu0 0
        %435 = vmatprep.subr.bf16.mxu0 0
        %436 = vmatpush1.bf16.xpose.msra.mxu0 0
        %437 = vmatprep.subr.bf16.mxu0 0
        %438 = vmatpush1.bf16.xpose.msra.mxu0 0
        %439 = vmatprep.subr.bf16.mxu0 0
        %440 = vmatpush1.bf16.xpose.msra.mxu0 0
        %441 = vmatprep.subr.bf16.mxu0 0
        %442 = vmatpush1.bf16.xpose.msra.mxu0 0
        %443 = vmatprep.subr.bf16.mxu0 0
        %444 = vmatpush1.bf16.xpose.msra.mxu0 0
        %445 = vmatprep.subr.bf16.mxu0 0
        %446 = vmatpush1.bf16.xpose.msra.mxu0 0
        %447 = vmatprep.mubr.bf16.mxu0 0
        %448 = vmatmul.mubr.bf16.gmra.mrb[0].mxu0 %v410
        %v449 = vpop.f32.mrb[0].mxu0
        %v450 = vadd.f32 0.0, %v449
        %v451 = vpop.f32.mrb[0].mxu0
        %v452 = vpop.f32.mrb[0].mxu0
        %v453 = vpop.f32.mrb[0].mxu0
        %454 = vdwg.mxu0
        %vm455 = vcmask 64512
        %v456 = vsel %vm455, %v450, -inf
        %457 = vmax.xlane.f32.xlu0 %v456
        %v458 = vpop.xlane.xlu0 %457
        %v459 = vsub.f32 %v450, %v458
        %v460 = vmul.f32 %v459, 1.442695
        %v461 = vpow.pop %v460
        %v462 = vsel %vm455, %v461, 0.0
        %463 = vadd.xlane.f32.xlu0 %v462
        %v464 = vpop.xlane.xlu0 %463
        %v465 = vrcp.pop %v464
        %v466 = vmul.f32 %v461, %v465
        %v467 = vpack.c.bf16 %v466, %v466
        %v469 = vsel %vm455, %v467, 0
        %vm471 = vcmask 1043456
        %v473 = vsel %vm471, %v407, 0
        %475 = vmatprep.subr.bf16.mxu0 0
        %476 = vmatpush1.bf16.msra.mxu0 %v473
        %477 = vmatprep.subr.bf16.mxu0 0
        %478 = vmatpush1.bf16.msra.mxu0 0
        %479 = vmatprep.subr.bf16.mxu0 0
        %480 = vmatpush1.bf16.msra.mxu0 0
        %481 = vmatprep.subr.bf16.mxu0 0
        %482 = vmatpush1.bf16.msra.mxu0 0
        %483 = vmatprep.subr.bf16.mxu0 0
        %484 = vmatpush1.bf16.msra.mxu0 0
        %485 = vmatprep.subr.bf16.mxu0 0
        %486 = vmatpush1.bf16.msra.mxu0 0
        %487 = vmatprep.subr.bf16.mxu0 0
        %488 = vmatpush1.bf16.msra.mxu0 0
        %489 = vmatprep.subr.bf16.mxu0 0
        %490 = vmatpush1.bf16.msra.mxu0 0
        %491 = vmatprep.subr.bf16.mxu0 0
        %492 = vmatpush1.bf16.msra.mxu0 0
        %493 = vmatprep.subr.bf16.mxu0 0
        %494 = vmatpush1.bf16.msra.mxu0 0
        %495 = vmatprep.subr.bf16.mxu0 0
        %496 = vmatpush1.bf16.msra.mxu0 0
        %497 = vmatprep.subr.bf16.mxu0 0
        %498 = vmatpush1.bf16.msra.mxu0 0
        %499 = vmatprep.subr.bf16.mxu0 0
        %500 = vmatpush1.bf16.msra.mxu0 0
        %501 = vmatprep.subr.bf16.mxu0 0
        %502 = vmatpush1.bf16.msra.mxu0 0
        %503 = vmatprep.subr.bf16.mxu0 0
        %504 = vmatpush1.bf16.msra.mxu0 0
        %505 = vmatprep.subr.bf16.mxu0 0
        %506 = vmatpush1.bf16.msra.mxu0 0
        %507 = vmatprep.mubr.bf16.mxu0 0
        %508 = vmatmul.mubr.bf16.gmra.mrb[0].mxu0 %v469
        %v509 = vpop.f32.mrb[0].mxu0
        %v510 = vadd.f32 0.0, %v509
        %v511 = vpop.f32.mrb[0].mxu0
        %v512 = vpop.f32.mrb[0].mxu0
        %v513 = vpop.f32.mrb[0].mxu0
        %514 = vdwg.mxu0
        %515 = vst.msk [vmem:[#allocation2] sm:$0xff] %vm408, %v510
        %517 = vrot.lane.b32.xlu0 %v405, 112
        %v518 = vpop.permute.xlu0 %517
        %520 = vrot.lane.b32.xlu0 %v406, 112
        %v521 = vpop.permute.xlu0 %520
        %v523 = vsel %vm408, %v518, 0
        %v526 = vsel %vm408, %v521, 0
        %528 = vmatprep.subr.bf16.mxu0 0
        %529 = vmatpush1.bf16.xpose.msra.mxu0 %v526
        %530 = vmatprep.subr.bf16.mxu0 0
        %531 = vmatpush1.bf16.xpose.msra.mxu0 0
        %532 = vmatprep.subr.bf16.mxu0 0
        %533 = vmatpush1.bf16.xpose.msra.mxu0 0
        %534 = vmatprep.subr.bf16.mxu0 0
        %535 = vmatpush1.bf16.xpose.msra.mxu0 0
        %536 = vmatprep.subr.bf16.mxu0 0
        %537 = vmatpush1.bf16.xpose.msra.mxu0 0
        %538 = vmatprep.subr.bf16.mxu0 0
        %539 = vmatpush1.bf16.xpose.msra.mxu0 0
        %540 = vmatprep.subr.bf16.mxu0 0
        %541 = vmatpush1.bf16.xpose.msra.mxu0 0
        %542 = vmatprep.subr.bf16.mxu0 0
        %543 = vmatpush1.bf16.xpose.msra.mxu0 0
        %544 = vmatprep.subr.bf16.mxu0 0
        %545 = vmatpush1.bf16.xpose.msra.mxu0 0
        %546 = vmatprep.subr.bf16.mxu0 0
        %547 = vmatpush1.bf16.xpose.msra.mxu0 0
        %548 = vmatprep.subr.bf16.mxu0 0
        %549 = vmatpush1.bf16.xpose.msra.mxu0 0
        %550 = vmatprep.subr.bf16.mxu0 0
        %551 = vmatpush1.bf16.xpose.msra.mxu0 0
        %552 = vmatprep.subr.bf16.mxu0 0
        %553 = vmatpush1.bf16.xpose.msra.mxu0 0
        %554 = vmatprep.subr.bf16.mxu0 0
        %555 = vmatpush1.bf16.xpose.msra.mxu0 0
        %556 = vmatprep.subr.bf16.mxu0 0
        %557 = vmatpush1.bf16.xpose.msra.mxu0 0
        %558 = vmatprep.subr.bf16.mxu0 0
        %559 = vmatpush1.bf16.xpose.msra.mxu0 0
        %560 = vmatprep.mubr.bf16.mxu0 0
        %561 = vmatmul.mubr.bf16.gmra.mrb[0].mxu0 %v523
        %v562 = vpop.f32.mrb[0].mxu0
        %v563 = vadd.f32 0.0, %v562
        %v564 = vpop.f32.mrb[0].mxu0
        %v565 = vpop.f32.mrb[0].mxu0
        %v566 = vpop.f32.mrb[0].mxu0
        %567 = vdwg.mxu0
        %v568 = vsel %vm455, %v563, -inf
        %569 = vmax.xlane.f32.xlu0 %v568
        %v570 = vpop.xlane.xlu0 %569
        %v571 = vsub.f32 %v563, %v570
        %v572 = vmul.f32 %v571, 1.442695
        %v573 = vpow.pop %v572
        %v574 = vsel %vm455, %v573, 0.0
        %575 = vadd.xlane.f32.xlu0 %v574
        %v576 = vpop.xlane.xlu0 %575
        %v577 = vrcp.pop %v576
        %v578 = vmul.f32 %v573, %v577
        %v579 = vpack.c.bf16 %v578, %v578
        %581 = vrot.lane.b32.xlu0 %v407, 112
        %v582 = vpop.permute.xlu0 %581
        %v584 = vsel %vm455, %v579, 0
        %v587 = vsel %vm471, %v582, 0
        %589 = vmatprep.subr.bf16.mxu0 0
        %590 = vmatpush1.bf16.msra.mxu0 %v587
        %591 = vmatprep.subr.bf16.mxu0 0
        %592 = vmatpush1.bf16.msra.mxu0 0
        %593 = vmatprep.subr.bf16.mxu0 0
        %594 = vmatpush1.bf16.msra.mxu0 0
        %595 = vmatprep.subr.bf16.mxu0 0
        %596 = vmatpush1.bf16.msra.mxu0 0
        %597 = vmatprep.subr.bf16.mxu0 0
        %598 = vmatpush1.bf16.msra.mxu0 0
        %599 = vmatprep.subr.bf16.mxu0 0
        %600 = vmatpush1.bf16.msra.mxu0 0
        %601 = vmatprep.subr.bf16.mxu0 0
        %602 = vmatpush1.bf16.msra.mxu0 0
        %603 = vmatprep.subr.bf16.mxu0 0
        %604 = vmatpush1.bf16.msra.mxu0 0
        %605 = vmatprep.subr.bf16.mxu0 0
        %606 = vmatpush1.bf16.msra.mxu0 0
        %607 = vmatprep.subr.bf16.mxu0 0
        %608 = vmatpush1.bf16.msra.mxu0 0
        %609 = vmatprep.subr.bf16.mxu0 0
        %610 = vmatpush1.bf16.msra.mxu0 0
        %611 = vmatprep.subr.bf16.mxu0 0
        %612 = vmatpush1.bf16.msra.mxu0 0
        %613 = vmatprep.subr.bf16.mxu0 0
        %614 = vmatpush1.bf16.msra.mxu0 0
        %615 = vmatprep.subr.bf16.mxu0 0
        %616 = vmatpush1.bf16.msra.mxu0 0
        %617 = vmatprep.subr.bf16.mxu0 0
        %618 = vmatpush1.bf16.msra.mxu0 0
        %619 = vmatprep.subr.bf16.mxu0 0
        %620 = vmatpush1.bf16.msra.mxu0 0
        %621 = vmatprep.mubr.bf16.mxu0 0
        %622 = vmatmul.mubr.bf16.gmra.mrb[0].mxu0 %v584
        %v623 = vpop.f32.mrb[0].mxu0
        %v624 = vadd.f32 0.0, %v623
        %v625 = vpop.f32.mrb[0].mxu0
        %v626 = vpop.f32.mrb[0].mxu0
        %v627 = vpop.f32.mrb[0].mxu0
        %628 = vdwg.mxu0
        %630 = vrot.lane.b32.xlu0 %v624, 16
        %v631 = vpop.permute.xlu0 %630
        %vm633 = vcmask 261248
        %634 = vst.msk [vmem:[#allocation2] sm:$0xff] %vm633, %v631
        %635 = vrot.lane.b32.xlu0 %v405, 96
        %v636 = vpop.permute.xlu0 %635
        %637 = vrot.lane.b32.xlu0 %v406, 96
        %v638 = vpop.permute.xlu0 %637
        %v640 = vsel %vm408, %v636, 0
        %v643 = vsel %vm408, %v638, 0
        %645 = vmatprep.subr.bf16.mxu0 0
        %646 = vmatpush1.bf16.xpose.msra.mxu0 %v643
        %647 = vmatprep.subr.bf16.mxu0 0
        %648 = vmatpush1.bf16.xpose.msra.mxu0 0
        %649 = vmatprep.subr.bf16.mxu0 0
        %650 = vmatpush1.bf16.xpose.msra.mxu0 0
        %651 = vmatprep.subr.bf16.mxu0 0
        %652 = vmatpush1.bf16.xpose.msra.mxu0 0
        %653 = vmatprep.subr.bf16.mxu0 0
        %654 = vmatpush1.bf16.xpose.msra.mxu0 0
        %655 = vmatprep.subr.bf16.mxu0 0
        %656 = vmatpush1.bf16.xpose.msra.mxu0 0
        %657 = vmatprep.subr.bf16.mxu0 0
        %658 = vmatpush1.bf16.xpose.msra.mxu0 0
        %659 = vmatprep.subr.bf16.mxu0 0
        %660 = vmatpush1.bf16.xpose.msra.mxu0 0
        %661 = vmatprep.subr.bf16.mxu0 0
        %662 = vmatpush1.bf16.xpose.msra.mxu0 0
        %663 = vmatprep.subr.bf16.mxu0 0
        %664 = vmatpush1.bf16.xpose.msra.mxu0 0
        %665 = vmatprep.subr.bf16.mxu0 0
        %666 = vmatpush1.bf16.xpose.msra.mxu0 0
        %667 = vmatprep.subr.bf16.mxu0 0
        %668 = vmatpush1.bf16.xpose.msra.mxu0 0
        %669 = vmatprep.subr.bf16.mxu0 0
        %670 = vmatpush1.bf16.xpose.msra.mxu0 0
        %671 = vmatprep.subr.bf16.mxu0 0
        %672 = vmatpush1.bf16.xpose.msra.mxu0 0
        %673 = vmatprep.subr.bf16.mxu0 0
        %674 = vmatpush1.bf16.xpose.msra.mxu0 0
        %675 = vmatprep.subr.bf16.mxu0 0
        %676 = vmatpush1.bf16.xpose.msra.mxu0 0
        %677 = vmatprep.mubr.bf16.mxu0 0
        %678 = vmatmul.mubr.bf16.gmra.mrb[0].mxu0 %v640
        %v679 = vpop.f32.mrb[0].mxu0
        %v680 = vadd.f32 0.0, %v679
        %v681 = vpop.f32.mrb[0].mxu0
        %v682 = vpop.f32.mrb[0].mxu0
        %v683 = vpop.f32.mrb[0].mxu0
        %684 = vdwg.mxu0
        %v685 = vsel %vm455, %v680, -inf
        %686 = vmax.xlane.f32.xlu0 %v685
        %v687 = vpop.xlane.xlu0 %686
        %v688 = vsub.f32 %v680, %v687
        %v689 = vmul.f32 %v688, 1.442695
        %v690 = vpow.pop %v689
        %v691 = vsel %vm455, %v690, 0.0
        %692 = vadd.xlane.f32.xlu0 %v691
        %v693 = vpop.xlane.xlu0 %692
        %v694 = vrcp.pop %v693
        %v695 = vmul.f32 %v690, %v694
        %v696 = vpack.c.bf16 %v695, %v695
        %697 = vrot.lane.b32.xlu0 %v407, 96
        %v698 = vpop.permute.xlu0 %697
        %v700 = vsel %vm455, %v696, 0
        %v703 = vsel %vm471, %v698, 0
        %705 = vmatprep.subr.bf16.mxu0 0
        %706 = vmatpush1.bf16.msra.mxu0 %v703
        %707 = vmatprep.subr.bf16.mxu0 0
        %708 = vmatpush1.bf16.msra.mxu0 0
        %709 = vmatprep.subr.bf16.mxu0 0
        %710 = vmatpush1.bf16.msra.mxu0 0
        %711 = vmatprep.subr.bf16.mxu0 0
        %712 = vmatpush1.bf16.msra.mxu0 0
        %713 = vmatprep.subr.bf16.mxu0 0
        %714 = vmatpush1.bf16.msra.mxu0 0
        %715 = vmatprep.subr.bf16.mxu0 0
        %716 = vmatpush1.bf16.msra.mxu0 0
        %717 = vmatprep.subr.bf16.mxu0 0
        %718 = vmatpush1.bf16.msra.mxu0 0
        %719 = vmatprep.subr.bf16.mxu0 0
        %720 = vmatpush1.bf16.msra.mxu0 0
        %721 = vmatprep.subr.bf16.mxu0 0
        %722 = vmatpush1.bf16.msra.mxu0 0
        %723 = vmatprep.subr.bf16.mxu0 0
        %724 = vmatpush1.bf16.msra.mxu0 0
        %725 = vmatprep.subr.bf16.mxu0 0
        %726 = vmatpush1.bf16.msra.mxu0 0
        %727 = vmatprep.subr.bf16.mxu0 0
        %728 = vmatpush1.bf16.msra.mxu0 0
        %729 = vmatprep.subr.bf16.mxu0 0
        %730 = vmatpush1.bf16.msra.mxu0 0
        %731 = vmatprep.subr.bf16.mxu0 0
        %732 = vmatpush1.bf16.msra.mxu0 0
        %733 = vmatprep.subr.bf16.mxu0 0
        %734 = vmatpush1.bf16.msra.mxu0 0
        %735 = vmatprep.subr.bf16.mxu0 0
        %736 = vmatpush1.bf16.msra.mxu0 0
        %737 = vmatprep.mubr.bf16.mxu0 0
        %738 = vmatmul.mubr.bf16.gmra.mrb[0].mxu0 %v700
        %v739 = vpop.f32.mrb[0].mxu0
        %v740 = vadd.f32 0.0, %v739
        %v741 = vpop.f32.mrb[0].mxu0
        %v742 = vpop.f32.mrb[0].mxu0
        %v743 = vpop.f32.mrb[0].mxu0
        %744 = vdwg.mxu0
        %746 = vrot.lane.b32.xlu0 %v740, 32
        %v747 = vpop.permute.xlu0 %746
        %vm749 = vcmask 392448
        %750 = vst.msk [vmem:[#allocation2] sm:$0xff] %vm749, %v747
        %751 = vrot.lane.b32.xlu0 %v405, 80
        %v752 = vpop.permute.xlu0 %751
        %753 = vrot.lane.b32.xlu0 %v406, 80
        %v754 = vpop.permute.xlu0 %753
        %v756 = vsel %vm408, %v752, 0
        %v759 = vsel %vm408, %v754, 0
        %761 = vmatprep.subr.bf16.mxu0 0
        %762 = vmatpush1.bf16.xpose.msra.mxu0 %v759
        %763 = vmatprep.subr.bf16.mxu0 0
        %764 = vmatpush1.bf16.xpose.msra.mxu0 0
        %765 = vmatprep.subr.bf16.mxu0 0
        %766 = vmatpush1.bf16.xpose.msra.mxu0 0
        %767 = vmatprep.subr.bf16.mxu0 0
        %768 = vmatpush1.bf16.xpose.msra.mxu0 0
        %769 = vmatprep.subr.bf16.mxu0 0
        %770 = vmatpush1.bf16.xpose.msra.mxu0 0
        %771 = vmatprep.subr.bf16.mxu0 0
        %772 = vmatpush1.bf16.xpose.msra.mxu0 0
        %773 = vmatprep.subr.bf16.mxu0 0
        %774 = vmatpush1.bf16.xpose.msra.mxu0 0
        %775 = vmatprep.subr.bf16.mxu0 0
        %776 = vmatpush1.bf16.xpose.msra.mxu0 0
        %777 = vmatprep.subr.bf16.mxu0 0
        %778 = vmatpush1.bf16.xpose.msra.mxu0 0
        %779 = vmatprep.subr.bf16.mxu0 0
        %780 = vmatpush1.bf16.xpose.msra.mxu0 0
        %781 = vmatprep.subr.bf16.mxu0 0
        %782 = vmatpush1.bf16.xpose.msra.mxu0 0
        %783 = vmatprep.subr.bf16.mxu0 0
        %784 = vmatpush1.bf16.xpose.msra.mxu0 0
        %785 = vmatprep.subr.bf16.mxu0 0
        %786 = vmatpush1.bf16.xpose.msra.mxu0 0
        %787 = vmatprep.subr.bf16.mxu0 0
        %788 = vmatpush1.bf16.xpose.msra.mxu0 0
        %789 = vmatprep.subr.bf16.mxu0 0
        %790 = vmatpush1.bf16.xpose.msra.mxu0 0
        %791 = vmatprep.subr.bf16.mxu0 0
        %792 = vmatpush1.bf16.xpose.msra.mxu0 0
        %793 = vmatprep.mubr.bf16.mxu0 0
        %794 = vmatmul.mubr.bf16.gmra.mrb[0].mxu0 %v756
        %v795 = vpop.f32.mrb[0].mxu0
        %v796 = vadd.f32 0.0, %v795
        %v797 = vpop.f32.mrb[0].mxu0
        %v798 = vpop.f32.mrb[0].mxu0
        %v799 = vpop.f32.mrb[0].mxu0
        %800 = vdwg.mxu0
        %v801 = vsel %vm455, %v796, -inf
        %802 = vmax.xlane.f32.xlu0 %v801
        %v803 = vpop.xlane.xlu0 %802
        %v804 = vsub.f32 %v796, %v803
        %v805 = vmul.f32 %v804, 1.442695
        %v806 = vpow.pop %v805
        %v807 = vsel %vm455, %v806, 0.0
        %808 = vadd.xlane.f32.xlu0 %v807
        %v809 = vpop.xlane.xlu0 %808
        %v810 = vrcp.pop %v809
        %v811 = vmul.f32 %v806, %v810
        %v812 = vpack.c.bf16 %v811, %v811
        %813 = vrot.lane.b32.xlu0 %v407, 80
        %v814 = vpop.permute.xlu0 %813
        %v816 = vsel %vm455, %v812, 0
        %v819 = vsel %vm471, %v814, 0
        %821 = vmatprep.subr.bf16.mxu0 0
        %822 = vmatpush1.bf16.msra.mxu0 %v819
        %823 = vmatprep.subr.bf16.mxu0 0
        %824 = vmatpush1.bf16.msra.mxu0 0
        %825 = vmatprep.subr.bf16.mxu0 0
        %826 = vmatpush1.bf16.msra.mxu0 0
        %827 = vmatprep.subr.bf16.mxu0 0
        %828 = vmatpush1.bf16.msra.mxu0 0
        %829 = vmatprep.subr.bf16.mxu0 0
        %830 = vmatpush1.bf16.msra.mxu0 0
        %831 = vmatprep.subr.bf16.mxu0 0
        %832 = vmatpush1.bf16.msra.mxu0 0
        %833 = vmatprep.subr.bf16.mxu0 0
        %834 = vmatpush1.bf16.msra.mxu0 0
        %835 = vmatprep.subr.bf16.mxu0 0
        %836 = vmatpush1.bf16.msra.mxu0 0
        %837 = vmatprep.subr.bf16.mxu0 0
        %838 = vmatpush1.bf16.msra.mxu0 0
        %839 = vmatprep.subr.bf16.mxu0 0
        %840 = vmatpush1.bf16.msra.mxu0 0
        %841 = vmatprep.subr.bf16.mxu0 0
        %842 = vmatpush1.bf16.msra.mxu0 0
        %843 = vmatprep.subr.bf16.mxu0 0
        %844 = vmatpush1.bf16.msra.mxu0 0
        %845 = vmatprep.subr.bf16.mxu0 0
        %846 = vmatpush1.bf16.msra.mxu0 0
        %847 = vmatprep.subr.bf16.mxu0 0
        %848 = vmatpush1.bf16.msra.mxu0 0
        %849 = vmatprep.subr.bf16.mxu0 0
        %850 = vmatpush1.bf16.msra.mxu0 0
        %851 = vmatprep.subr.bf16.mxu0 0
        %852 = vmatpush1.bf16.msra.mxu0 0
        %853 = vmatprep.mubr.bf16.mxu0 0
        %854 = vmatmul.mubr.bf16.gmra.mrb[0].mxu0 %v816
        %v855 = vpop.f32.mrb[0].mxu0
        %v856 = vadd.f32 0.0, %v855
        %v857 = vpop.f32.mrb[0].mxu0
        %v858 = vpop.f32.mrb[0].mxu0
        %v859 = vpop.f32.mrb[0].mxu0
        %860 = vdwg.mxu0
        %862 = vrot.lane.b32.xlu0 %v856, 48
        %v863 = vpop.permute.xlu0 %862
        %vm865 = vcmask 523648
        %866 = vst.msk [vmem:[#allocation2] sm:$0xff] %vm865, %v863
        %867 = vrot.lane.b32.xlu0 %v405, 64
        %v868 = vpop.permute.xlu0 %867
        %869 = vrot.lane.b32.xlu0 %v406, 64
        %v870 = vpop.permute.xlu0 %869
        %v872 = vsel %vm408, %v868, 0
        %v875 = vsel %vm408, %v870, 0
        %877 = vmatprep.subr.bf16.mxu0 0
        %878 = vmatpush1.bf16.xpose.msra.mxu0 %v875
        %879 = vmatprep.subr.bf16.mxu0 0
        %880 = vmatpush1.bf16.xpose.msra.mxu0 0
        %881 = vmatprep.subr.bf16.mxu0 0
        %882 = vmatpush1.bf16.xpose.msra.mxu0 0
        %883 = vmatprep.subr.bf16.mxu0 0
        %884 = vmatpush1.bf16.xpose.msra.mxu0 0
        %885 = vmatprep.subr.bf16.mxu0 0
        %886 = vmatpush1.bf16.xpose.msra.mxu0 0
        %887 = vmatprep.subr.bf16.mxu0 0
        %888 = vmatpush1.bf16.xpose.msra.mxu0 0
        %889 = vmatprep.subr.bf16.mxu0 0
        %890 = vmatpush1.bf16.xpose.msra.mxu0 0
        %891 = vmatprep.subr.bf16.mxu0 0
        %892 = vmatpush1.bf16.xpose.msra.mxu0 0
        %893 = vmatprep.subr.bf16.mxu0 0
        %894 = vmatpush1.bf16.xpose.msra.mxu0 0
        %895 = vmatprep.subr.bf16.mxu0 0
        %896 = vmatpush1.bf16.xpose.msra.mxu0 0
        %897 = vmatprep.subr.bf16.mxu0 0
        %898 = vmatpush1.bf16.xpose.msra.mxu0 0
        %899 = vmatprep.subr.bf16.mxu0 0
        %900 = vmatpush1.bf16.xpose.msra.mxu0 0
        %901 = vmatprep.subr.bf16.mxu0 0
        %902 = vmatpush1.bf16.xpose.msra.mxu0 0
        %903 = vmatprep.subr.bf16.mxu0 0
        %904 = vmatpush1.bf16.xpose.msra.mxu0 0
        %905 = vmatprep.subr.bf16.mxu0 0
        %906 = vmatpush1.bf16.xpose.msra.mxu0 0
        %907 = vmatprep.subr.bf16.mxu0 0
        %908 = vmatpush1.bf16.xpose.msra.mxu0 0
        %909 = vmatprep.mubr.bf16.mxu0 0
        %910 = vmatmul.mubr.bf16.gmra.mrb[0].mxu0 %v872
        %v911 = vpop.f32.mrb[0].mxu0
        %v912 = vadd.f32 0.0, %v911
        %v913 = vpop.f32.mrb[0].mxu0
        %v914 = vpop.f32.mrb[0].mxu0
        %v915 = vpop.f32.mrb[0].mxu0
        %916 = vdwg.mxu0
        %v917 = vsel %vm455, %v912, -inf
        %918 = vmax.xlane.f32.xlu0 %v917
        %v919 = vpop.xlane.xlu0 %918
        %v920 = vsub.f32 %v912, %v919
        %v921 = vmul.f32 %v920, 1.442695
        %v922 = vpow.pop %v921
        %v923 = vsel %vm455, %v922, 0.0
        %924 = vadd.xlane.f32.xlu0 %v923
        %v925 = vpop.xlane.xlu0 %924
        %v926 = vrcp.pop %v925
        %v927 = vmul.f32 %v922, %v926
        %v928 = vpack.c.bf16 %v927, %v927
        %929 = vrot.lane.b32.xlu0 %v407, 64
        %v930 = vpop.permute.xlu0 %929
        %v932 = vsel %vm455, %v928, 0
        %v935 = vsel %vm471, %v930, 0
        %937 = vmatprep.subr.bf16.mxu0 0
        %938 = vmatpush1.bf16.msra.mxu0 %v935
        %939 = vmatprep.subr.bf16.mxu0 0
        %940 = vmatpush1.bf16.msra.mxu0 0
        %941 = vmatprep.subr.bf16.mxu0 0
        %942 = vmatpush1.bf16.msra.mxu0 0
        %943 = vmatprep.subr.bf16.mxu0 0
        %944 = vmatpush1.bf16.msra.mxu0 0
        %945 = vmatprep.subr.bf16.mxu0 0
        %946 = vmatpush1.bf16.msra.mxu0 0
        %947 = vmatprep.subr.bf16.mxu0 0
        %948 = vmatpush1.bf16.msra.mxu0 0
        %949 = vmatprep.subr.bf16.mxu0 0
        %950 = vmatpush1.bf16.msra.mxu0 0
        %951 = vmatprep.subr.bf16.mxu0 0
        %952 = vmatpush1.bf16.msra.mxu0 0
        %953 = vmatprep.subr.bf16.mxu0 0
        %954 = vmatpush1.bf16.msra.mxu0 0
        %955 = vmatprep.subr.bf16.mxu0 0
        %956 = vmatpush1.bf16.msra.mxu0 0
        %957 = vmatprep.subr.bf16.mxu0 0
        %958 = vmatpush1.bf16.msra.mxu0 0
        %959 = vmatprep.subr.bf16.mxu0 0
        %960 = vmatpush1.bf16.msra.mxu0 0
        %961 = vmatprep.subr.bf16.mxu0 0
        %962 = vmatpush1.bf16.msra.mxu0 0
        %963 = vmatprep.subr.bf16.mxu0 0
        %964 = vmatpush1.bf16.msra.mxu0 0
        %965 = vmatprep.subr.bf16.mxu0 0
        %966 = vmatpush1.bf16.msra.mxu0 0
        %967 = vmatprep.subr.bf16.mxu0 0
        %968 = vmatpush1.bf16.msra.mxu0 0
        %969 = vmatprep.mubr.bf16.mxu0 0
        %970 = vmatmul.mubr.bf16.gmra.mrb[0].mxu0 %v932
        %v971 = vpop.f32.mrb[0].mxu0
        %v972 = vadd.f32 0.0, %v971
        %v973 = vpop.f32.mrb[0].mxu0
        %v974 = vpop.f32.mrb[0].mxu0
        %v975 = vpop.f32.mrb[0].mxu0
        %976 = vdwg.mxu0
        %978 = vrot.lane.b32.xlu0 %v972, 64
        %v979 = vpop.permute.xlu0 %978
        %vm981 = vcmask 654848
        %982 = vst.msk [vmem:[#allocation2] sm:$0xff] %vm981, %v979
        %983 = vrot.lane.b32.xlu0 %v405, 48
        %v984 = vpop.permute.xlu0 %983
        %985 = vrot.lane.b32.xlu0 %v406, 48
        %v986 = vpop.permute.xlu0 %985
        %v988 = vsel %vm408, %v984, 0
        %v991 = vsel %vm408, %v986, 0
        %993 = vmatprep.subr.bf16.mxu0 0
        %994 = vmatpush1.bf16.xpose.msra.mxu0 %v991
        %995 = vmatprep.subr.bf16.mxu0 0
        %996 = vmatpush1.bf16.xpose.msra.mxu0 0
        %997 = vmatprep.subr.bf16.mxu0 0
        %998 = vmatpush1.bf16.xpose.msra.mxu0 0
        %999 = vmatprep.subr.bf16.mxu0 0
        %1000 = vmatpush1.bf16.xpose.msra.mxu0 0
        %1001 = vmatprep.subr.bf16.mxu0 0
        %1002 = vmatpush1.bf16.xpose.msra.mxu0 0
        %1003 = vmatprep.subr.bf16.mxu0 0
        %1004 = vmatpush1.bf16.xpose.msra.mxu0 0
        %1005 = vmatprep.subr.bf16.mxu0 0
        %1006 = vmatpush1.bf16.xpose.msra.mxu0 0
        %1007 = vmatprep.subr.bf16.mxu0 0
        %1008 = vmatpush1.bf16.xpose.msra.mxu0 0
        %1009 = vmatprep.subr.bf16.mxu0 0
        %1010 = vmatpush1.bf16.xpose.msra.mxu0 0
        %1011 = vmatprep.subr.bf16.mxu0 0
        %1012 = vmatpush1.bf16.xpose.msra.mxu0 0
        %1013 = vmatprep.subr.bf16.mxu0 0
        %1014 = vmatpush1.bf16.xpose.msra.mxu0 0
        %1015 = vmatprep.subr.bf16.mxu0 0
        %1016 = vmatpush1.bf16.xpose.msra.mxu0 0
        %1017 = vmatprep.subr.bf16.mxu0 0
        %1018 = vmatpush1.bf16.xpose.msra.mxu0 0
        %1019 = vmatprep.subr.bf16.mxu0 0
        %1020 = vmatpush1.bf16.xpose.msra.mxu0 0
        %1021 = vmatprep.subr.bf16.mxu0 0
        %1022 = vmatpush1.bf16.xpose.msra.mxu0 0
        %1023 = vmatprep.subr.bf16.mxu0 0
        %1024 = vmatpush1.bf16.xpose.msra.mxu0 0
        %1025 = vmatprep.mubr.bf16.mxu0 0
        %1026 = vmatmul.mubr.bf16.gmra.mrb[0].mxu0 %v988
        %v1027 = vpop.f32.mrb[0].mxu0
        %v1028 = vadd.f32 0.0, %v1027
        %v1029 = vpop.f32.mrb[0].mxu0
        %v1030 = vpop.f32.mrb[0].mxu0
        %v1031 = vpop.f32.mrb[0].mxu0
        %1032 = vdwg.mxu0
        %v1033 = vsel %vm455, %v1028, -inf
        %1034 = vmax.xlane.f32.xlu0 %v1033
        %v1035 = vpop.xlane.xlu0 %1034
        %v1036 = vsub.f32 %v1028, %v1035
        %v1037 = vmul.f32 %v1036, 1.442695
        %v1038 = vpow.pop %v1037
        %v1039 = vsel %vm455, %v1038, 0.0
        %1040 = vadd.xlane.f32.xlu0 %v1039
        %v1041 = vpop.xlane.xlu0 %1040
        %v1042 = vrcp.pop %v1041
        %v1043 = vmul.f32 %v1038, %v1042
        %v1044 = vpack.c.bf16 %v1043, %v1043
        %1045 = vrot.lane.b32.xlu0 %v407, 48
        %v1046 = vpop.permute.xlu0 %1045
        %v1048 = vsel %vm455, %v1044, 0
        %v1051 = vsel %vm471, %v1046, 0
        %1053 = vmatprep.subr.bf16.mxu0 0
        %1054 = vmatpush1.bf16.msra.mxu0 %v1051
        %1055 = vmatprep.subr.bf16.mxu0 0
        %1056 = vmatpush1.bf16.msra.mxu0 0
        %1057 = vmatprep.subr.bf16.mxu0 0
        %1058 = vmatpush1.bf16.msra.mxu0 0
        %1059 = vmatprep.subr.bf16.mxu0 0
        %1060 = vmatpush1.bf16.msra.mxu0 0
        %1061 = vmatprep.subr.bf16.mxu0 0
        %1062 = vmatpush1.bf16.msra.mxu0 0
        %1063 = vmatprep.subr.bf16.mxu0 0
        %1064 = vmatpush1.bf16.msra.mxu0 0
        %1065 = vmatprep.subr.bf16.mxu0 0
        %1066 = vmatpush1.bf16.msra.mxu0 0
        %1067 = vmatprep.subr.bf16.mxu0 0
        %1068 = vmatpush1.bf16.msra.mxu0 0
        %1069 = vmatprep.subr.bf16.mxu0 0
        %1070 = vmatpush1.bf16.msra.mxu0 0
        %1071 = vmatprep.subr.bf16.mxu0 0
        %1072 = vmatpush1.bf16.msra.mxu0 0
        %1073 = vmatprep.subr.bf16.mxu0 0
        %1074 = vmatpush1.bf16.msra.mxu0 0
        %1075 = vmatprep.subr.bf16.mxu0 0
        %1076 = vmatpush1.bf16.msra.mxu0 0
        %1077 = vmatprep.subr.bf16.mxu0 0
        %1078 = vmatpush1.bf16.msra.mxu0 0
        %1079 = vmatprep.subr.bf16.mxu0 0
        %1080 = vmatpush1.bf16.msra.mxu0 0
        %1081 = vmatprep.subr.bf16.mxu0 0
        %1082 = vmatpush1.bf16.msra.mxu0 0
        %1083 = vmatprep.subr.bf16.mxu0 0
        %1084 = vmatpush1.bf16.msra.mxu0 0
        %1085 = vmatprep.mubr.bf16.mxu0 0
        %1086 = vmatmul.mubr.bf16.gmra.mrb[0].mxu0 %v1048
        %v1087 = vpop.f32.mrb[0].mxu0
        %v1088 = vadd.f32 0.0, %v1087
        %v1089 = vpop.f32.mrb[0].mxu0
        %v1090 = vpop.f32.mrb[0].mxu0
        %v1091 = vpop.f32.mrb[0].mxu0
        %1092 = vdwg.mxu0
        %1094 = vrot.lane.b32.xlu0 %v1088, 80
        %v1095 = vpop.permute.xlu0 %1094
        %vm1097 = vcmask 786048
        %1098 = vst.msk [vmem:[#allocation2] sm:$0xff] %vm1097, %v1095
        %1099 = vrot.lane.b32.xlu0 %v405, 32
        %v1100 = vpop.permute.xlu0 %1099
        %1101 = vrot.lane.b32.xlu0 %v406, 32
        %v1102 = vpop.permute.xlu0 %1101
        %v1104 = vsel %vm408, %v1100, 0
        %v1107 = vsel %vm408, %v1102, 0
        %1109 = vmatprep.subr.bf16.mxu0 0
        %1110 = vmatpush1.bf16.xpose.msra.mxu0 %v1107
        %1111 = vmatprep.subr.bf16.mxu0 0
        %1112 = vmatpush1.bf16.xpose.msra.mxu0 0
        %1113 = vmatprep.subr.bf16.mxu0 0
        %1114 = vmatpush1.bf16.xpose.msra.mxu0 0
        %1115 = vmatprep.subr.bf16.mxu0 0
        %1116 = vmatpush1.bf16.xpose.msra.mxu0 0
        %1117 = vmatprep.subr.bf16.mxu0 0
        %1118 = vmatpush1.bf16.xpose.msra.mxu0 0
        %1119 = vmatprep.subr.bf16.mxu0 0
        %1120 = vmatpush1.bf16.xpose.msra.mxu0 0
        %1121 = vmatprep.subr.bf16.mxu0 0
        %1122 = vmatpush1.bf16.xpose.msra.mxu0 0
        %1123 = vmatprep.subr.bf16.mxu0 0
        %1124 = vmatpush1.bf16.xpose.msra.mxu0 0
        %1125 = vmatprep.subr.bf16.mxu0 0
        %1126 = vmatpush1.bf16.xpose.msra.mxu0 0
        %1127 = vmatprep.subr.bf16.mxu0 0
        %1128 = vmatpush1.bf16.xpose.msra.mxu0 0
        %1129 = vmatprep.subr.bf16.mxu0 0
        %1130 = vmatpush1.bf16.xpose.msra.mxu0 0
        %1131 = vmatprep.subr.bf16.mxu0 0
        %1132 = vmatpush1.bf16.xpose.msra.mxu0 0
        %1133 = vmatprep.subr.bf16.mxu0 0
        %1134 = vmatpush1.bf16.xpose.msra.mxu0 0
        %1135 = vmatprep.subr.bf16.mxu0 0
        %1136 = vmatpush1.bf16.xpose.msra.mxu0 0
        %1137 = vmatprep.subr.bf16.mxu0 0
        %1138 = vmatpush1.bf16.xpose.msra.mxu0 0
        %1139 = vmatprep.subr.bf16.mxu0 0
        %1140 = vmatpush1.bf16.xpose.msra.mxu0 0
        %1141 = vmatprep.mubr.bf16.mxu0 0
        %1142 = vmatmul.mubr.bf16.gmra.mrb[0].mxu0 %v1104
        %v1143 = vpop.f32.mrb[0].mxu0
        %v1144 = vadd.f32 0.0, %v1143
        %v1145 = vpop.f32.mrb[0].mxu0
        %v1146 = vpop.f32.mrb[0].mxu0
        %v1147 = vpop.f32.mrb[0].mxu0
        %1148 = vdwg.mxu0
        %v1149 = vsel %vm455, %v1144, -inf
        %1150 = vmax.xlane.f32.xlu0 %v1149
        %v1151 = vpop.xlane.xlu0 %1150
        %v1152 = vsub.f32 %v1144, %v1151
        %v1153 = vmul.f32 %v1152, 1.442695
        %v1154 = vpow.pop %v1153
        %v1155 = vsel %vm455, %v1154, 0.0
        %1156 = vadd.xlane.f32.xlu0 %v1155
        %v1157 = vpop.xlane.xlu0 %1156
        %v1158 = vrcp.pop %v1157
        %v1159 = vmul.f32 %v1154, %v1158
        %v1160 = vpack.c.bf16 %v1159, %v1159
        %1161 = vrot.lane.b32.xlu0 %v407, 32
        %v1162 = vpop.permute.xlu0 %1161
        %v1164 = vsel %vm455, %v1160, 0
        %v1167 = vsel %vm471, %v1162, 0
        %1169 = vmatprep.subr.bf16.mxu0 0
        %1170 = vmatpush1.bf16.msra.mxu0 %v1167
        %1171 = vmatprep.subr.bf16.mxu0 0
        %1172 = vmatpush1.bf16.msra.mxu0 0
        %1173 = vmatprep.subr.bf16.mxu0 0
        %1174 = vmatpush1.bf16.msra.mxu0 0
        %1175 = vmatprep.subr.bf16.mxu0 0
        %1176 = vmatpush1.bf16.msra.mxu0 0
        %1177 = vmatprep.subr.bf16.mxu0 0
        %1178 = vmatpush1.bf16.msra.mxu0 0
        %1179 = vmatprep.subr.bf16.mxu0 0
        %1180 = vmatpush1.bf16.msra.mxu0 0
        %1181 = vmatprep.subr.bf16.mxu0 0
        %1182 = vmatpush1.bf16.msra.mxu0 0
        %1183 = vmatprep.subr.bf16.mxu0 0
        %1184 = vmatpush1.bf16.msra.mxu0 0
        %1185 = vmatprep.subr.bf16.mxu0 0
        %1186 = vmatpush1.bf16.msra.mxu0 0
        %1187 = vmatprep.subr.bf16.mxu0 0
        %1188 = vmatpush1.bf16.msra.mxu0 0
        %1189 = vmatprep.subr.bf16.mxu0 0
        %1190 = vmatpush1.bf16.msra.mxu0 0
        %1191 = vmatprep.subr.bf16.mxu0 0
        %1192 = vmatpush1.bf16.msra.mxu0 0
        %1193 = vmatprep.subr.bf16.mxu0 0
        %1194 = vmatpush1.bf16.msra.mxu0 0
        %1195 = vmatprep.subr.bf16.mxu0 0
        %1196 = vmatpush1.bf16.msra.mxu0 0
        %1197 = vmatprep.subr.bf16.mxu0 0
        %1198 = vmatpush1.bf16.msra.mxu0 0
        %1199 = vmatprep.subr.bf16.mxu0 0
        %1200 = vmatpush1.bf16.msra.mxu0 0
        %1201 = vmatprep.mubr.bf16.mxu0 0
        %1202 = vmatmul.mubr.bf16.gmra.mrb[0].mxu0 %v1164
        %v1203 = vpop.f32.mrb[0].mxu0
        %v1204 = vadd.f32 0.0, %v1203
        %v1205 = vpop.f32.mrb[0].mxu0
        %v1206 = vpop.f32.mrb[0].mxu0
        %v1207 = vpop.f32.mrb[0].mxu0
        %1208 = vdwg.mxu0
        %1210 = vrot.lane.b32.xlu0 %v1204, 96
        %v1211 = vpop.permute.xlu0 %1210
        %vm1213 = vcmask 917248
        %1214 = vst.msk [vmem:[#allocation2] sm:$0xff] %vm1213, %v1211
        %1215 = vrot.lane.b32.xlu0 %v405, 16
        %v1216 = vpop.permute.xlu0 %1215
        %1217 = vrot.lane.b32.xlu0 %v406, 16
        %v1218 = vpop.permute.xlu0 %1217
        %v1220 = vsel %vm408, %v1216, 0
        %v1223 = vsel %vm408, %v1218, 0
        %1225 = vmatprep.subr.bf16.mxu0 0
        %1226 = vmatpush1.bf16.xpose.msra.mxu0 %v1223
        %1227 = vmatprep.subr.bf16.mxu0 0
        %1228 = vmatpush1.bf16.xpose.msra.mxu0 0
        %1229 = vmatprep.subr.bf16.mxu0 0
        %1230 = vmatpush1.bf16.xpose.msra.mxu0 0
        %1231 = vmatprep.subr.bf16.mxu0 0
        %1232 = vmatpush1.bf16.xpose.msra.mxu0 0
        %1233 = vmatprep.subr.bf16.mxu0 0
        %1234 = vmatpush1.bf16.xpose.msra.mxu0 0
        %1235 = vmatprep.subr.bf16.mxu0 0
        %1236 = vmatpush1.bf16.xpose.msra.mxu0 0
        %1237 = vmatprep.subr.bf16.mxu0 0
        %1238 = vmatpush1.bf16.xpose.msra.mxu0 0
        %1239 = vmatprep.subr.bf16.mxu0 0
        %1240 = vmatpush1.bf16.xpose.msra.mxu0 0
        %1241 = vmatprep.subr.bf16.mxu0 0
        %1242 = vmatpush1.bf16.xpose.msra.mxu0 0
        %1243 = vmatprep.subr.bf16.mxu0 0
        %1244 = vmatpush1.bf16.xpose.msra.mxu0 0
        %1245 = vmatprep.subr.bf16.mxu0 0
        %1246 = vmatpush1.bf16.xpose.msra.mxu0 0
        %1247 = vmatprep.subr.bf16.mxu0 0
        %1248 = vmatpush1.bf16.xpose.msra.mxu0 0
        %1249 = vmatprep.subr.bf16.mxu0 0
        %1250 = vmatpush1.bf16.xpose.msra.mxu0 0
        %1251 = vmatprep.subr.bf16.mxu0 0
        %1252 = vmatpush1.bf16.xpose.msra.mxu0 0
        %1253 = vmatprep.subr.bf16.mxu0 0
        %1254 = vmatpush1.bf16.xpose.msra.mxu0 0
        %1255 = vmatprep.subr.bf16.mxu0 0
        %1256 = vmatpush1.bf16.xpose.msra.mxu0 0
        %1257 = vmatprep.mubr.bf16.mxu0 0
        %1258 = vmatmul.mubr.bf16.gmra.mrb[0].mxu0 %v1220
        %v1259 = vpop.f32.mrb[0].mxu0
        %v1260 = vadd.f32 0.0, %v1259
        %v1261 = vpop.f32.mrb[0].mxu0
        %v1262 = vpop.f32.mrb[0].mxu0
        %v1263 = vpop.f32.mrb[0].mxu0
        %1264 = vdwg.mxu0
        %v1265 = vsel %vm455, %v1260, -inf
        %1266 = vmax.xlane.f32.xlu0 %v1265
        %v1267 = vpop.xlane.xlu0 %1266
        %v1268 = vsub.f32 %v1260, %v1267
        %v1269 = vmul.f32 %v1268, 1.442695
        %v1270 = vpow.pop %v1269
        %v1271 = vsel %vm455, %v1270, 0.0
        %1272 = vadd.xlane.f32.xlu0 %v1271
        %v1273 = vpop.xlane.xlu0 %1272
        %v1274 = vrcp.pop %v1273
        %v1275 = vmul.f32 %v1270, %v1274
        %v1276 = vpack.c.bf16 %v1275, %v1275
        %1277 = vrot.lane.b32.xlu0 %v407, 16
        %v1278 = vpop.permute.xlu0 %1277
        %v1280 = vsel %vm455, %v1276, 0
        %v1283 = vsel %vm471, %v1278, 0
        %1285 = vmatprep.subr.bf16.mxu0 0
        %1286 = vmatpush1.bf16.msra.mxu0 %v1283
        %1287 = vmatprep.subr.bf16.mxu0 0
        %1288 = vmatpush1.bf16.msra.mxu0 0
        %1289 = vmatprep.subr.bf16.mxu0 0
        %1290 = vmatpush1.bf16.msra.mxu0 0
        %1291 = vmatprep.subr.bf16.mxu0 0
        %1292 = vmatpush1.bf16.msra.mxu0 0
        %1293 = vmatprep.subr.bf16.mxu0 0
        %1294 = vmatpush1.bf16.msra.mxu0 0
        %1295 = vmatprep.subr.bf16.mxu0 0
        %1296 = vmatpush1.bf16.msra.mxu0 0
        %1297 = vmatprep.subr.bf16.mxu0 0
        %1298 = vmatpush1.bf16.msra.mxu0 0
        %1299 = vmatprep.subr.bf16.mxu0 0
        %1300 = vmatpush1.bf16.msra.mxu0 0
        %1301 = vmatprep.subr.bf16.mxu0 0
        %1302 = vmatpush1.bf16.msra.mxu0 0
        %1303 = vmatprep.subr.bf16.mxu0 0
        %1304 = vmatpush1.bf16.msra.mxu0 0
        %1305 = vmatprep.subr.bf16.mxu0 0
        %1306 = vmatpush1.bf16.msra.mxu0 0
        %1307 = vmatprep.subr.bf16.mxu0 0
        %1308 = vmatpush1.bf16.msra.mxu0 0
        %1309 = vmatprep.subr.bf16.mxu0 0
        %1310 = vmatpush1.bf16.msra.mxu0 0
        %1311 = vmatprep.subr.bf16.mxu0 0
        %1312 = vmatpush1.bf16.msra.mxu0 0
        %1313 = vmatprep.subr.bf16.mxu0 0
        %1314 = vmatpush1.bf16.msra.mxu0 0
        %1315 = vmatprep.subr.bf16.mxu0 0
        %1316 = vmatpush1.bf16.msra.mxu0 0
        %1317 = vmatprep.mubr.bf16.mxu0 0
        %1318 = vmatmul.mubr.bf16.gmra.mrb[0].mxu0 %v1280
        %v1319 = vpop.f32.mrb[0].mxu0
        %v1320 = vadd.f32 0.0, %v1319
        %v1321 = vpop.f32.mrb[0].mxu0
        %v1322 = vpop.f32.mrb[0].mxu0
        %v1323 = vpop.f32.mrb[0].mxu0
        %1324 = vdwg.mxu0
        %1326 = vrot.lane.b32.xlu0 %v1320, 112
        %v1327 = vpop.permute.xlu0 %1326
        %vm1329 = vcmask 1048448
        %1330 = vst.msk [vmem:[#allocation2] sm:$0xff] %vm1329, %v1327
        %v1331 = vld [vmem:[#allocation2] sm:$0xff]
        %v1332 = vpack.c.bf16 %v1331, %v1331
        %v1333 = vld [vmem:[%s4] sm:$0xf]
        %v1334 = vld [vmem:[%s4 + $0x4] sm:$0xf]
        %v1335 = vld [vmem:[%s4 + $0x8] sm:$0xf]
        %v1336 = vld [vmem:[%s4 + $0xc] sm:$0xf]
        %v1337 = vld [vmem:[%s4 + $0x10] sm:$0xf]
        %v1338 = vld [vmem:[%s4 + $0x14] sm:$0xf]
        %v1339 = vld [vmem:[%s4 + $0x18] sm:$0xf]
        %v1340 = vld [vmem:[%s4 + $0x1c] sm:$0xf]
        %v1341 = vld [vmem:[%s4 + $0x20] sm:$0xf]
        %v1342 = vld [vmem:[%s4 + $0x24] sm:$0xf]
        %v1343 = vld [vmem:[%s4 + $0x28] sm:$0xf]
        %v1344 = vld [vmem:[%s4 + $0x2c] sm:$0xf]
        %v1345 = vld [vmem:[%s4 + $0x30] sm:$0xf]
        %v1346 = vld [vmem:[%s4 + $0x34] sm:$0xf]
        %v1347 = vld [vmem:[%s4 + $0x38] sm:$0xf]
        %v1348 = vld [vmem:[%s4 + $0x3c] sm:$0xf]
        %v1349 = vld [vmem:[%s5] sm:$0x1]
        %v1351 = vlaneseq
        %v1352 = vshrl.u32 %v1351, 7
        %v1353 = vsub.s32 0, %v1352
        %v1354 = vrot.slane %v1349, %v1353
        %v1372 = vunpack.c.l.b16 %v1333
        %v1373 = vunpack.c.l.b16 %v1334
        %v1374 = vunpack.c.l.b16 %v1335
        %v1375 = vunpack.c.l.b16 %v1336
        %v1376 = vunpack.c.l.b16 %v1337
        %v1377 = vunpack.c.l.b16 %v1338
        %v1378 = vunpack.c.l.b16 %v1339
        %v1379 = vunpack.c.l.b16 %v1340
        %v1380 = vunpack.c.l.b16 %v1341
        %v1381 = vunpack.c.l.b16 %v1342
        %v1382 = vunpack.c.l.b16 %v1343
        %v1383 = vunpack.c.l.b16 %v1344
        %v1384 = vunpack.c.l.b16 %v1345
        %v1385 = vunpack.c.l.b16 %v1346
        %v1386 = vunpack.c.l.b16 %v1347
        %v1387 = vunpack.c.l.b16 %v1348
        %v1388 = vpack.c.b16 %v1373, %v1372
        %v1389 = vpack.c.b16 %v1375, %v1374
        %v1390 = vpack.c.b16 %v1377, %v1376
        %v1391 = vpack.c.b16 %v1379, %v1378
        %v1392 = vpack.c.b16 %v1381, %v1380
        %v1393 = vpack.c.b16 %v1383, %v1382
        %v1394 = vpack.c.b16 %v1385, %v1384
        %v1395 = vpack.c.b16 %v1387, %v1386
        %1404 = vmatprep.subr.bf16.mxu0 0
        %1405 = vmatpush1.bf16.msra.mxu0 %v1388
        %1406 = vmatprep.subr.bf16.mxu0 0
        %1407 = vmatpush1.bf16.msra.mxu0 %v1389
        %1408 = vmatprep.subr.bf16.mxu0 0
        %1409 = vmatpush1.bf16.msra.mxu0 %v1390
        %1410 = vmatprep.subr.bf16.mxu0 0
        %1411 = vmatpush1.bf16.msra.mxu0 %v1391
        %1412 = vmatprep.subr.bf16.mxu0 0
        %1413 = vmatpush1.bf16.msra.mxu0 %v1392
        %1414 = vmatprep.subr.bf16.mxu0 0
        %1415 = vmatpush1.bf16.msra.mxu0 %v1393
        %1416 = vmatprep.subr.bf16.mxu0 0
        %1417 = vmatpush1.bf16.msra.mxu0 %v1394
        %1418 = vmatprep.subr.bf16.mxu0 0
        %1419 = vmatpush1.bf16.msra.mxu0 %v1395
        %1420 = vmatprep.subr.bf16.mxu0 0
        %1421 = vmatpush1.bf16.msra.mxu0 0
        %1422 = vmatprep.subr.bf16.mxu0 0
        %1423 = vmatpush1.bf16.msra.mxu0 0
        %1424 = vmatprep.subr.bf16.mxu0 0
        %1425 = vmatpush1.bf16.msra.mxu0 0
        %1426 = vmatprep.subr.bf16.mxu0 0
        %1427 = vmatpush1.bf16.msra.mxu0 0
        %1428 = vmatprep.subr.bf16.mxu0 0
        %1429 = vmatpush1.bf16.msra.mxu0 0
        %1430 = vmatprep.subr.bf16.mxu0 0
        %1431 = vmatpush1.bf16.msra.mxu0 0
        %1432 = vmatprep.subr.bf16.mxu0 0
        %1433 = vmatpush1.bf16.msra.mxu0 0
        %1434 = vmatprep.subr.bf16.mxu0 0
        %1435 = vmatpush1.bf16.msra.mxu0 0
        %1436 = vmatprep.mubr.bf16.mxu0 0
        %1437 = vmatmul.mubr.bf16.gmra.mrb[0].mxu0 %v1332
        %v1438 = vpop.f32.mrb[0].mxu0
        %v1439 = vadd.f32 %v1354, %v1438
        %v1440 = vpop.f32.mrb[0].mxu0
        %v1441 = vpop.f32.mrb[0].mxu0
        %v1442 = vpop.f32.mrb[0].mxu0
        %1443 = vdwg.mxu0
        %1444 = vst.msk [vmem:[%s242] sm:$0xff] %vm249, %v1439
        %s1445 = sand.u32 %s159, 1
        %s1446 = scalar_lea.sflag [#allocation4], %s1445
        %s1447 = sand.u32 %s159, 1
        %s1448 = smul.addr %s1447, 8
        %s1449 = scalar_lea.vmem [#allocation3], %s1448
        // Predicated region
        $region45: #{tpu_custom_call.1} parent=43 // pred_check
          %p1450 = pneg %p169
        $region46: #{tpu_custom_call.1} parent=43 // pred_check_branch
          %1452 = sbr.rel (%p1450) target = $region48
        $region47: #{tpu_custom_call.1} parent=43 // pred_region
          %s1454 = ssub.s32 128, 128
          %1455 = vsyncadd %s1446, %s1454
          %s1456 = smul.addr %s20, 128
          %s1457 = scalar_lea.hbm %s6, %s1456
          %s1459 = sshll.u32 %s1449, 4
          %s1460 = int_to_ptr.vmem [resolvable:$true] %s1459
          %1462 = dma.vmem_to_hbm [thread:$0]  %s1460, 128, %s1457, %s1446
        $region48: #{tpu_custom_call.1} parent=43 // pred_fallthru
          _
      $region44: #{tpu_custom_call.1} parent=5 // pred_fallthru
        _
      %p1463 = scmp.le.s32.totalorder 2, %s15
      // Predicated region
      $region49: #{tpu_custom_call.1} parent=5 // pred_check
        %p1464 = pneg %p1463
      $region50: #{tpu_custom_call.1} parent=5 // pred_check_branch
        %1466 = sbr.rel (%p1464) target = $region52
      $region51: #{tpu_custom_call.1} parent=5 // pred_region
        %s1467 = ssub.s32 %s15, 2
        // Predicated region
        $region53: #{tpu_custom_call.1} parent=51 // pred_check
          %p1468 = pneg %p175
        $region54: #{tpu_custom_call.1} parent=51 // pred_check_branch
          %1470 = sbr.rel (%p1468) target = $region56
        $region55: #{tpu_custom_call.1} parent=51 // pred_region
          %s1471 = sand.u32 %s160, 1
          %s1472 = scalar_lea.sflag [#allocation4], %s1471
          %s1473 = sand.u32 %s160, 1
          %s1474 = smul.addr %s1473, 8
          %s1475 = scalar_lea.vmem [#allocation3], %s1474
          %1476 = dma.done %s1472, 128
        $region56: #{tpu_custom_call.1} parent=51 // pred_fallthru
          _
      $region52: #{tpu_custom_call.1} parent=5 // pred_fallthru
        _
    $region6: #{tpu_custom_call.1} parent=1 // loop_footer
      %s19 = sadd.s32 1, %s15
    $region7: #{tpu_custom_call.1} parent=1 // loop_footer_branch
      %14 = sbr.rel target = $region3
    $region8: #{tpu_custom_call.1} parent=1 // loop_exit
      _
    %1477 = vsyncpa [#allocation4], 1
    %s1478 = scalar_lea.sflag [#allocation4], 1
    %1479 = vsyncpa %s1478, 1

</llo_original>
